<compile_context>
chip_gen: v5e
topology: v5e:2x2
jax: 0.10.0
libtpu: 0.0.40
codegen_flags: <defaults>
</compile_context>

<pallas_src>
import functools

import jax
import jax.numpy as jnp
import numpy as np
from jax import lax
from jax.experimental import pallas as pl
from jax.experimental.pallas import tpu as pltpu


# ----------------------------------------------------------------------------------
# In-kernel complex tanh on (real, imag) pairs — overflow safe (uses tanh, not sinh).
# ----------------------------------------------------------------------------------
def _complex_tanh(x, y):
    tx = jnp.tanh(x)
    cy = jnp.cos(y)
    sy = jnp.sin(y)
    sech2 = 1.0 - tx * tx                      # sech^2(x)
    den = tx * tx + cy * cy * sech2            # = cos^2(y) + tanh^2(x) sin^2(y)
    re = tx / den
    im = sy * cy * sech2 / den
    return re, im


# ----------------------------------------------------------------------------------
# Fused kernel: per grid step (one batch b), all heads.
#   xq_ref: (1, H*E, L)   xk_ref: (1, H*E, S)
#   dq_ref: (L, 2Mq) = [cos | -sin]     dk_ref: (S, 2Mkv) = [cos | -sin]
#   w_ref : (2Mq, L) = [[wr],[wi]] (irfft, scale folded in)
#   out_ref: (1, H*E, L)
# ----------------------------------------------------------------------------------
def _fused_kernel(xq_ref, xk_ref, dq_ref, dk_ref, w_ref, out_ref,
                  *, H, E, Mq, Mkv, activation):
    dot = functools.partial(lax.dot_general,
                            precision=lax.Precision.HIGHEST,
                            preferred_element_type=jnp.float32)
    mm = functools.partial(jnp.dot,
                           precision=lax.Precision.HIGHEST,
                           preferred_element_type=jnp.float32)

    xq = xq_ref[0]                               # (H*E, L)
    xk = xk_ref[0]                               # (H*E, S)

    # Batched truncated rfft over all H*E rows: one packed matmul each -> [Re | Im].
    qf = mm(xq, dq_ref[...])                     # (H*E, 2Mq)
    kf = mm(xk, dk_ref[...])                     # (H*E, 2Mkv)

    blocks = []
    for h in range(H):                           # small trace-time unrolled loop
        qh = qf[h * E:(h + 1) * E, :]            # (E, 2Mq)  = [qr | qi]
        kh = kf[h * E:(h + 1) * E, :]            # (E, 2Mkv) = [kr | ki]

        # Packed complex einsum 'ex,ey->xy' (no conjugation): one MXU push gives the
        # quadrant block  P = [[qr.kr  qr.ki], [qi.kr  qi.ki]]  of shape (2Mq, 2Mkv).
        p = dot(qh, kh, dimension_numbers=(((0,), (0,)), ((), ())))
        ar = p[:Mq, :Mkv] - p[Mq:, Mkv:]
        ai = p[:Mq, Mkv:] + p[Mq:, :Mkv]

        # Activation — in-kernel (EUP transcendentals are effectively free here).
        if activation == "tanh":
            atr, ati = _complex_tanh(ar, ai)
        elif activation == "softmax":
            mag = jnp.sqrt(ar * ar + ai * ai)
            mag = mag - jnp.max(mag, axis=-1, keepdims=True)
            ex = jnp.exp(mag)
            atr = ex / jnp.sum(ex, axis=-1, keepdims=True)
            ati = jnp.zeros_like(atr)
        else:
            raise Exception(f"{activation} actiation function is not implemented")

        # Packed complex einsum 'xy,ey->ex': [kr|ki] contracted (over y) against the
        # block matrix G = [[atr, -ati], [ati, atr]] yields [o_r | o_i] in one push.
        g = jnp.concatenate(
            [jnp.concatenate([atr, -ati], axis=1),
             jnp.concatenate([ati, atr], axis=1)], axis=0)        # (2Mq, 2Mkv)
        oh = dot(kh, g, dimension_numbers=(((1,), (1,)), ((), ())))   # (E, 2Mq)
        blocks.append(oh)

    of = jnp.concatenate(blocks, axis=0)         # (H*E, 2Mq) = [o_r | o_i]

    # Batched truncated irfft (imag of DC contributes nothing: wi row 0 is zero;
    # Nyquist never populated since Mq = min(L//2, modes)).  Scale already folded in.
    out = mm(of, w_ref[...])                     # (H*E, L)
    out_ref[0] = out.astype(out_ref.dtype)


# ----------------------------------------------------------------------------------
# Wrapper: layout glue + packed DFT / inverse-DFT matrix construction.
# ----------------------------------------------------------------------------------
def fourier_cross_attention_w(q, k, v, in_channels, out_channels,
                              modes=16, activation="tanh", mask=None):
    if activation not in ("tanh", "softmax"):
        raise Exception(f"{activation} actiation function is not implemented")

    B, L, E, H = q.shape
    S = k.shape[1]
    Sv = v.shape[1]
    Mq = min(L // 2, modes)          # index_q   = range(Mq)
    Mkv = min(Sv // 2, modes)        # index_k_v = range(Mkv)

    # (B, L, E, H) -> (B, H*E, L): one fused XLA transpose+convert pass per operand.
    xq = jnp.transpose(q, (0, 3, 2, 1)).reshape(B, H * E, L).astype(jnp.float32)
    xk = jnp.transpose(k, (0, 3, 2, 1)).reshape(B, H * E, S).astype(jnp.float32)

    # Packed forward-DFT matrices:  x @ [cos | -sin]  ->  [Re rfft | Im rfft] (kept modes).
    ang_q = (2.0 * jnp.pi / L) * (jnp.arange(L, dtype=jnp.float32)[:, None]
                                  * jnp.arange(Mq, dtype=jnp.float32)[None, :])
    dft_q = jnp.concatenate([jnp.cos(ang_q), -jnp.sin(ang_q)], axis=1)       # (L, 2Mq)

    ang_k = (2.0 * jnp.pi / S) * (jnp.arange(S, dtype=jnp.float32)[:, None]
                                  * jnp.arange(Mkv, dtype=jnp.float32)[None, :])
    dft_k = jnp.concatenate([jnp.cos(ang_k), -jnp.sin(ang_k)], axis=1)       # (S, 2Mkv)

    # Packed inverse-DFT (truncated irfft) with the 1/(in*out) scale folded in.
    scale = 1.0 / (in_channels * out_channels)
    coef = jnp.where(jnp.arange(Mq) == 0, 1.0, 2.0).astype(jnp.float32)[:, None]
    ang_o = (2.0 * jnp.pi / L) * (jnp.arange(Mq, dtype=jnp.float32)[:, None]
                                  * jnp.arange(L, dtype=jnp.float32)[None, :])
    w = jnp.concatenate([(scale / L) * coef * jnp.cos(ang_o),
                         -(scale / L) * coef * jnp.sin(ang_o)], axis=0)      # (2Mq, L)

    kernel = functools.partial(_fused_kernel, H=H, E=E, Mq=Mq, Mkv=Mkv,
                               activation=activation)

    out_flat = pl.pallas_call(
        kernel,
        out_shape=jax.ShapeDtypeStruct((B, H * E, L), jnp.float32),
        grid_spec=pltpu.PrefetchScalarGridSpec(
            num_scalar_prefetch=0,
            grid=(B,),
            in_specs=[
                pl.BlockSpec((1, H * E, L), lambda b: (b, 0, 0)),
                pl.BlockSpec((1, H * E, S), lambda b: (b, 0, 0)),
                pl.BlockSpec((L, 2 * Mq), lambda b: (0, 0)),
                pl.BlockSpec((S, 2 * Mkv), lambda b: (0, 0)),
                pl.BlockSpec((2 * Mq, L), lambda b: (0, 0)),
            ],
            out_specs=pl.BlockSpec((1, H * E, L), lambda b: (b, 0, 0)),
        ),
        compiler_params=pltpu.CompilerParams(dimension_semantics=("parallel",)),
    )(xq, xk, dft_q, dft_k, w)

    out = jnp.transpose(out_flat.reshape(B, H, E, L), (0, 3, 2, 1))          # (B, L, E, H)
    return out, None


# ----------------------------------------------------------------------------------
# Pure-JAX reference (uses jnp.fft) mirroring the PyTorch forward exactly.
# ----------------------------------------------------------------------------------
def reference_fourier_cross_attention(q, k, v, in_channels, out_channels, modes):
    B, L, E, H = q.shape
    xq = jnp.transpose(q, (0, 3, 2, 1))
    xk = jnp.transpose(k, (0, 3, 2, 1))
    xv = jnp.transpose(v, (0, 3, 2, 1))
    Mq = min(L // 2, modes)
    Mkv = min(xv.shape[3] // 2, modes)
    xq_ft = jnp.fft.rfft(xq, axis=-1)[..., :Mq]
    xk_ft = jnp.fft.rfft(xk, axis=-1)[..., :Mkv]
    xqk_ft = jnp.einsum("bhex,bhey->bhxy", xq_ft, xk_ft)
    xqk_ft = jnp.tanh(xqk_ft)
    xqkv_ft = jnp.einsum("bhxy,bhey->bhex", xqk_ft, xk_ft)
    out_ft = jnp.zeros((B, H, E, L // 2 + 1), dtype=jnp.complex64)
    out_ft = out_ft.at[..., :Mq].set(xqkv_ft)
    out = jnp.fft.irfft(out_ft / in_channels / out_channels, n=L, axis=-1)
    return jnp.transpose(out, (0, 3, 2, 1))


if __name__ == "__main__":
    # Kernel dots carry precision=HIGHEST explicitly; this flag keeps the XLA
    # reference (complex einsums) at full f32 precision too.
    jax.config.update("jax_default_matmul_precision", "highest")

    B, L, E, H = 2, 32, 16, 4     # q: (B, L, E, H)
    S = 32                        # seq_len_kv
    in_channels = out_channels = E
    modes = 8

    key = jax.random.PRNGKey(0)
    kq, kk, kv = jax.random.split(key, 3)
    q = jax.random.normal(kq, (B, L, E, H), dtype=jnp.float32)
    k = jax.random.normal(kk, (B, S, E, H), dtype=jnp.float32)
    v = jax.random.normal(kv, (B, S, E, H), dtype=jnp.float32)

    out, _ = fourier_cross_attention_w(q, k, v, in_channels, out_channels,
                                       modes=modes, activation="tanh")
    out = jax.block_until_ready(out)
    assert out.shape == (B, L, E, H)

    ref = reference_fourier_cross_attention(q, k, v, in_channels, out_channels, modes)
    np.testing.assert_allclose(np.asarray(out), np.asarray(ref), rtol=1e-2, atol=1e-4)

    print("KERNEL_OK")
</pallas_src>

<mosaic_0001>
module attributes {stable_mosaic.version = 11 : i64} {
  func.func @_fused_kernel(%arg0: i32, %arg1: memref<1x64x32xf32, #tpu.memory_space<vmem>>, %arg2: memref<1x64x32xf32, #tpu.memory_space<vmem>>, %arg3: memref<32x16xf32, #tpu.memory_space<vmem>>, %arg4: memref<32x16xf32, #tpu.memory_space<vmem>>, %arg5: memref<16x32xf32, #tpu.memory_space<vmem>>, %arg6: memref<1x64x32xf32, #tpu.memory_space<vmem>>) attributes {dimension_semantics = [#tpu.dimension_semantics<parallel>], iteration_bounds = array<i64: 2>, scalar_prefetch = 0 : i64, scratch_operands = 0 : i64, tpu.core_type = #tpu.core_type<tc>, window_params = [{transform_indices = @transform_0, window_bounds = array<i64: 1, 64, 32>}, {transform_indices = @transform_1, window_bounds = array<i64: 1, 64, 32>}, {pipeline_mode = #tpu.pipeline_mode<synchronous>, transform_indices = @transform_2, window_bounds = array<i64: 32, 16>}, {pipeline_mode = #tpu.pipeline_mode<synchronous>, transform_indices = @transform_3, window_bounds = array<i64: 32, 16>}, {pipeline_mode = #tpu.pipeline_mode<synchronous>, transform_indices = @transform_4, window_bounds = array<i64: 16, 32>}, {transform_indices = @transform_5, window_bounds = array<i64: 1, 64, 32>}]} {
    %c0 = arith.constant 0 : index
    %c0_0 = arith.constant 0 : index
    %c0_1 = arith.constant 0 : index
    %0 = vector.load %arg1[%c0, %c0_0, %c0_1] : memref<1x64x32xf32, #tpu.memory_space<vmem>>, vector<1x64x32xf32>
    %1 = vector.shape_cast %0 : vector<1x64x32xf32> to vector<64x32xf32>
    %c0_2 = arith.constant 0 : index
    %c0_3 = arith.constant 0 : index
    %c0_4 = arith.constant 0 : index
    %2 = vector.load %arg2[%c0_2, %c0_3, %c0_4] : memref<1x64x32xf32, #tpu.memory_space<vmem>>, vector<1x64x32xf32>
    %3 = vector.shape_cast %2 : vector<1x64x32xf32> to vector<64x32xf32>
    %c0_5 = arith.constant 0 : index
    %c0_6 = arith.constant 0 : index
    %4 = vector.load %arg3[%c0_5, %c0_6] : memref<32x16xf32, #tpu.memory_space<vmem>>, vector<32x16xf32>
    %cst = arith.constant dense<0.000000e+00> : vector<64x16xf32>
    %5 = tpu.matmul %1, %4, %cst {dimension_numbers = #tpu.dot_dimension_numbers<[1], [0], [0], [1], [0, 0, 1, 1], [], []>, precision = #tpu.contract_precision<fp32>} : vector<64x32xf32>, vector<32x16xf32>, vector<64x16xf32> -> vector<64x16xf32>
    %c0_7 = arith.constant 0 : index
    %c0_8 = arith.constant 0 : index
    %6 = vector.load %arg4[%c0_7, %c0_8] : memref<32x16xf32, #tpu.memory_space<vmem>>, vector<32x16xf32>
    %cst_9 = arith.constant dense<0.000000e+00> : vector<64x16xf32>
    %7 = tpu.matmul %3, %6, %cst_9 {dimension_numbers = #tpu.dot_dimension_numbers<[1], [0], [0], [1], [0, 0, 1, 1], [], []>, precision = #tpu.contract_precision<fp32>} : vector<64x32xf32>, vector<32x16xf32>, vector<64x16xf32> -> vector<64x16xf32>
    %8 = vector.extract_strided_slice %5 {offsets = [0, 0], sizes = [16, 16], strides = [1, 1]} : vector<64x16xf32> to vector<16x16xf32>
    %9 = vector.extract_strided_slice %7 {offsets = [0, 0], sizes = [16, 16], strides = [1, 1]} : vector<64x16xf32> to vector<16x16xf32>
    %cst_10 = arith.constant dense<0.000000e+00> : vector<16x16xf32>
    %10 = tpu.matmul %8, %9, %cst_10 {dimension_numbers = #tpu.dot_dimension_numbers<[0], [0], [1], [1], [0, 1, 1, 1], [], []>, precision = #tpu.contract_precision<fp32>} : vector<16x16xf32>, vector<16x16xf32>, vector<16x16xf32> -> vector<16x16xf32>
    %11 = vector.extract_strided_slice %10 {offsets = [0, 0], sizes = [8, 8], strides = [1, 1]} : vector<16x16xf32> to vector<8x8xf32>
    %12 = vector.extract_strided_slice %10 {offsets = [8, 8], sizes = [8, 8], strides = [1, 1]} : vector<16x16xf32> to vector<8x8xf32>
    %13 = arith.subf %11, %12 : vector<8x8xf32>
    %14 = vector.extract_strided_slice %10 {offsets = [0, 8], sizes = [8, 8], strides = [1, 1]} : vector<16x16xf32> to vector<8x8xf32>
    %15 = vector.extract_strided_slice %10 {offsets = [8, 0], sizes = [8, 8], strides = [1, 1]} : vector<16x16xf32> to vector<8x8xf32>
    %16 = arith.addf %14, %15 : vector<8x8xf32>
    %17 = math.tanh %13 : vector<8x8xf32>
    %18 = math.cos %16 : vector<8x8xf32>
    %19 = math.sin %16 : vector<8x8xf32>
    %20 = arith.mulf %17, %17 : vector<8x8xf32>
    %cst_11 = arith.constant 1.000000e+00 : f32
    %21 = vector.broadcast %cst_11 : f32 to vector<8x8xf32>
    %22 = arith.subf %21, %20 : vector<8x8xf32>
    %23 = arith.mulf %17, %17 : vector<8x8xf32>
    %24 = arith.mulf %18, %18 : vector<8x8xf32>
    %25 = arith.mulf %24, %22 : vector<8x8xf32>
    %26 = arith.addf %23, %25 : vector<8x8xf32>
    %27 = arith.divf %17, %26 : vector<8x8xf32>
    %28 = arith.mulf %19, %18 : vector<8x8xf32>
    %29 = arith.mulf %28, %22 : vector<8x8xf32>
    %30 = arith.divf %29, %26 : vector<8x8xf32>
    %cst_12 = arith.constant 0.000000e+00 : f32
    %31 = vector.broadcast %cst_12 : f32 to vector<8x8xf32>
    %32 = arith.subf %31, %30 : vector<8x8xf32>
    %33 = tpu.concatenate %27, %32 in 1 : vector<8x8xf32>, vector<8x8xf32> -> vector<8x16xf32>
    %34 = tpu.concatenate %30, %27 in 1 : vector<8x8xf32>, vector<8x8xf32> -> vector<8x16xf32>
    %35 = tpu.concatenate %33, %34 in 0 : vector<8x16xf32>, vector<8x16xf32> -> vector<16x16xf32>
    %cst_13 = arith.constant dense<0.000000e+00> : vector<16x16xf32>
    %36 = tpu.matmul %9, %35, %cst_13 {dimension_numbers = #tpu.dot_dimension_numbers<[1], [1], [0], [0], [0, 0, 1, 0], [], []>, precision = #tpu.contract_precision<fp32>} : vector<16x16xf32>, vector<16x16xf32>, vector<16x16xf32> -> vector<16x16xf32>
    %37 = vector.extract_strided_slice %5 {offsets = [16, 0], sizes = [16, 16], strides = [1, 1]} : vector<64x16xf32> to vector<16x16xf32>
    %38 = vector.extract_strided_slice %7 {offsets = [16, 0], sizes = [16, 16], strides = [1, 1]} : vector<64x16xf32> to vector<16x16xf32>
    %cst_14 = arith.constant dense<0.000000e+00> : vector<16x16xf32>
    %39 = tpu.matmul %37, %38, %cst_14 {dimension_numbers = #tpu.dot_dimension_numbers<[0], [0], [1], [1], [0, 1, 1, 1], [], []>, precision = #tpu.contract_precision<fp32>} : vector<16x16xf32>, vector<16x16xf32>, vector<16x16xf32> -> vector<16x16xf32>
    %40 = vector.extract_strided_slice %39 {offsets = [0, 0], sizes = [8, 8], strides = [1, 1]} : vector<16x16xf32> to vector<8x8xf32>
    %41 = vector.extract_strided_slice %39 {offsets = [8, 8], sizes = [8, 8], strides = [1, 1]} : vector<16x16xf32> to vector<8x8xf32>
    %42 = arith.subf %40, %41 : vector<8x8xf32>
    %43 = vector.extract_strided_slice %39 {offsets = [0, 8], sizes = [8, 8], strides = [1, 1]} : vector<16x16xf32> to vector<8x8xf32>
    %44 = vector.extract_strided_slice %39 {offsets = [8, 0], sizes = [8, 8], strides = [1, 1]} : vector<16x16xf32> to vector<8x8xf32>
    %45 = arith.addf %43, %44 : vector<8x8xf32>
    %46 = math.tanh %42 : vector<8x8xf32>
    %47 = math.cos %45 : vector<8x8xf32>
    %48 = math.sin %45 : vector<8x8xf32>
    %49 = arith.mulf %46, %46 : vector<8x8xf32>
    %cst_15 = arith.constant 1.000000e+00 : f32
    %50 = vector.broadcast %cst_15 : f32 to vector<8x8xf32>
    %51 = arith.subf %50, %49 : vector<8x8xf32>
    %52 = arith.mulf %46, %46 : vector<8x8xf32>
    %53 = arith.mulf %47, %47 : vector<8x8xf32>
    %54 = arith.mulf %53, %51 : vector<8x8xf32>
    %55 = arith.addf %52, %54 : vector<8x8xf32>
    %56 = arith.divf %46, %55 : vector<8x8xf32>
    %57 = arith.mulf %48, %47 : vector<8x8xf32>
    %58 = arith.mulf %57, %51 : vector<8x8xf32>
    %59 = arith.divf %58, %55 : vector<8x8xf32>
    %cst_16 = arith.constant 0.000000e+00 : f32
    %60 = vector.broadcast %cst_16 : f32 to vector<8x8xf32>
    %61 = arith.subf %60, %59 : vector<8x8xf32>
    %62 = tpu.concatenate %56, %61 in 1 : vector<8x8xf32>, vector<8x8xf32> -> vector<8x16xf32>
    %63 = tpu.concatenate %59, %56 in 1 : vector<8x8xf32>, vector<8x8xf32> -> vector<8x16xf32>
    %64 = tpu.concatenate %62, %63 in 0 : vector<8x16xf32>, vector<8x16xf32> -> vector<16x16xf32>
    %cst_17 = arith.constant dense<0.000000e+00> : vector<16x16xf32>
    %65 = tpu.matmul %38, %64, %cst_17 {dimension_numbers = #tpu.dot_dimension_numbers<[1], [1], [0], [0], [0, 0, 1, 0], [], []>, precision = #tpu.contract_precision<fp32>} : vector<16x16xf32>, vector<16x16xf32>, vector<16x16xf32> -> vector<16x16xf32>
    %66 = vector.extract_strided_slice %5 {offsets = [32, 0], sizes = [16, 16], strides = [1, 1]} : vector<64x16xf32> to vector<16x16xf32>
    %67 = vector.extract_strided_slice %7 {offsets = [32, 0], sizes = [16, 16], strides = [1, 1]} : vector<64x16xf32> to vector<16x16xf32>
    %cst_18 = arith.constant dense<0.000000e+00> : vector<16x16xf32>
    %68 = tpu.matmul %66, %67, %cst_18 {dimension_numbers = #tpu.dot_dimension_numbers<[0], [0], [1], [1], [0, 1, 1, 1], [], []>, precision = #tpu.contract_precision<fp32>} : vector<16x16xf32>, vector<16x16xf32>, vector<16x16xf32> -> vector<16x16xf32>
    %69 = vector.extract_strided_slice %68 {offsets = [0, 0], sizes = [8, 8], strides = [1, 1]} : vector<16x16xf32> to vector<8x8xf32>
    %70 = vector.extract_strided_slice %68 {offsets = [8, 8], sizes = [8, 8], strides = [1, 1]} : vector<16x16xf32> to vector<8x8xf32>
    %71 = arith.subf %69, %70 : vector<8x8xf32>
    %72 = vector.extract_strided_slice %68 {offsets = [0, 8], sizes = [8, 8], strides = [1, 1]} : vector<16x16xf32> to vector<8x8xf32>
    %73 = vector.extract_strided_slice %68 {offsets = [8, 0], sizes = [8, 8], strides = [1, 1]} : vector<16x16xf32> to vector<8x8xf32>
    %74 = arith.addf %72, %73 : vector<8x8xf32>
    %75 = math.tanh %71 : vector<8x8xf32>
    %76 = math.cos %74 : vector<8x8xf32>
    %77 = math.sin %74 : vector<8x8xf32>
    %78 = arith.mulf %75, %75 : vector<8x8xf32>
    %cst_19 = arith.constant 1.000000e+00 : f32
    %79 = vector.broadcast %cst_19 : f32 to vector<8x8xf32>
    %80 = arith.subf %79, %78 : vector<8x8xf32>
    %81 = arith.mulf %75, %75 : vector<8x8xf32>
    %82 = arith.mulf %76, %76 : vector<8x8xf32>
    %83 = arith.mulf %82, %80 : vector<8x8xf32>
    %84 = arith.addf %81, %83 : vector<8x8xf32>
    %85 = arith.divf %75, %84 : vector<8x8xf32>
    %86 = arith.mulf %77, %76 : vector<8x8xf32>
    %87 = arith.mulf %86, %80 : vector<8x8xf32>
    %88 = arith.divf %87, %84 : vector<8x8xf32>
    %cst_20 = arith.constant 0.000000e+00 : f32
    %89 = vector.broadcast %cst_20 : f32 to vector<8x8xf32>
    %90 = arith.subf %89, %88 : vector<8x8xf32>
    %91 = tpu.concatenate %85, %90 in 1 : vector<8x8xf32>, vector<8x8xf32> -> vector<8x16xf32>
    %92 = tpu.concatenate %88, %85 in 1 : vector<8x8xf32>, vector<8x8xf32> -> vector<8x16xf32>
    %93 = tpu.concatenate %91, %92 in 0 : vector<8x16xf32>, vector<8x16xf32> -> vector<16x16xf32>
    %cst_21 = arith.constant dense<0.000000e+00> : vector<16x16xf32>
    %94 = tpu.matmul %67, %93, %cst_21 {dimension_numbers = #tpu.dot_dimension_numbers<[1], [1], [0], [0], [0, 0, 1, 0], [], []>, precision = #tpu.contract_precision<fp32>} : vector<16x16xf32>, vector<16x16xf32>, vector<16x16xf32> -> vector<16x16xf32>
    %95 = vector.extract_strided_slice %5 {offsets = [48, 0], sizes = [16, 16], strides = [1, 1]} : vector<64x16xf32> to vector<16x16xf32>
    %96 = vector.extract_strided_slice %7 {offsets = [48, 0], sizes = [16, 16], strides = [1, 1]} : vector<64x16xf32> to vector<16x16xf32>
    %cst_22 = arith.constant dense<0.000000e+00> : vector<16x16xf32>
    %97 = tpu.matmul %95, %96, %cst_22 {dimension_numbers = #tpu.dot_dimension_numbers<[0], [0], [1], [1], [0, 1, 1, 1], [], []>, precision = #tpu.contract_precision<fp32>} : vector<16x16xf32>, vector<16x16xf32>, vector<16x16xf32> -> vector<16x16xf32>
    %98 = vector.extract_strided_slice %97 {offsets = [0, 0], sizes = [8, 8], strides = [1, 1]} : vector<16x16xf32> to vector<8x8xf32>
    %99 = vector.extract_strided_slice %97 {offsets = [8, 8], sizes = [8, 8], strides = [1, 1]} : vector<16x16xf32> to vector<8x8xf32>
    %100 = arith.subf %98, %99 : vector<8x8xf32>
    %101 = vector.extract_strided_slice %97 {offsets = [0, 8], sizes = [8, 8], strides = [1, 1]} : vector<16x16xf32> to vector<8x8xf32>
    %102 = vector.extract_strided_slice %97 {offsets = [8, 0], sizes = [8, 8], strides = [1, 1]} : vector<16x16xf32> to vector<8x8xf32>
    %103 = arith.addf %101, %102 : vector<8x8xf32>
    %104 = math.tanh %100 : vector<8x8xf32>
    %105 = math.cos %103 : vector<8x8xf32>
    %106 = math.sin %103 : vector<8x8xf32>
    %107 = arith.mulf %104, %104 : vector<8x8xf32>
    %cst_23 = arith.constant 1.000000e+00 : f32
    %108 = vector.broadcast %cst_23 : f32 to vector<8x8xf32>
    %109 = arith.subf %108, %107 : vector<8x8xf32>
    %110 = arith.mulf %104, %104 : vector<8x8xf32>
    %111 = arith.mulf %105, %105 : vector<8x8xf32>
    %112 = arith.mulf %111, %109 : vector<8x8xf32>
    %113 = arith.addf %110, %112 : vector<8x8xf32>
    %114 = arith.divf %104, %113 : vector<8x8xf32>
    %115 = arith.mulf %106, %105 : vector<8x8xf32>
    %116 = arith.mulf %115, %109 : vector<8x8xf32>
    %117 = arith.divf %116, %113 : vector<8x8xf32>
    %cst_24 = arith.constant 0.000000e+00 : f32
    %118 = vector.broadcast %cst_24 : f32 to vector<8x8xf32>
    %119 = arith.subf %118, %117 : vector<8x8xf32>
    %120 = tpu.concatenate %114, %119 in 1 : vector<8x8xf32>, vector<8x8xf32> -> vector<8x16xf32>
    %121 = tpu.concatenate %117, %114 in 1 : vector<8x8xf32>, vector<8x8xf32> -> vector<8x16xf32>
    %122 = tpu.concatenate %120, %121 in 0 : vector<8x16xf32>, vector<8x16xf32> -> vector<16x16xf32>
    %cst_25 = arith.constant dense<0.000000e+00> : vector<16x16xf32>
    %123 = tpu.matmul %96, %122, %cst_25 {dimension_numbers = #tpu.dot_dimension_numbers<[1], [1], [0], [0], [0, 0, 1, 0], [], []>, precision = #tpu.contract_precision<fp32>} : vector<16x16xf32>, vector<16x16xf32>, vector<16x16xf32> -> vector<16x16xf32>
    %124 = tpu.concatenate %36, %65, %94, %123 in 0 : vector<16x16xf32>, vector<16x16xf32>, vector<16x16xf32>, vector<16x16xf32> -> vector<64x16xf32>
    %c0_26 = arith.constant 0 : index
    %c0_27 = arith.constant 0 : index
    %125 = vector.load %arg5[%c0_26, %c0_27] : memref<16x32xf32, #tpu.memory_space<vmem>>, vector<16x32xf32>
    %cst_28 = arith.constant dense<0.000000e+00> : vector<64x32xf32>
    %126 = tpu.matmul %124, %125, %cst_28 {dimension_numbers = #tpu.dot_dimension_numbers<[1], [0], [0], [1], [0, 0, 1, 1], [], []>, precision = #tpu.contract_precision<fp32>} : vector<64x16xf32>, vector<16x32xf32>, vector<64x32xf32> -> vector<64x32xf32>
    %c0_29 = arith.constant 0 : index
    %c0_30 = arith.constant 0 : index
    %c0_31 = arith.constant 0 : index
    %127 = vector.load %arg6[%c0_29, %c0_30, %c0_31] : memref<1x64x32xf32, #tpu.memory_space<vmem>>, vector<1x64x32xf32>
    %128 = vector.shape_cast %127 : vector<1x64x32xf32> to vector<64x32xf32>
    %129 = vector.shape_cast %126 : vector<64x32xf32> to vector<1x64x32xf32>
    tpu.vector_store %arg6[%c0_29, %c0_30, %c0_31], %129 {strides = array<i32>} : memref<1x64x32xf32, #tpu.memory_space<vmem>>, vector<1x64x32xf32>,
    return
  }
  func.func @transform_0(%arg0: i32) -> (i32, i32, i32) {
    %c0_i32 = arith.constant 0 : i32
    %c0_i32_0 = arith.constant 0 : i32
    %c0_i32_1 = arith.constant 0 : i32
    return %arg0, %c0_i32, %c0_i32_0 : i32, i32, i32
  }
  func.func @transform_1(%arg0: i32) -> (i32, i32, i32) {
    %c0_i32 = arith.constant 0 : i32
    %c0_i32_0 = arith.constant 0 : i32
    %c0_i32_1 = arith.constant 0 : i32
    return %arg0, %c0_i32, %c0_i32_0 : i32, i32, i32
  }
  func.func @transform_2(%arg0: i32) -> (i32, i32) {
    %c0_i32 = arith.constant 0 : i32
    %c0_i32_0 = arith.constant 0 : i32
    %c0_i32_1 = arith.constant 0 : i32
    return %c0_i32, %c0_i32_0 : i32, i32
  }
  func.func @transform_3(%arg0: i32) -> (i32, i32) {
    %c0_i32 = arith.constant 0 : i32
    %c0_i32_0 = arith.constant 0 : i32
    %c0_i32_1 = arith.constant 0 : i32
    return %c0_i32, %c0_i32_0 : i32, i32
  }
  func.func @transform_4(%arg0: i32) -> (i32, i32) {
    %c0_i32 = arith.constant 0 : i32
    %c0_i32_0 = arith.constant 0 : i32
    %c0_i32_1 = arith.constant 0 : i32
    return %c0_i32, %c0_i32_0 : i32, i32
  }
  func.func @transform_5(%arg0: i32) -> (i32, i32, i32) {
    %c0_i32 = arith.constant 0 : i32
    %c0_i32_0 = arith.constant 0 : i32
    %c0_i32_1 = arith.constant 0 : i32
    return %arg0, %c0_i32, %c0_i32_0 : i32, i32, i32
  }
}

</mosaic_0001>

<llo_original>
// kernel: tpu_custom_call.1
$region0: #{tpu_custom_call.1}
  #allocation0 [shape = 'u32[]', space=smem, size = 0x4, offset = 0x4, fixed_abs, tag = 'smem constant byte address 0x4 - core index']
  #allocation1 [shape = 'u32[72,128]{1,0:T(1,128)}', space=vmem, size = 0x9000, scoped, tag = 'internal scratch']
  %s0 = inlined_call_operand.vmem [shape: f32[2,64,32], index: 0, kind: input, shape index: {}]
  %s1 = inlined_call_operand.vmem [shape: f32[2,64,32], index: 1, kind: input, shape index: {}]
  %s2 = inlined_call_operand.vmem [shape: f32[32,16], index: 2, kind: input, shape index: {}]
  %s3 = inlined_call_operand.vmem [shape: f32[32,16], index: 3, kind: input, shape index: {}]
  %s4 = inlined_call_operand.vmem [shape: f32[16,32], index: 4, kind: input, shape index: {}]
  %s5 = inlined_call_operand.vmem [shape: f32[2,64,32], index: 5, kind: output, shape index: {}]
  %s6 = sld [smem:[#allocation0]]
  $region53: #{tpu_custom_call.1} parent=0
    _
  %s8 = ssub.s32 1, %s6
  %s9 = scalar_select 0, %s8, %s6
  loop: start=0, step=1, limit=4
  $region2: #{tpu_custom_call.1} parent=0 // loop_pre_header
    _
  $region3: #{tpu_custom_call.1} parent=0 // loop_header
    %s11 = sphi 0, %s15
    %p12 = scmp.ge.s32.totalorder %s11, 4
    %s21 = sphi 0, %s23
    %s24 = sphi 0, %s21
    %s25 = sphi 0, %s24
    %s41 = sphi 0, %s25
    %s47 = sphi 0, %s49
    %s50 = sphi 0, %s47
    %s51 = sphi 0, %s50
    %s67 = sphi 0, %s51
    %s71 = sphi 0, %s71
    %s73 = sphi 0, %s71
    %s74 = sphi 0, %s73
    %s88 = sphi 0, %s74
    %s92 = sphi 0, %s92
    %s94 = sphi 0, %s92
    %s95 = sphi 0, %s94
    %s109 = sphi 0, %s95
    %s113 = sphi 0, %s113
    %s115 = sphi 0, %s113
    %s116 = sphi 0, %s115
    %s130 = sphi 0, %s116
    %s136 = sphi 0, %s138
    %s139 = sphi 0, %s136
    %s140 = sphi 0, %s139
    %s156 = sphi 0, %s140
  $region4: #{tpu_custom_call.1} parent=0 // loop_header_branch
    %14 = sbr.rel (%p12) target = $region8
  $region5: #{tpu_custom_call.1} parent=0 // loop_body
    %s16 = ssub.s32 %s11, 1
    %s17 = ssub.s32 %s11, 2
    %s18 = sadd.s32 %s11, 1
    %s19 = ssub.s32 %s11, %s18
    %p20 = scmp.eq.s32.totalorder %s19, 0
    %s22 = sadd.s32 %s21, 1
    %s23 = scalar_select %p20, %s21, %s22
    %p26 = pneg %p20
    %p27 = scmp.eq.s32.totalorder %s11, 1
    %p28 = por %p26, %p27
    %p29 = scmp.ne.s32.totalorder %s21, %s24
    %p30 = scmp.eq.s32.totalorder %s11, 0
    %p31 = por %p29, %p30
    %p32 = scmp.ne.s32.totalorder %s21, %s24
    %p33 = scmp.eq.s32.totalorder %s16, 1
    %p34 = por %p32, %p33
    %p35 = scmp.ne.s32.totalorder %s24, %s25
    %p36 = scmp.eq.s32.totalorder %s16, 0
    %p37 = por %p35, %p36
    %p38 = scmp.ne.s32.totalorder %s24, %s25
    %p39 = scmp.eq.s32.totalorder %s17, 1
    %p40 = por %p38, %p39
    %p42 = scmp.ne.s32.totalorder %s25, %s41
    %p43 = scmp.eq.s32.totalorder %s17, 0
    %p44 = por %p42, %p43
    %s45 = ssub.s32 %s11, %s18
    %p46 = scmp.eq.s32.totalorder %s45, 0
    %s48 = sadd.s32 %s47, 1
    %s49 = scalar_select %p46, %s47, %s48
    %p52 = pneg %p46
    %p53 = scmp.eq.s32.totalorder %s11, 1
    %p54 = por %p52, %p53
    %p55 = scmp.ne.s32.totalorder %s47, %s50
    %p56 = scmp.eq.s32.totalorder %s11, 0
    %p57 = por %p55, %p56
    %p58 = scmp.ne.s32.totalorder %s47, %s50
    %p59 = scmp.eq.s32.totalorder %s16, 1
    %p60 = por %p58, %p59
    %p61 = scmp.ne.s32.totalorder %s50, %s51
    %p62 = scmp.eq.s32.totalorder %s16, 0
    %p63 = por %p61, %p62
    %p64 = scmp.ne.s32.totalorder %s50, %s51
    %p65 = scmp.eq.s32.totalorder %s17, 1
    %p66 = por %p64, %p65
    %p68 = scmp.ne.s32.totalorder %s51, %s67
    %p69 = scmp.eq.s32.totalorder %s17, 0
    %p70 = por %p68, %p69
    %s72 = sadd.s32 %s71, 1
    %p75 = scmp.eq.s32.totalorder %s11, 1
    %p76 = scmp.ne.s32.totalorder %s71, %s73
    %p77 = scmp.eq.s32.totalorder %s11, 0
    %p78 = por %p76, %p77
    %p79 = scmp.ne.s32.totalorder %s71, %s73
    %p80 = scmp.eq.s32.totalorder %s16, 1
    %p81 = por %p79, %p80
    %p82 = scmp.ne.s32.totalorder %s73, %s74
    %p83 = scmp.eq.s32.totalorder %s16, 0
    %p84 = por %p82, %p83
    %p85 = scmp.ne.s32.totalorder %s73, %s74
    %p86 = scmp.eq.s32.totalorder %s17, 1
    %p87 = por %p85, %p86
    %p89 = scmp.ne.s32.totalorder %s74, %s88
    %p90 = scmp.eq.s32.totalorder %s17, 0
    %p91 = por %p89, %p90
    %s93 = sadd.s32 %s92, 1
    %p96 = scmp.eq.s32.totalorder %s11, 1
    %p97 = scmp.ne.s32.totalorder %s92, %s94
    %p98 = scmp.eq.s32.totalorder %s11, 0
    %p99 = por %p97, %p98
    %p100 = scmp.ne.s32.totalorder %s92, %s94
    %p101 = scmp.eq.s32.totalorder %s16, 1
    %p102 = por %p100, %p101
    %p103 = scmp.ne.s32.totalorder %s94, %s95
    %p104 = scmp.eq.s32.totalorder %s16, 0
    %p105 = por %p103, %p104
    %p106 = scmp.ne.s32.totalorder %s94, %s95
    %p107 = scmp.eq.s32.totalorder %s17, 1
    %p108 = por %p106, %p107
    %p110 = scmp.ne.s32.totalorder %s95, %s109
    %p111 = scmp.eq.s32.totalorder %s17, 0
    %p112 = por %p110, %p111
    %s114 = sadd.s32 %s113, 1
    %p117 = scmp.eq.s32.totalorder %s11, 1
    %p118 = scmp.ne.s32.totalorder %s113, %s115
    %p119 = scmp.eq.s32.totalorder %s11, 0
    %p120 = por %p118, %p119
    %p121 = scmp.ne.s32.totalorder %s113, %s115
    %p122 = scmp.eq.s32.totalorder %s16, 1
    %p123 = por %p121, %p122
    %p124 = scmp.ne.s32.totalorder %s115, %s116
    %p125 = scmp.eq.s32.totalorder %s16, 0
    %p126 = por %p124, %p125
    %p127 = scmp.ne.s32.totalorder %s115, %s116
    %p128 = scmp.eq.s32.totalorder %s17, 1
    %p129 = por %p127, %p128
    %p131 = scmp.ne.s32.totalorder %s116, %s130
    %p132 = scmp.eq.s32.totalorder %s17, 0
    %p133 = por %p131, %p132
    %s134 = ssub.s32 %s11, %s18
    %p135 = scmp.eq.s32.totalorder %s134, 0
    %s137 = sadd.s32 %s136, 1
    %s138 = scalar_select %p135, %s136, %s137
    %p141 = pneg %p135
    %p142 = scmp.eq.s32.totalorder %s11, 1
    %p143 = por %p141, %p142
    %p144 = scmp.ne.s32.totalorder %s136, %s139
    %p145 = scmp.eq.s32.totalorder %s11, 0
    %p146 = por %p144, %p145
    %p147 = scmp.ne.s32.totalorder %s136, %s139
    %p148 = scmp.eq.s32.totalorder %s16, 1
    %p149 = por %p147, %p148
    %p150 = scmp.ne.s32.totalorder %s139, %s140
    %p151 = scmp.eq.s32.totalorder %s16, 0
    %p152 = por %p150, %p151
    %p153 = scmp.ne.s32.totalorder %s139, %s140
    %p154 = scmp.eq.s32.totalorder %s17, 1
    %p155 = por %p153, %p154
    %p157 = scmp.ne.s32.totalorder %s140, %s156
    %p158 = scmp.eq.s32.totalorder %s17, 0
    %p159 = por %p157, %p158
    %p160 = scmp.le.s32.totalorder 1, %s11
    %p161 = scmp.lt.s32.totalorder %s11, 3
    %p162 = pnand %p160, %p161
    %p163 = pneg %p162
    // Predicated region
    $region9: #{tpu_custom_call.1} parent=5 // pred_check
      _
    $region10: #{tpu_custom_call.1} parent=5 // pred_check_branch
      %165 = sbr.rel (%p162) target = $region12
    $region11: #{tpu_custom_call.1} parent=5 // pred_region
      %s166 = ssub.s32 %s11, 1
      // Predicated region
      $region13: #{tpu_custom_call.1} parent=11 // pred_check
        %p167 = pneg %p84
      $region14: #{tpu_custom_call.1} parent=11 // pred_check_branch
        %169 = sbr.rel (%p167) target = $region16
      $region15: #{tpu_custom_call.1} parent=11 // pred_region
        _
      $region16: #{tpu_custom_call.1} parent=11 // pred_fallthru
        _
      // Predicated region
      $region17: #{tpu_custom_call.1} parent=11 // pred_check
        %p170 = pneg %p105
      $region18: #{tpu_custom_call.1} parent=11 // pred_check_branch
        %172 = sbr.rel (%p170) target = $region20
      $region19: #{tpu_custom_call.1} parent=11 // pred_region
        _
      $region20: #{tpu_custom_call.1} parent=11 // pred_fallthru
        _
      // Predicated region
      $region21: #{tpu_custom_call.1} parent=11 // pred_check
        %p173 = pneg %p126
      $region22: #{tpu_custom_call.1} parent=11 // pred_check_branch
        %175 = sbr.rel (%p173) target = $region24
      $region23: #{tpu_custom_call.1} parent=11 // pred_region
        _
      $region24: #{tpu_custom_call.1} parent=11 // pred_fallthru
        _
    $region12: #{tpu_custom_call.1} parent=5 // pred_fallthru
      _
    %p176 = scmp.lt.s32.totalorder %s11, 2
    // Predicated region
    $region25: #{tpu_custom_call.1} parent=5 // pred_check
      %p177 = pneg %p176
    $region26: #{tpu_custom_call.1} parent=5 // pred_check_branch
      %179 = sbr.rel (%p177) target = $region28
    $region27: #{tpu_custom_call.1} parent=5 // pred_region
      // Predicated region
      $region29: #{tpu_custom_call.1} parent=27 // pred_check
        %p180 = pneg %p31
      $region30: #{tpu_custom_call.1} parent=27 // pred_check_branch
        %182 = sbr.rel (%p180) target = $region32
      $region31: #{tpu_custom_call.1} parent=27 // pred_region
        %p183 = scmp.lt.s32.totalorder %s11, 1
        %s184 = scalar_select %p183, %s11, 1
        %s185 = smul.addr %s184, 8
        %s186 = smul.addr %s185, 8
        %s187 = scalar_lea.vmem %s0, %s186
      $region32: #{tpu_custom_call.1} parent=27 // pred_fallthru
        _
      // Predicated region
      $region33: #{tpu_custom_call.1} parent=27 // pred_check
        %p188 = pneg %p57
      $region34: #{tpu_custom_call.1} parent=27 // pred_check_branch
        %190 = sbr.rel (%p188) target = $region36
      $region35: #{tpu_custom_call.1} parent=27 // pred_region
        %p191 = scmp.lt.s32.totalorder %s11, 1
        %s192 = scalar_select %p191, %s11, 1
        %s193 = smul.addr %s192, 8
        %s194 = smul.addr %s193, 8
        %s195 = scalar_lea.vmem %s1, %s194
      $region36: #{tpu_custom_call.1} parent=27 // pred_fallthru
        _
    $region28: #{tpu_custom_call.1} parent=5 // pred_fallthru
      _
    %p196 = scmp.le.s32.totalorder 1, %s11
    %p197 = scmp.lt.s32.totalorder %s11, 3
    %p198 = pnand %p196, %p197
    %p199 = pneg %p198
    // Predicated region
    $region37: #{tpu_custom_call.1} parent=5 // pred_check
      _
    $region38: #{tpu_custom_call.1} parent=5 // pred_check_branch
      %201 = sbr.rel (%p198) target = $region40
    $region39: #{tpu_custom_call.1} parent=5 // pred_region
      %s202 = ssub.s32 %s11, 1
      %p203 = scmp.lt.s32.totalorder %s16, 1
      %s204 = scalar_select %p203, %s16, 1
      %s205 = smul.addr %s204, 8
      %s206 = smul.addr %s205, 8
      %s207 = scalar_lea.vmem %s0, %s206
      %p208 = pneg %p37
      %p209 = pneg %p34
      %p210 = scmp.lt.s32.totalorder %s16, 1
      %s211 = scalar_select %p210, %s16, 1
      %s212 = smul.addr %s211, 8
      %s213 = smul.addr %s212, 8
      %s214 = scalar_lea.vmem %s1, %s213
      %p215 = pneg %p63
      %p216 = pneg %p60
      %p217 = pneg %p84
      %p218 = pneg %p81
      %p219 = pneg %p105
      %p220 = pneg %p102
      %p221 = pneg %p126
      %p222 = pneg %p123
      %p223 = pneg %p152
      %p224 = pneg %p149
      %p225 = scmp.lt.s32.totalorder %s16, 1
      %s226 = scalar_select %p225, %s16, 1
      %s227 = smul.addr %s226, 8
      %s228 = smul.addr %s227, 8
      %s229 = scalar_lea.vmem %s5, %s228
      %p230 = scmp.lt.s32.totalorder %s16, 1
      %s231 = scalar_select %p230, %s16, 1
      %s232 = smul.addr %s231, 8
      %s233 = smul.addr %s232, 8
      %s234 = scalar_lea.vmem %s0, %s233
      %p235 = scmp.lt.s32.totalorder %s16, 1
      %s236 = scalar_select %p235, %s16, 1
      %s237 = smul.addr %s236, 8
      %s238 = smul.addr %s237, 8
      %s239 = scalar_lea.vmem %s1, %s238
      %p240 = scmp.lt.s32.totalorder %s16, 1
      %s241 = scalar_select %p240, %s16, 1
      %s242 = smul.addr %s241, 8
      %s243 = smul.addr %s242, 8
      %s244 = scalar_lea.vmem %s5, %s243
      %v245 = vld [vmem:[%s234] sm:$0xff]
      %v246 = vld [vmem:[%s234 + $0x8] sm:$0xff]
      %v247 = vld [vmem:[%s234 + $0x10] sm:$0xff]
      %v248 = vld [vmem:[%s234 + $0x18] sm:$0xff]
      %v249 = vld [vmem:[%s234 + $0x20] sm:$0xff]
      %v250 = vld [vmem:[%s234 + $0x28] sm:$0xff]
      %v251 = vld [vmem:[%s234 + $0x30] sm:$0xff]
      %v252 = vld [vmem:[%s234 + $0x38] sm:$0xff]
      %v253 = vld [vmem:[%s239] sm:$0xff]
      %v254 = vld [vmem:[%s239 + $0x8] sm:$0xff]
      %v255 = vld [vmem:[%s239 + $0x10] sm:$0xff]
      %v256 = vld [vmem:[%s239 + $0x18] sm:$0xff]
      %v257 = vld [vmem:[%s239 + $0x20] sm:$0xff]
      %v258 = vld [vmem:[%s239 + $0x28] sm:$0xff]
      %v259 = vld [vmem:[%s239 + $0x30] sm:$0xff]
      %v260 = vld [vmem:[%s239 + $0x38] sm:$0xff]
      %v261 = vld [vmem:[%s2] sm:$0xff]
      %v262 = vld [vmem:[%s2 + $0x8] sm:$0xff]
      %v263 = vld [vmem:[%s2 + $0x10] sm:$0xff]
      %v264 = vld [vmem:[%s2 + $0x18] sm:$0xff]
      %vm265 = vcmask 261120
      %v267 = vsel %vm265, %v245, 0
      %v270 = vsel %vm265, %v246, 0
      %v273 = vsel %vm265, %v247, 0
      %v276 = vsel %vm265, %v248, 0
      %v279 = vsel %vm265, %v249, 0
      %v282 = vsel %vm265, %v250, 0
      %v285 = vsel %vm265, %v251, 0
      %v288 = vsel %vm265, %v252, 0
      %290 = vmatpush.msra.mxu0 0.0
      %291 = vmatpush.msra.mxu0 0.0
      %292 = vmatpush.msra.mxu0 0.0
      %293 = vmatpush.msra.mxu0 0.0
      %294 = vmatpush.msra.mxu0 0.0
      %295 = vmatpush.msra.mxu0 0.0
      %296 = vmatpush.msra.mxu0 0.0
      %297 = vmatpush.msra.mxu0 0.0
      %298 = vmatpush.msra.mxu0 0.0
      %299 = vmatpush.msra.mxu0 0.0
      %300 = vmatpush.msra.mxu0 0.0
      %301 = vmatpush.msra.mxu0 0.0
      %v302 = vand.u32 %v264, 4294901760
      %303 = vmatpush.msra.mxu0 %v302
      %v304 = vand.u32 %v263, 4294901760
      %305 = vmatpush.msra.mxu0 %v304
      %v306 = vand.u32 %v262, 4294901760
      %307 = vmatpush.msra.mxu0 %v306
      %v308 = vand.u32 %v261, 4294901760
      %309 = vmatpush.msra.mxu0 %v308
      %v310 = vand.u32 %v267, 4294901760
      %v311 = vsub.f32 %v267, %v310
      %v312 = vand.u32 %v311, 4294901760
      %v313 = vsub.f32 %v311, %v312
      %v314 = vand.u32 %v313, 4294901760
      %315 = vmatmul.f32.gmra.mxu0 %v314
      %v316 = vpop.f32.mrf.mxu0
      %v317 = vadd.f32 0.0, %v316
      %v318 = vand.u32 %v270, 4294901760
      %v319 = vsub.f32 %v270, %v318
      %v320 = vand.u32 %v319, 4294901760
      %v321 = vsub.f32 %v319, %v320
      %v322 = vand.u32 %v321, 4294901760
      %323 = vmatmul.f32.gmra.mxu0 %v322
      %v324 = vpop.f32.mrf.mxu0
      %v325 = vadd.f32 0.0, %v324
      %v326 = vand.u32 %v273, 4294901760
      %v327 = vsub.f32 %v273, %v326
      %v328 = vand.u32 %v327, 4294901760
      %v329 = vsub.f32 %v327, %v328
      %v330 = vand.u32 %v329, 4294901760
      %331 = vmatmul.f32.gmra.mxu0 %v330
      %v332 = vpop.f32.mrf.mxu0
      %v333 = vadd.f32 0.0, %v332
      %v334 = vand.u32 %v276, 4294901760
      %v335 = vsub.f32 %v276, %v334
      %v336 = vand.u32 %v335, 4294901760
      %v337 = vsub.f32 %v335, %v336
      %v338 = vand.u32 %v337, 4294901760
      %339 = vmatmul.f32.gmra.mxu0 %v338
      %v340 = vpop.f32.mrf.mxu0
      %v341 = vadd.f32 0.0, %v340
      %v342 = vand.u32 %v279, 4294901760
      %v343 = vsub.f32 %v279, %v342
      %v344 = vand.u32 %v343, 4294901760
      %v345 = vsub.f32 %v343, %v344
      %v346 = vand.u32 %v345, 4294901760
      %347 = vmatmul.f32.gmra.mxu0 %v346
      %v348 = vpop.f32.mrf.mxu0
      %v349 = vadd.f32 0.0, %v348
      %v350 = vand.u32 %v282, 4294901760
      %v351 = vsub.f32 %v282, %v350
      %v352 = vand.u32 %v351, 4294901760
      %v353 = vsub.f32 %v351, %v352
      %v354 = vand.u32 %v353, 4294901760
      %355 = vmatmul.f32.gmra.mxu0 %v354
      %v356 = vpop.f32.mrf.mxu0
      %v357 = vadd.f32 0.0, %v356
      %v358 = vand.u32 %v285, 4294901760
      %v359 = vsub.f32 %v285, %v358
      %v360 = vand.u32 %v359, 4294901760
      %v361 = vsub.f32 %v359, %v360
      %v362 = vand.u32 %v361, 4294901760
      %363 = vmatmul.f32.gmra.mxu0 %v362
      %v364 = vpop.f32.mrf.mxu0
      %v365 = vadd.f32 0.0, %v364
      %v366 = vand.u32 %v288, 4294901760
      %v367 = vsub.f32 %v288, %v366
      %v368 = vand.u32 %v367, 4294901760
      %v369 = vsub.f32 %v367, %v368
      %v370 = vand.u32 %v369, 4294901760
      %371 = vmatmul.f32.gmra.mxu0 %v370
      %v372 = vpop.f32.mrf.mxu0
      %v373 = vadd.f32 0.0, %v372
      %374 = vdwg.mxu0
      %375 = vmatpush.msra.mxu0 0.0
      %376 = vmatpush.msra.mxu0 0.0
      %377 = vmatpush.msra.mxu0 0.0
      %378 = vmatpush.msra.mxu0 0.0
      %379 = vmatpush.msra.mxu0 0.0
      %380 = vmatpush.msra.mxu0 0.0
      %381 = vmatpush.msra.mxu0 0.0
      %382 = vmatpush.msra.mxu0 0.0
      %383 = vmatpush.msra.mxu0 0.0
      %384 = vmatpush.msra.mxu0 0.0
      %385 = vmatpush.msra.mxu0 0.0
      %386 = vmatpush.msra.mxu0 0.0
      %v387 = vand.u32 %v264, 4294901760
      %v388 = vsub.f32 %v264, %v387
      %v389 = vand.u32 %v388, 4294901760
      %v390 = vsub.f32 %v388, %v389
      %v391 = vand.u32 %v390, 4294901760
      %392 = vmatpush.msra.mxu0 %v391
      %v393 = vand.u32 %v263, 4294901760
      %v394 = vsub.f32 %v263, %v393
      %v395 = vand.u32 %v394, 4294901760
      %v396 = vsub.f32 %v394, %v395
      %v397 = vand.u32 %v396, 4294901760
      %398 = vmatpush.msra.mxu0 %v397
      %v399 = vand.u32 %v262, 4294901760
      %v400 = vsub.f32 %v262, %v399
      %v401 = vand.u32 %v400, 4294901760
      %v402 = vsub.f32 %v400, %v401
      %v403 = vand.u32 %v402, 4294901760
      %404 = vmatpush.msra.mxu0 %v403
      %v405 = vand.u32 %v261, 4294901760
      %v406 = vsub.f32 %v261, %v405
      %v407 = vand.u32 %v406, 4294901760
      %v408 = vsub.f32 %v406, %v407
      %v409 = vand.u32 %v408, 4294901760
      %410 = vmatpush.msra.mxu0 %v409
      %v411 = vand.u32 %v267, 4294901760
      %412 = vmatmul.f32.gmra.mxu0 %v411
      %v413 = vpop.f32.mrf.mxu0
      %v414 = vadd.f32 %v317, %v413
      %v415 = vand.u32 %v270, 4294901760
      %416 = vmatmul.f32.gmra.mxu0 %v415
      %v417 = vpop.f32.mrf.mxu0
      %v418 = vadd.f32 %v325, %v417
      %v419 = vand.u32 %v273, 4294901760
      %420 = vmatmul.f32.gmra.mxu0 %v419
      %v421 = vpop.f32.mrf.mxu0
      %v422 = vadd.f32 %v333, %v421
      %v423 = vand.u32 %v276, 4294901760
      %424 = vmatmul.f32.gmra.mxu0 %v423
      %v425 = vpop.f32.mrf.mxu0
      %v426 = vadd.f32 %v341, %v425
      %v427 = vand.u32 %v279, 4294901760
      %428 = vmatmul.f32.gmra.mxu0 %v427
      %v429 = vpop.f32.mrf.mxu0
      %v430 = vadd.f32 %v349, %v429
      %v431 = vand.u32 %v282, 4294901760
      %432 = vmatmul.f32.gmra.mxu0 %v431
      %v433 = vpop.f32.mrf.mxu0
      %v434 = vadd.f32 %v357, %v433
      %v435 = vand.u32 %v285, 4294901760
      %436 = vmatmul.f32.gmra.mxu0 %v435
      %v437 = vpop.f32.mrf.mxu0
      %v438 = vadd.f32 %v365, %v437
      %v439 = vand.u32 %v288, 4294901760
      %440 = vmatmul.f32.gmra.mxu0 %v439
      %v441 = vpop.f32.mrf.mxu0
      %v442 = vadd.f32 %v373, %v441
      %443 = vdwg.mxu0
      %444 = vmatpush.msra.mxu0 0.0
      %445 = vmatpush.msra.mxu0 0.0
      %446 = vmatpush.msra.mxu0 0.0
      %447 = vmatpush.msra.mxu0 0.0
      %448 = vmatpush.msra.mxu0 0.0
      %449 = vmatpush.msra.mxu0 0.0
      %450 = vmatpush.msra.mxu0 0.0
      %451 = vmatpush.msra.mxu0 0.0
      %452 = vmatpush.msra.mxu0 0.0
      %453 = vmatpush.msra.mxu0 0.0
      %454 = vmatpush.msra.mxu0 0.0
      %455 = vmatpush.msra.mxu0 0.0
      %v456 = vand.u32 %v264, 4294901760
      %v457 = vsub.f32 %v264, %v456
      %458 = vmatpush.msra.mxu0 %v457
      %v459 = vand.u32 %v263, 4294901760
      %v460 = vsub.f32 %v263, %v459
      %461 = vmatpush.msra.mxu0 %v460
      %v462 = vand.u32 %v262, 4294901760
      %v463 = vsub.f32 %v262, %v462
      %464 = vmatpush.msra.mxu0 %v463
      %v465 = vand.u32 %v261, 4294901760
      %v466 = vsub.f32 %v261, %v465
      %467 = vmatpush.msra.mxu0 %v466
      %v468 = vand.u32 %v267, 4294901760
      %v469 = vsub.f32 %v267, %v468
      %470 = vmatmul.f32.gmra.mxu0 %v469
      %v471 = vpop.f32.mrf.mxu0
      %v472 = vadd.f32 %v414, %v471
      %v473 = vand.u32 %v270, 4294901760
      %v474 = vsub.f32 %v270, %v473
      %475 = vmatmul.f32.gmra.mxu0 %v474
      %v476 = vpop.f32.mrf.mxu0
      %v477 = vadd.f32 %v418, %v476
      %v478 = vand.u32 %v273, 4294901760
      %v479 = vsub.f32 %v273, %v478
      %480 = vmatmul.f32.gmra.mxu0 %v479
      %v481 = vpop.f32.mrf.mxu0
      %v482 = vadd.f32 %v422, %v481
      %v483 = vand.u32 %v276, 4294901760
      %v484 = vsub.f32 %v276, %v483
      %485 = vmatmul.f32.gmra.mxu0 %v484
      %v486 = vpop.f32.mrf.mxu0
      %v487 = vadd.f32 %v426, %v486
      %v488 = vand.u32 %v279, 4294901760
      %v489 = vsub.f32 %v279, %v488
      %490 = vmatmul.f32.gmra.mxu0 %v489
      %v491 = vpop.f32.mrf.mxu0
      %v492 = vadd.f32 %v430, %v491
      %v493 = vand.u32 %v282, 4294901760
      %v494 = vsub.f32 %v282, %v493
      %495 = vmatmul.f32.gmra.mxu0 %v494
      %v496 = vpop.f32.mrf.mxu0
      %v497 = vadd.f32 %v434, %v496
      %v498 = vand.u32 %v285, 4294901760
      %v499 = vsub.f32 %v285, %v498
      %500 = vmatmul.f32.gmra.mxu0 %v499
      %v501 = vpop.f32.mrf.mxu0
      %v502 = vadd.f32 %v438, %v501
      %v503 = vand.u32 %v288, 4294901760
      %v504 = vsub.f32 %v288, %v503
      %505 = vmatmul.f32.gmra.mxu0 %v504
      %v506 = vpop.f32.mrf.mxu0
      %v507 = vadd.f32 %v442, %v506
      %508 = vdwg.mxu0
      %509 = vmatpush.msra.mxu0 0.0
      %510 = vmatpush.msra.mxu0 0.0
      %511 = vmatpush.msra.mxu0 0.0
      %512 = vmatpush.msra.mxu0 0.0
      %513 = vmatpush.msra.mxu0 0.0
      %514 = vmatpush.msra.mxu0 0.0
      %515 = vmatpush.msra.mxu0 0.0
      %516 = vmatpush.msra.mxu0 0.0
      %517 = vmatpush.msra.mxu0 0.0
      %518 = vmatpush.msra.mxu0 0.0
      %519 = vmatpush.msra.mxu0 0.0
      %520 = vmatpush.msra.mxu0 0.0
      %v521 = vand.u32 %v264, 4294901760
      %522 = vmatpush.msra.mxu0 %v521
      %v523 = vand.u32 %v263, 4294901760
      %524 = vmatpush.msra.mxu0 %v523
      %v525 = vand.u32 %v262, 4294901760
      %526 = vmatpush.msra.mxu0 %v525
      %v527 = vand.u32 %v261, 4294901760
      %528 = vmatpush.msra.mxu0 %v527
      %v529 = vand.u32 %v267, 4294901760
      %v530 = vsub.f32 %v267, %v529
      %v531 = vand.u32 %v530, 4294901760
      %532 = vmatmul.f32.gmra.mxu0 %v531
      %v533 = vpop.f32.mrf.mxu0
      %v534 = vadd.f32 %v472, %v533
      %v535 = vand.u32 %v270, 4294901760
      %v536 = vsub.f32 %v270, %v535
      %v537 = vand.u32 %v536, 4294901760
      %538 = vmatmul.f32.gmra.mxu0 %v537
      %v539 = vpop.f32.mrf.mxu0
      %v540 = vadd.f32 %v477, %v539
      %v541 = vand.u32 %v273, 4294901760
      %v542 = vsub.f32 %v273, %v541
      %v543 = vand.u32 %v542, 4294901760
      %544 = vmatmul.f32.gmra.mxu0 %v543
      %v545 = vpop.f32.mrf.mxu0
      %v546 = vadd.f32 %v482, %v545
      %v547 = vand.u32 %v276, 4294901760
      %v548 = vsub.f32 %v276, %v547
      %v549 = vand.u32 %v548, 4294901760
      %550 = vmatmul.f32.gmra.mxu0 %v549
      %v551 = vpop.f32.mrf.mxu0
      %v552 = vadd.f32 %v487, %v551
      %v553 = vand.u32 %v279, 4294901760
      %v554 = vsub.f32 %v279, %v553
      %v555 = vand.u32 %v554, 4294901760
      %556 = vmatmul.f32.gmra.mxu0 %v555
      %v557 = vpop.f32.mrf.mxu0
      %v558 = vadd.f32 %v492, %v557
      %v559 = vand.u32 %v282, 4294901760
      %v560 = vsub.f32 %v282, %v559
      %v561 = vand.u32 %v560, 4294901760
      %562 = vmatmul.f32.gmra.mxu0 %v561
      %v563 = vpop.f32.mrf.mxu0
      %v564 = vadd.f32 %v497, %v563
      %v565 = vand.u32 %v285, 4294901760
      %v566 = vsub.f32 %v285, %v565
      %v567 = vand.u32 %v566, 4294901760
      %568 = vmatmul.f32.gmra.mxu0 %v567
      %v569 = vpop.f32.mrf.mxu0
      %v570 = vadd.f32 %v502, %v569
      %v571 = vand.u32 %v288, 4294901760
      %v572 = vsub.f32 %v288, %v571
      %v573 = vand.u32 %v572, 4294901760
      %574 = vmatmul.f32.gmra.mxu0 %v573
      %v575 = vpop.f32.mrf.mxu0
      %v576 = vadd.f32 %v507, %v575
      %577 = vdwg.mxu0
      %578 = vmatpush.msra.mxu0 0.0
      %579 = vmatpush.msra.mxu0 0.0
      %580 = vmatpush.msra.mxu0 0.0
      %581 = vmatpush.msra.mxu0 0.0
      %582 = vmatpush.msra.mxu0 0.0
      %583 = vmatpush.msra.mxu0 0.0
      %584 = vmatpush.msra.mxu0 0.0
      %585 = vmatpush.msra.mxu0 0.0
      %586 = vmatpush.msra.mxu0 0.0
      %587 = vmatpush.msra.mxu0 0.0
      %588 = vmatpush.msra.mxu0 0.0
      %589 = vmatpush.msra.mxu0 0.0
      %v590 = vand.u32 %v264, 4294901760
      %v591 = vsub.f32 %v264, %v590
      %v592 = vand.u32 %v591, 4294901760
      %593 = vmatpush.msra.mxu0 %v592
      %v594 = vand.u32 %v263, 4294901760
      %v595 = vsub.f32 %v263, %v594
      %v596 = vand.u32 %v595, 4294901760
      %597 = vmatpush.msra.mxu0 %v596
      %v598 = vand.u32 %v262, 4294901760
      %v599 = vsub.f32 %v262, %v598
      %v600 = vand.u32 %v599, 4294901760
      %601 = vmatpush.msra.mxu0 %v600
      %v602 = vand.u32 %v261, 4294901760
      %v603 = vsub.f32 %v261, %v602
      %v604 = vand.u32 %v603, 4294901760
      %605 = vmatpush.msra.mxu0 %v604
      %v606 = vand.u32 %v267, 4294901760
      %607 = vmatmul.f32.gmra.mxu0 %v606
      %v608 = vpop.f32.mrf.mxu0
      %v609 = vadd.f32 %v534, %v608
      %v610 = vand.u32 %v270, 4294901760
      %611 = vmatmul.f32.gmra.mxu0 %v610
      %v612 = vpop.f32.mrf.mxu0
      %v613 = vadd.f32 %v540, %v612
      %v614 = vand.u32 %v273, 4294901760
      %615 = vmatmul.f32.gmra.mxu0 %v614
      %v616 = vpop.f32.mrf.mxu0
      %v617 = vadd.f32 %v546, %v616
      %v618 = vand.u32 %v276, 4294901760
      %619 = vmatmul.f32.gmra.mxu0 %v618
      %v620 = vpop.f32.mrf.mxu0
      %v621 = vadd.f32 %v552, %v620
      %v622 = vand.u32 %v279, 4294901760
      %623 = vmatmul.f32.gmra.mxu0 %v622
      %v624 = vpop.f32.mrf.mxu0
      %v625 = vadd.f32 %v558, %v624
      %v626 = vand.u32 %v282, 4294901760
      %627 = vmatmul.f32.gmra.mxu0 %v626
      %v628 = vpop.f32.mrf.mxu0
      %v629 = vadd.f32 %v564, %v628
      %v630 = vand.u32 %v285, 4294901760
      %631 = vmatmul.f32.gmra.mxu0 %v630
      %v632 = vpop.f32.mrf.mxu0
      %v633 = vadd.f32 %v570, %v632
      %v634 = vand.u32 %v288, 4294901760
      %635 = vmatmul.f32.gmra.mxu0 %v634
      %v636 = vpop.f32.mrf.mxu0
      %v637 = vadd.f32 %v576, %v636
      %638 = vdwg.mxu0
      %639 = vmatpush.msra.mxu0 0.0
      %640 = vmatpush.msra.mxu0 0.0
      %641 = vmatpush.msra.mxu0 0.0
      %642 = vmatpush.msra.mxu0 0.0
      %643 = vmatpush.msra.mxu0 0.0
      %644 = vmatpush.msra.mxu0 0.0
      %645 = vmatpush.msra.mxu0 0.0
      %646 = vmatpush.msra.mxu0 0.0
      %647 = vmatpush.msra.mxu0 0.0
      %648 = vmatpush.msra.mxu0 0.0
      %649 = vmatpush.msra.mxu0 0.0
      %650 = vmatpush.msra.mxu0 0.0
      %v651 = vand.u32 %v264, 4294901760
      %652 = vmatpush.msra.mxu0 %v651
      %v653 = vand.u32 %v263, 4294901760
      %654 = vmatpush.msra.mxu0 %v653
      %v655 = vand.u32 %v262, 4294901760
      %656 = vmatpush.msra.mxu0 %v655
      %v657 = vand.u32 %v261, 4294901760
      %658 = vmatpush.msra.mxu0 %v657
      %v659 = vand.u32 %v267, 4294901760
      %660 = vmatmul.f32.gmra.mxu0 %v659
      %v661 = vpop.f32.mrf.mxu0
      %v662 = vadd.f32 %v609, %v661
      %v663 = vand.u32 %v270, 4294901760
      %664 = vmatmul.f32.gmra.mxu0 %v663
      %v665 = vpop.f32.mrf.mxu0
      %v666 = vadd.f32 %v613, %v665
      %v667 = vand.u32 %v273, 4294901760
      %668 = vmatmul.f32.gmra.mxu0 %v667
      %v669 = vpop.f32.mrf.mxu0
      %v670 = vadd.f32 %v617, %v669
      %v671 = vand.u32 %v276, 4294901760
      %672 = vmatmul.f32.gmra.mxu0 %v671
      %v673 = vpop.f32.mrf.mxu0
      %v674 = vadd.f32 %v621, %v673
      %v675 = vand.u32 %v279, 4294901760
      %676 = vmatmul.f32.gmra.mxu0 %v675
      %v677 = vpop.f32.mrf.mxu0
      %v678 = vadd.f32 %v625, %v677
      %v679 = vand.u32 %v282, 4294901760
      %680 = vmatmul.f32.gmra.mxu0 %v679
      %v681 = vpop.f32.mrf.mxu0
      %v682 = vadd.f32 %v629, %v681
      %v683 = vand.u32 %v285, 4294901760
      %684 = vmatmul.f32.gmra.mxu0 %v683
      %v685 = vpop.f32.mrf.mxu0
      %v686 = vadd.f32 %v633, %v685
      %v687 = vand.u32 %v288, 4294901760
      %688 = vmatmul.f32.gmra.mxu0 %v687
      %v689 = vpop.f32.mrf.mxu0
      %v690 = vadd.f32 %v637, %v689
      %691 = vdwg.mxu0
      %v692 = vld [vmem:[%s3] sm:$0xff]
      %v693 = vld [vmem:[%s3 + $0x8] sm:$0xff]
      %v694 = vld [vmem:[%s3 + $0x10] sm:$0xff]
      %v695 = vld [vmem:[%s3 + $0x18] sm:$0xff]
      %v697 = vsel %vm265, %v253, 0
      %v700 = vsel %vm265, %v254, 0
      %v703 = vsel %vm265, %v255, 0
      %v706 = vsel %vm265, %v256, 0
      %v709 = vsel %vm265, %v257, 0
      %v712 = vsel %vm265, %v258, 0
      %v715 = vsel %vm265, %v259, 0
      %v718 = vsel %vm265, %v260, 0
      %720 = vmatpush.msra.mxu0 0.0
      %721 = vmatpush.msra.mxu0 0.0
      %722 = vmatpush.msra.mxu0 0.0
      %723 = vmatpush.msra.mxu0 0.0
      %724 = vmatpush.msra.mxu0 0.0
      %725 = vmatpush.msra.mxu0 0.0
      %726 = vmatpush.msra.mxu0 0.0
      %727 = vmatpush.msra.mxu0 0.0
      %728 = vmatpush.msra.mxu0 0.0
      %729 = vmatpush.msra.mxu0 0.0
      %730 = vmatpush.msra.mxu0 0.0
      %731 = vmatpush.msra.mxu0 0.0
      %v732 = vand.u32 %v695, 4294901760
      %733 = vmatpush.msra.mxu0 %v732
      %v734 = vand.u32 %v694, 4294901760
      %735 = vmatpush.msra.mxu0 %v734
      %v736 = vand.u32 %v693, 4294901760
      %737 = vmatpush.msra.mxu0 %v736
      %v738 = vand.u32 %v692, 4294901760
      %739 = vmatpush.msra.mxu0 %v738
      %v740 = vand.u32 %v697, 4294901760
      %v741 = vsub.f32 %v697, %v740
      %v742 = vand.u32 %v741, 4294901760
      %v743 = vsub.f32 %v741, %v742
      %v744 = vand.u32 %v743, 4294901760
      %745 = vmatmul.f32.gmra.mxu0 %v744
      %v746 = vpop.f32.mrf.mxu0
      %v747 = vadd.f32 0.0, %v746
      %v748 = vand.u32 %v700, 4294901760
      %v749 = vsub.f32 %v700, %v748
      %v750 = vand.u32 %v749, 4294901760
      %v751 = vsub.f32 %v749, %v750
      %v752 = vand.u32 %v751, 4294901760
      %753 = vmatmul.f32.gmra.mxu0 %v752
      %v754 = vpop.f32.mrf.mxu0
      %v755 = vadd.f32 0.0, %v754
      %v756 = vand.u32 %v703, 4294901760
      %v757 = vsub.f32 %v703, %v756
      %v758 = vand.u32 %v757, 4294901760
      %v759 = vsub.f32 %v757, %v758
      %v760 = vand.u32 %v759, 4294901760
      %761 = vmatmul.f32.gmra.mxu0 %v760
      %v762 = vpop.f32.mrf.mxu0
      %v763 = vadd.f32 0.0, %v762
      %v764 = vand.u32 %v706, 4294901760
      %v765 = vsub.f32 %v706, %v764
      %v766 = vand.u32 %v765, 4294901760
      %v767 = vsub.f32 %v765, %v766
      %v768 = vand.u32 %v767, 4294901760
      %769 = vmatmul.f32.gmra.mxu0 %v768
      %v770 = vpop.f32.mrf.mxu0
      %v771 = vadd.f32 0.0, %v770
      %v772 = vand.u32 %v709, 4294901760
      %v773 = vsub.f32 %v709, %v772
      %v774 = vand.u32 %v773, 4294901760
      %v775 = vsub.f32 %v773, %v774
      %v776 = vand.u32 %v775, 4294901760
      %777 = vmatmul.f32.gmra.mxu0 %v776
      %v778 = vpop.f32.mrf.mxu0
      %v779 = vadd.f32 0.0, %v778
      %v780 = vand.u32 %v712, 4294901760
      %v781 = vsub.f32 %v712, %v780
      %v782 = vand.u32 %v781, 4294901760
      %v783 = vsub.f32 %v781, %v782
      %v784 = vand.u32 %v783, 4294901760
      %785 = vmatmul.f32.gmra.mxu0 %v784
      %v786 = vpop.f32.mrf.mxu0
      %v787 = vadd.f32 0.0, %v786
      %v788 = vand.u32 %v715, 4294901760
      %v789 = vsub.f32 %v715, %v788
      %v790 = vand.u32 %v789, 4294901760
      %v791 = vsub.f32 %v789, %v790
      %v792 = vand.u32 %v791, 4294901760
      %793 = vmatmul.f32.gmra.mxu0 %v792
      %v794 = vpop.f32.mrf.mxu0
      %v795 = vadd.f32 0.0, %v794
      %v796 = vand.u32 %v718, 4294901760
      %v797 = vsub.f32 %v718, %v796
      %v798 = vand.u32 %v797, 4294901760
      %v799 = vsub.f32 %v797, %v798
      %v800 = vand.u32 %v799, 4294901760
      %801 = vmatmul.f32.gmra.mxu0 %v800
      %v802 = vpop.f32.mrf.mxu0
      %v803 = vadd.f32 0.0, %v802
      %804 = vdwg.mxu0
      %805 = vmatpush.msra.mxu0 0.0
      %806 = vmatpush.msra.mxu0 0.0
      %807 = vmatpush.msra.mxu0 0.0
      %808 = vmatpush.msra.mxu0 0.0
      %809 = vmatpush.msra.mxu0 0.0
      %810 = vmatpush.msra.mxu0 0.0
      %811 = vmatpush.msra.mxu0 0.0
      %812 = vmatpush.msra.mxu0 0.0
      %813 = vmatpush.msra.mxu0 0.0
      %814 = vmatpush.msra.mxu0 0.0
      %815 = vmatpush.msra.mxu0 0.0
      %816 = vmatpush.msra.mxu0 0.0
      %v817 = vand.u32 %v695, 4294901760
      %v818 = vsub.f32 %v695, %v817
      %v819 = vand.u32 %v818, 4294901760
      %v820 = vsub.f32 %v818, %v819
      %v821 = vand.u32 %v820, 4294901760
      %822 = vmatpush.msra.mxu0 %v821
      %v823 = vand.u32 %v694, 4294901760
      %v824 = vsub.f32 %v694, %v823
      %v825 = vand.u32 %v824, 4294901760
      %v826 = vsub.f32 %v824, %v825
      %v827 = vand.u32 %v826, 4294901760
      %828 = vmatpush.msra.mxu0 %v827
      %v829 = vand.u32 %v693, 4294901760
      %v830 = vsub.f32 %v693, %v829
      %v831 = vand.u32 %v830, 4294901760
      %v832 = vsub.f32 %v830, %v831
      %v833 = vand.u32 %v832, 4294901760
      %834 = vmatpush.msra.mxu0 %v833
      %v835 = vand.u32 %v692, 4294901760
      %v836 = vsub.f32 %v692, %v835
      %v837 = vand.u32 %v836, 4294901760
      %v838 = vsub.f32 %v836, %v837
      %v839 = vand.u32 %v838, 4294901760
      %840 = vmatpush.msra.mxu0 %v839
      %v841 = vand.u32 %v697, 4294901760
      %842 = vmatmul.f32.gmra.mxu0 %v841
      %v843 = vpop.f32.mrf.mxu0
      %v844 = vadd.f32 %v747, %v843
      %v845 = vand.u32 %v700, 4294901760
      %846 = vmatmul.f32.gmra.mxu0 %v845
      %v847 = vpop.f32.mrf.mxu0
      %v848 = vadd.f32 %v755, %v847
      %v849 = vand.u32 %v703, 4294901760
      %850 = vmatmul.f32.gmra.mxu0 %v849
      %v851 = vpop.f32.mrf.mxu0
      %v852 = vadd.f32 %v763, %v851
      %v853 = vand.u32 %v706, 4294901760
      %854 = vmatmul.f32.gmra.mxu0 %v853
      %v855 = vpop.f32.mrf.mxu0
      %v856 = vadd.f32 %v771, %v855
      %v857 = vand.u32 %v709, 4294901760
      %858 = vmatmul.f32.gmra.mxu0 %v857
      %v859 = vpop.f32.mrf.mxu0
      %v860 = vadd.f32 %v779, %v859
      %v861 = vand.u32 %v712, 4294901760
      %862 = vmatmul.f32.gmra.mxu0 %v861
      %v863 = vpop.f32.mrf.mxu0
      %v864 = vadd.f32 %v787, %v863
      %v865 = vand.u32 %v715, 4294901760
      %866 = vmatmul.f32.gmra.mxu0 %v865
      %v867 = vpop.f32.mrf.mxu0
      %v868 = vadd.f32 %v795, %v867
      %v869 = vand.u32 %v718, 4294901760
      %870 = vmatmul.f32.gmra.mxu0 %v869
      %v871 = vpop.f32.mrf.mxu0
      %v872 = vadd.f32 %v803, %v871
      %873 = vdwg.mxu0
      %874 = vmatpush.msra.mxu0 0.0
      %875 = vmatpush.msra.mxu0 0.0
      %876 = vmatpush.msra.mxu0 0.0
      %877 = vmatpush.msra.mxu0 0.0
      %878 = vmatpush.msra.mxu0 0.0
      %879 = vmatpush.msra.mxu0 0.0
      %880 = vmatpush.msra.mxu0 0.0
      %881 = vmatpush.msra.mxu0 0.0
      %882 = vmatpush.msra.mxu0 0.0
      %883 = vmatpush.msra.mxu0 0.0
      %884 = vmatpush.msra.mxu0 0.0
      %885 = vmatpush.msra.mxu0 0.0
      %v886 = vand.u32 %v695, 4294901760
      %v887 = vsub.f32 %v695, %v886
      %888 = vmatpush.msra.mxu0 %v887
      %v889 = vand.u32 %v694, 4294901760
      %v890 = vsub.f32 %v694, %v889
      %891 = vmatpush.msra.mxu0 %v890
      %v892 = vand.u32 %v693, 4294901760
      %v893 = vsub.f32 %v693, %v892
      %894 = vmatpush.msra.mxu0 %v893
      %v895 = vand.u32 %v692, 4294901760
      %v896 = vsub.f32 %v692, %v895
      %897 = vmatpush.msra.mxu0 %v896
      %v898 = vand.u32 %v697, 4294901760
      %v899 = vsub.f32 %v697, %v898
      %900 = vmatmul.f32.gmra.mxu0 %v899
      %v901 = vpop.f32.mrf.mxu0
      %v902 = vadd.f32 %v844, %v901
      %v903 = vand.u32 %v700, 4294901760
      %v904 = vsub.f32 %v700, %v903
      %905 = vmatmul.f32.gmra.mxu0 %v904
      %v906 = vpop.f32.mrf.mxu0
      %v907 = vadd.f32 %v848, %v906
      %v908 = vand.u32 %v703, 4294901760
      %v909 = vsub.f32 %v703, %v908
      %910 = vmatmul.f32.gmra.mxu0 %v909
      %v911 = vpop.f32.mrf.mxu0
      %v912 = vadd.f32 %v852, %v911
      %v913 = vand.u32 %v706, 4294901760
      %v914 = vsub.f32 %v706, %v913
      %915 = vmatmul.f32.gmra.mxu0 %v914
      %v916 = vpop.f32.mrf.mxu0
      %v917 = vadd.f32 %v856, %v916
      %v918 = vand.u32 %v709, 4294901760
      %v919 = vsub.f32 %v709, %v918
      %920 = vmatmul.f32.gmra.mxu0 %v919
      %v921 = vpop.f32.mrf.mxu0
      %v922 = vadd.f32 %v860, %v921
      %v923 = vand.u32 %v712, 4294901760
      %v924 = vsub.f32 %v712, %v923
      %925 = vmatmul.f32.gmra.mxu0 %v924
      %v926 = vpop.f32.mrf.mxu0
      %v927 = vadd.f32 %v864, %v926
      %v928 = vand.u32 %v715, 4294901760
      %v929 = vsub.f32 %v715, %v928
      %930 = vmatmul.f32.gmra.mxu0 %v929
      %v931 = vpop.f32.mrf.mxu0
      %v932 = vadd.f32 %v868, %v931
      %v933 = vand.u32 %v718, 4294901760
      %v934 = vsub.f32 %v718, %v933
      %935 = vmatmul.f32.gmra.mxu0 %v934
      %v936 = vpop.f32.mrf.mxu0
      %v937 = vadd.f32 %v872, %v936
      %938 = vdwg.mxu0
      %939 = vmatpush.msra.mxu0 0.0
      %940 = vmatpush.msra.mxu0 0.0
      %941 = vmatpush.msra.mxu0 0.0
      %942 = vmatpush.msra.mxu0 0.0
      %943 = vmatpush.msra.mxu0 0.0
      %944 = vmatpush.msra.mxu0 0.0
      %945 = vmatpush.msra.mxu0 0.0
      %946 = vmatpush.msra.mxu0 0.0
      %947 = vmatpush.msra.mxu0 0.0
      %948 = vmatpush.msra.mxu0 0.0
      %949 = vmatpush.msra.mxu0 0.0
      %950 = vmatpush.msra.mxu0 0.0
      %v951 = vand.u32 %v695, 4294901760
      %952 = vmatpush.msra.mxu0 %v951
      %v953 = vand.u32 %v694, 4294901760
      %954 = vmatpush.msra.mxu0 %v953
      %v955 = vand.u32 %v693, 4294901760
      %956 = vmatpush.msra.mxu0 %v955
      %v957 = vand.u32 %v692, 4294901760
      %958 = vmatpush.msra.mxu0 %v957
      %v959 = vand.u32 %v697, 4294901760
      %v960 = vsub.f32 %v697, %v959
      %v961 = vand.u32 %v960, 4294901760
      %962 = vmatmul.f32.gmra.mxu0 %v961
      %v963 = vpop.f32.mrf.mxu0
      %v964 = vadd.f32 %v902, %v963
      %v965 = vand.u32 %v700, 4294901760
      %v966 = vsub.f32 %v700, %v965
      %v967 = vand.u32 %v966, 4294901760
      %968 = vmatmul.f32.gmra.mxu0 %v967
      %v969 = vpop.f32.mrf.mxu0
      %v970 = vadd.f32 %v907, %v969
      %v971 = vand.u32 %v703, 4294901760
      %v972 = vsub.f32 %v703, %v971
      %v973 = vand.u32 %v972, 4294901760
      %974 = vmatmul.f32.gmra.mxu0 %v973
      %v975 = vpop.f32.mrf.mxu0
      %v976 = vadd.f32 %v912, %v975
      %v977 = vand.u32 %v706, 4294901760
      %v978 = vsub.f32 %v706, %v977
      %v979 = vand.u32 %v978, 4294901760
      %980 = vmatmul.f32.gmra.mxu0 %v979
      %v981 = vpop.f32.mrf.mxu0
      %v982 = vadd.f32 %v917, %v981
      %v983 = vand.u32 %v709, 4294901760
      %v984 = vsub.f32 %v709, %v983
      %v985 = vand.u32 %v984, 4294901760
      %986 = vmatmul.f32.gmra.mxu0 %v985
      %v987 = vpop.f32.mrf.mxu0
      %v988 = vadd.f32 %v922, %v987
      %v989 = vand.u32 %v712, 4294901760
      %v990 = vsub.f32 %v712, %v989
      %v991 = vand.u32 %v990, 4294901760
      %992 = vmatmul.f32.gmra.mxu0 %v991
      %v993 = vpop.f32.mrf.mxu0
      %v994 = vadd.f32 %v927, %v993
      %v995 = vand.u32 %v715, 4294901760
      %v996 = vsub.f32 %v715, %v995
      %v997 = vand.u32 %v996, 4294901760
      %998 = vmatmul.f32.gmra.mxu0 %v997
      %v999 = vpop.f32.mrf.mxu0
      %v1000 = vadd.f32 %v932, %v999
      %v1001 = vand.u32 %v718, 4294901760
      %v1002 = vsub.f32 %v718, %v1001
      %v1003 = vand.u32 %v1002, 4294901760
      %1004 = vmatmul.f32.gmra.mxu0 %v1003
      %v1005 = vpop.f32.mrf.mxu0
      %v1006 = vadd.f32 %v937, %v1005
      %1007 = vdwg.mxu0
      %1008 = vmatpush.msra.mxu0 0.0
      %1009 = vmatpush.msra.mxu0 0.0
      %1010 = vmatpush.msra.mxu0 0.0
      %1011 = vmatpush.msra.mxu0 0.0
      %1012 = vmatpush.msra.mxu0 0.0
      %1013 = vmatpush.msra.mxu0 0.0
      %1014 = vmatpush.msra.mxu0 0.0
      %1015 = vmatpush.msra.mxu0 0.0
      %1016 = vmatpush.msra.mxu0 0.0
      %1017 = vmatpush.msra.mxu0 0.0
      %1018 = vmatpush.msra.mxu0 0.0
      %1019 = vmatpush.msra.mxu0 0.0
      %v1020 = vand.u32 %v695, 4294901760
      %v1021 = vsub.f32 %v695, %v1020
      %v1022 = vand.u32 %v1021, 4294901760
      %1023 = vmatpush.msra.mxu0 %v1022
      %v1024 = vand.u32 %v694, 4294901760
      %v1025 = vsub.f32 %v694, %v1024
      %v1026 = vand.u32 %v1025, 4294901760
      %1027 = vmatpush.msra.mxu0 %v1026
      %v1028 = vand.u32 %v693, 4294901760
      %v1029 = vsub.f32 %v693, %v1028
      %v1030 = vand.u32 %v1029, 4294901760
      %1031 = vmatpush.msra.mxu0 %v1030
      %v1032 = vand.u32 %v692, 4294901760
      %v1033 = vsub.f32 %v692, %v1032
      %v1034 = vand.u32 %v1033, 4294901760
      %1035 = vmatpush.msra.mxu0 %v1034
      %v1036 = vand.u32 %v697, 4294901760
      %1037 = vmatmul.f32.gmra.mxu0 %v1036
      %v1038 = vpop.f32.mrf.mxu0
      %v1039 = vadd.f32 %v964, %v1038
      %v1040 = vand.u32 %v700, 4294901760
      %1041 = vmatmul.f32.gmra.mxu0 %v1040
      %v1042 = vpop.f32.mrf.mxu0
      %v1043 = vadd.f32 %v970, %v1042
      %v1044 = vand.u32 %v703, 4294901760
      %1045 = vmatmul.f32.gmra.mxu0 %v1044
      %v1046 = vpop.f32.mrf.mxu0
      %v1047 = vadd.f32 %v976, %v1046
      %v1048 = vand.u32 %v706, 4294901760
      %1049 = vmatmul.f32.gmra.mxu0 %v1048
      %v1050 = vpop.f32.mrf.mxu0
      %v1051 = vadd.f32 %v982, %v1050
      %v1052 = vand.u32 %v709, 4294901760
      %1053 = vmatmul.f32.gmra.mxu0 %v1052
      %v1054 = vpop.f32.mrf.mxu0
      %v1055 = vadd.f32 %v988, %v1054
      %v1056 = vand.u32 %v712, 4294901760
      %1057 = vmatmul.f32.gmra.mxu0 %v1056
      %v1058 = vpop.f32.mrf.mxu0
      %v1059 = vadd.f32 %v994, %v1058
      %v1060 = vand.u32 %v715, 4294901760
      %1061 = vmatmul.f32.gmra.mxu0 %v1060
      %v1062 = vpop.f32.mrf.mxu0
      %v1063 = vadd.f32 %v1000, %v1062
      %v1064 = vand.u32 %v718, 4294901760
      %1065 = vmatmul.f32.gmra.mxu0 %v1064
      %v1066 = vpop.f32.mrf.mxu0
      %v1067 = vadd.f32 %v1006, %v1066
      %1068 = vdwg.mxu0
      %1069 = vmatpush.msra.mxu0 0.0
      %1070 = vmatpush.msra.mxu0 0.0
      %1071 = vmatpush.msra.mxu0 0.0
      %1072 = vmatpush.msra.mxu0 0.0
      %1073 = vmatpush.msra.mxu0 0.0
      %1074 = vmatpush.msra.mxu0 0.0
      %1075 = vmatpush.msra.mxu0 0.0
      %1076 = vmatpush.msra.mxu0 0.0
      %1077 = vmatpush.msra.mxu0 0.0
      %1078 = vmatpush.msra.mxu0 0.0
      %1079 = vmatpush.msra.mxu0 0.0
      %1080 = vmatpush.msra.mxu0 0.0
      %v1081 = vand.u32 %v695, 4294901760
      %1082 = vmatpush.msra.mxu0 %v1081
      %v1083 = vand.u32 %v694, 4294901760
      %1084 = vmatpush.msra.mxu0 %v1083
      %v1085 = vand.u32 %v693, 4294901760
      %1086 = vmatpush.msra.mxu0 %v1085
      %v1087 = vand.u32 %v692, 4294901760
      %1088 = vmatpush.msra.mxu0 %v1087
      %v1089 = vand.u32 %v697, 4294901760
      %1090 = vmatmul.f32.gmra.mxu0 %v1089
      %v1091 = vpop.f32.mrf.mxu0
      %v1092 = vadd.f32 %v1039, %v1091
      %v1093 = vand.u32 %v700, 4294901760
      %1094 = vmatmul.f32.gmra.mxu0 %v1093
      %v1095 = vpop.f32.mrf.mxu0
      %v1096 = vadd.f32 %v1043, %v1095
      %v1097 = vand.u32 %v703, 4294901760
      %1098 = vmatmul.f32.gmra.mxu0 %v1097
      %v1099 = vpop.f32.mrf.mxu0
      %v1100 = vadd.f32 %v1047, %v1099
      %v1101 = vand.u32 %v706, 4294901760
      %1102 = vmatmul.f32.gmra.mxu0 %v1101
      %v1103 = vpop.f32.mrf.mxu0
      %v1104 = vadd.f32 %v1051, %v1103
      %v1105 = vand.u32 %v709, 4294901760
      %1106 = vmatmul.f32.gmra.mxu0 %v1105
      %v1107 = vpop.f32.mrf.mxu0
      %v1108 = vadd.f32 %v1055, %v1107
      %v1109 = vand.u32 %v712, 4294901760
      %1110 = vmatmul.f32.gmra.mxu0 %v1109
      %v1111 = vpop.f32.mrf.mxu0
      %v1112 = vadd.f32 %v1059, %v1111
      %v1113 = vand.u32 %v715, 4294901760
      %1114 = vmatmul.f32.gmra.mxu0 %v1113
      %v1115 = vpop.f32.mrf.mxu0
      %v1116 = vadd.f32 %v1063, %v1115
      %v1117 = vand.u32 %v718, 4294901760
      %1118 = vmatmul.f32.gmra.mxu0 %v1117
      %v1119 = vpop.f32.mrf.mxu0
      %v1120 = vadd.f32 %v1067, %v1119
      %1121 = vdwg.mxu0
      %1122 = vxpose.xlu0.b32.start [1/16] %v662, 128
      %1123 = vxpose.xlu0.b32.cont [2/16] %v666, 128
      %1124 = vxpose.xlu0.b32.cont [3/16] 0.0, 128
      %1125 = vxpose.xlu0.b32.cont [4/16] 0.0, 128
      %1126 = vxpose.xlu0.b32.cont [5/16] 0.0, 128
      %1127 = vxpose.xlu0.b32.cont [6/16] 0.0, 128
      %1128 = vxpose.xlu0.b32.cont [7/16] 0.0, 128
      %1129 = vxpose.xlu0.b32.cont [8/16] 0.0, 128
      %1130 = vxpose.xlu0.b32.cont [9/16] 0.0, 128
      %1131 = vxpose.xlu0.b32.cont [10/16] 0.0, 128
      %1132 = vxpose.xlu0.b32.cont [11/16] 0.0, 128
      %1133 = vxpose.xlu0.b32.cont [12/16] 0.0, 128
      %1134 = vxpose.xlu0.b32.cont [13/16] 0.0, 128
      %1135 = vxpose.xlu0.b32.cont [14/16] 0.0, 128
      %1136 = vxpose.xlu0.b32.cont [15/16] 0.0, 128
      %1137 = vxpose.xlu0.b32.end [16/16] 0.0, 128
      %v1138 = vpop.trf.xlu0
      %v1139 = vpop.trf.xlu0
      %v1140 = vpop.trf.xlu0
      %v1141 = vpop.trf.xlu0
      %v1142 = vpop.trf.xlu0
      %v1143 = vpop.trf.xlu0
      %v1144 = vpop.trf.xlu0
      %v1145 = vpop.trf.xlu0
      %v1146 = vpop.trf.xlu0
      %v1147 = vpop.trf.xlu0
      %v1148 = vpop.trf.xlu0
      %v1149 = vpop.trf.xlu0
      %v1150 = vpop.trf.xlu0
      %v1151 = vpop.trf.xlu0
      %v1152 = vpop.trf.xlu0
      %v1153 = vpop.trf.xlu0
      %vm1154 = vcmask 130048
      %v1156 = vsel %vm1154, %v1138, 0
      %v1159 = vsel %vm1154, %v1139, 0
      %1161 = vmatpush.msra.mxu0 0.0
      %1162 = vmatpush.msra.mxu0 0.0
      %1163 = vmatpush.msra.mxu0 0.0
      %1164 = vmatpush.msra.mxu0 0.0
      %1165 = vmatpush.msra.mxu0 0.0
      %1166 = vmatpush.msra.mxu0 0.0
      %1167 = vmatpush.msra.mxu0 0.0
      %1168 = vmatpush.msra.mxu0 0.0
      %1169 = vmatpush.msra.mxu0 0.0
      %1170 = vmatpush.msra.mxu0 0.0
      %1171 = vmatpush.msra.mxu0 0.0
      %1172 = vmatpush.msra.mxu0 0.0
      %1173 = vmatpush.msra.mxu0 0.0
      %1174 = vmatpush.msra.mxu0 0.0
      %v1175 = vand.u32 %v1096, 4294901760
      %1176 = vmatpush.msra.mxu0 %v1175
      %v1177 = vand.u32 %v1092, 4294901760
      %1178 = vmatpush.msra.mxu0 %v1177
      %v1179 = vand.u32 %v1156, 4294901760
      %v1180 = vsub.f32 %v1156, %v1179
      %v1181 = vand.u32 %v1180, 4294901760
      %v1182 = vsub.f32 %v1180, %v1181
      %v1183 = vand.u32 %v1182, 4294901760
      %1184 = vmatmul.f32.gmra.mxu0 %v1183
      %v1185 = vpop.f32.mrf.mxu0
      %v1186 = vadd.f32 0.0, %v1185
      %v1187 = vand.u32 %v1159, 4294901760
      %v1188 = vsub.f32 %v1159, %v1187
      %v1189 = vand.u32 %v1188, 4294901760
      %v1190 = vsub.f32 %v1188, %v1189
      %v1191 = vand.u32 %v1190, 4294901760
      %1192 = vmatmul.f32.gmra.mxu0 %v1191
      %v1193 = vpop.f32.mrf.mxu0
      %v1194 = vadd.f32 0.0, %v1193
      %1195 = vdwg.mxu0
      %1196 = vmatpush.msra.mxu0 0.0
      %1197 = vmatpush.msra.mxu0 0.0
      %1198 = vmatpush.msra.mxu0 0.0
      %1199 = vmatpush.msra.mxu0 0.0
      %1200 = vmatpush.msra.mxu0 0.0
      %1201 = vmatpush.msra.mxu0 0.0
      %1202 = vmatpush.msra.mxu0 0.0
      %1203 = vmatpush.msra.mxu0 0.0
      %1204 = vmatpush.msra.mxu0 0.0
      %1205 = vmatpush.msra.mxu0 0.0
      %1206 = vmatpush.msra.mxu0 0.0
      %1207 = vmatpush.msra.mxu0 0.0
      %1208 = vmatpush.msra.mxu0 0.0
      %1209 = vmatpush.msra.mxu0 0.0
      %v1210 = vand.u32 %v1096, 4294901760
      %v1211 = vsub.f32 %v1096, %v1210
      %v1212 = vand.u32 %v1211, 4294901760
      %v1213 = vsub.f32 %v1211, %v1212
      %v1214 = vand.u32 %v1213, 4294901760
      %1215 = vmatpush.msra.mxu0 %v1214
      %v1216 = vand.u32 %v1092, 4294901760
      %v1217 = vsub.f32 %v1092, %v1216
      %v1218 = vand.u32 %v1217, 4294901760
      %v1219 = vsub.f32 %v1217, %v1218
      %v1220 = vand.u32 %v1219, 4294901760
      %1221 = vmatpush.msra.mxu0 %v1220
      %v1222 = vand.u32 %v1156, 4294901760
      %1223 = vmatmul.f32.gmra.mxu0 %v1222
      %v1224 = vpop.f32.mrf.mxu0
      %v1225 = vadd.f32 %v1186, %v1224
      %v1226 = vand.u32 %v1159, 4294901760
      %1227 = vmatmul.f32.gmra.mxu0 %v1226
      %v1228 = vpop.f32.mrf.mxu0
      %v1229 = vadd.f32 %v1194, %v1228
      %1230 = vdwg.mxu0
      %1231 = vmatpush.msra.mxu0 0.0
      %1232 = vmatpush.msra.mxu0 0.0
      %1233 = vmatpush.msra.mxu0 0.0
      %1234 = vmatpush.msra.mxu0 0.0
      %1235 = vmatpush.msra.mxu0 0.0
      %1236 = vmatpush.msra.mxu0 0.0
      %1237 = vmatpush.msra.mxu0 0.0
      %1238 = vmatpush.msra.mxu0 0.0
      %1239 = vmatpush.msra.mxu0 0.0
      %1240 = vmatpush.msra.mxu0 0.0
      %1241 = vmatpush.msra.mxu0 0.0
      %1242 = vmatpush.msra.mxu0 0.0
      %1243 = vmatpush.msra.mxu0 0.0
      %1244 = vmatpush.msra.mxu0 0.0
      %v1245 = vand.u32 %v1096, 4294901760
      %v1246 = vsub.f32 %v1096, %v1245
      %1247 = vmatpush.msra.mxu0 %v1246
      %v1248 = vand.u32 %v1092, 4294901760
      %v1249 = vsub.f32 %v1092, %v1248
      %1250 = vmatpush.msra.mxu0 %v1249
      %v1251 = vand.u32 %v1156, 4294901760
      %v1252 = vsub.f32 %v1156, %v1251
      %1253 = vmatmul.f32.gmra.mxu0 %v1252
      %v1254 = vpop.f32.mrf.mxu0
      %v1255 = vadd.f32 %v1225, %v1254
      %v1256 = vand.u32 %v1159, 4294901760
      %v1257 = vsub.f32 %v1159, %v1256
      %1258 = vmatmul.f32.gmra.mxu0 %v1257
      %v1259 = vpop.f32.mrf.mxu0
      %v1260 = vadd.f32 %v1229, %v1259
      %1261 = vdwg.mxu0
      %1262 = vmatpush.msra.mxu0 0.0
      %1263 = vmatpush.msra.mxu0 0.0
      %1264 = vmatpush.msra.mxu0 0.0
      %1265 = vmatpush.msra.mxu0 0.0
      %1266 = vmatpush.msra.mxu0 0.0
      %1267 = vmatpush.msra.mxu0 0.0
      %1268 = vmatpush.msra.mxu0 0.0
      %1269 = vmatpush.msra.mxu0 0.0
      %1270 = vmatpush.msra.mxu0 0.0
      %1271 = vmatpush.msra.mxu0 0.0
      %1272 = vmatpush.msra.mxu0 0.0
      %1273 = vmatpush.msra.mxu0 0.0
      %1274 = vmatpush.msra.mxu0 0.0
      %1275 = vmatpush.msra.mxu0 0.0
      %v1276 = vand.u32 %v1096, 4294901760
      %1277 = vmatpush.msra.mxu0 %v1276
      %v1278 = vand.u32 %v1092, 4294901760
      %1279 = vmatpush.msra.mxu0 %v1278
      %v1280 = vand.u32 %v1156, 4294901760
      %v1281 = vsub.f32 %v1156, %v1280
      %v1282 = vand.u32 %v1281, 4294901760
      %1283 = vmatmul.f32.gmra.mxu0 %v1282
      %v1284 = vpop.f32.mrf.mxu0
      %v1285 = vadd.f32 %v1255, %v1284
      %v1286 = vand.u32 %v1159, 4294901760
      %v1287 = vsub.f32 %v1159, %v1286
      %v1288 = vand.u32 %v1287, 4294901760
      %1289 = vmatmul.f32.gmra.mxu0 %v1288
      %v1290 = vpop.f32.mrf.mxu0
      %v1291 = vadd.f32 %v1260, %v1290
      %1292 = vdwg.mxu0
      %1293 = vmatpush.msra.mxu0 0.0
      %1294 = vmatpush.msra.mxu0 0.0
      %1295 = vmatpush.msra.mxu0 0.0
      %1296 = vmatpush.msra.mxu0 0.0
      %1297 = vmatpush.msra.mxu0 0.0
      %1298 = vmatpush.msra.mxu0 0.0
      %1299 = vmatpush.msra.mxu0 0.0
      %1300 = vmatpush.msra.mxu0 0.0
      %1301 = vmatpush.msra.mxu0 0.0
      %1302 = vmatpush.msra.mxu0 0.0
      %1303 = vmatpush.msra.mxu0 0.0
      %1304 = vmatpush.msra.mxu0 0.0
      %1305 = vmatpush.msra.mxu0 0.0
      %1306 = vmatpush.msra.mxu0 0.0
      %v1307 = vand.u32 %v1096, 4294901760
      %v1308 = vsub.f32 %v1096, %v1307
      %v1309 = vand.u32 %v1308, 4294901760
      %1310 = vmatpush.msra.mxu0 %v1309
      %v1311 = vand.u32 %v1092, 4294901760
      %v1312 = vsub.f32 %v1092, %v1311
      %v1313 = vand.u32 %v1312, 4294901760
      %1314 = vmatpush.msra.mxu0 %v1313
      %v1315 = vand.u32 %v1156, 4294901760
      %1316 = vmatmul.f32.gmra.mxu0 %v1315
      %v1317 = vpop.f32.mrf.mxu0
      %v1318 = vadd.f32 %v1285, %v1317
      %v1319 = vand.u32 %v1159, 4294901760
      %1320 = vmatmul.f32.gmra.mxu0 %v1319
      %v1321 = vpop.f32.mrf.mxu0
      %v1322 = vadd.f32 %v1291, %v1321
      %1323 = vdwg.mxu0
      %1324 = vmatpush.msra.mxu0 0.0
      %1325 = vmatpush.msra.mxu0 0.0
      %1326 = vmatpush.msra.mxu0 0.0
      %1327 = vmatpush.msra.mxu0 0.0
      %1328 = vmatpush.msra.mxu0 0.0
      %1329 = vmatpush.msra.mxu0 0.0
      %1330 = vmatpush.msra.mxu0 0.0
      %1331 = vmatpush.msra.mxu0 0.0
      %1332 = vmatpush.msra.mxu0 0.0
      %1333 = vmatpush.msra.mxu0 0.0
      %1334 = vmatpush.msra.mxu0 0.0
      %1335 = vmatpush.msra.mxu0 0.0
      %1336 = vmatpush.msra.mxu0 0.0
      %1337 = vmatpush.msra.mxu0 0.0
      %v1338 = vand.u32 %v1096, 4294901760
      %1339 = vmatpush.msra.mxu0 %v1338
      %v1340 = vand.u32 %v1092, 4294901760
      %1341 = vmatpush.msra.mxu0 %v1340
      %v1342 = vand.u32 %v1156, 4294901760
      %1343 = vmatmul.f32.gmra.mxu0 %v1342
      %v1344 = vpop.f32.mrf.mxu0
      %v1345 = vadd.f32 %v1318, %v1344
      %v1346 = vand.u32 %v1159, 4294901760
      %1347 = vmatmul.f32.gmra.mxu0 %v1346
      %v1348 = vpop.f32.mrf.mxu0
      %v1349 = vadd.f32 %v1322, %v1348
      %1350 = vdwg.mxu0
      %1352 = vrot.lane.b32.xlu0 %v1349, 120
      %v1353 = vpop.permute.xlu0 %1352
      %v1355 = vsub.f32 %v1345, %v1353
      %1356 = vrot.lane.b32.xlu0 %v1349, 8
      %v1357 = vpop.permute.xlu0 %1356
      %v1359 = vadd.f32 %v1345, %v1357
      %v1360 = vtanh.pop %v1355
      %v1361 = vand.u32 2147483647, %v1359
      %vm1362 = vcmp.le.f32.partialorder %v1361, 0.7853982
      %vm1363 = vcmp.lt.s32.totalorder %v1359, 0
      %v1364 = vand.u32 %v1359, 2139095040
      %v1365 = vshrl.u32 %v1364, 23
      %v1366 = vsub.s32 %v1365, 127
      %v1367 = vand.u32 2147483647, %v1359
      %v1368 = vand.u32 %v1367, 8388607
      %v1369 = vor.u32 %v1368, 8388608
      %v1370 = vsub.s32 0, %v1369
      %v1371 = vadd.s32 %v1366, 1
      %vm1372 = vcmp.gt.s32.totalorder %v1371, 0
      %v1373 = vsel %vm1372, %v1371, 0
      %v1374 = vshrl.u32 %v1373, 5
      %v1375 = vand.u32 %v1373, 31
      %v1376 = vsub.s32 32, %v1375
      %v1377 = vshrl.u32 683565275, %v1376
      %v1378 = vshll.u32 683565275, %v1375
      %v1379 = vshrl.u32 2475754826, %v1376
      %v1380 = vor.u32 %v1378, %v1379
      %v1381 = vshll.u32 2475754826, %v1375
      %v1382 = vshrl.u32 2131351028, %v1376
      %v1383 = vor.u32 %v1381, %v1382
      %v1384 = vshll.u32 2131351028, %v1375
      %v1385 = vshrl.u32 2102212464, %v1376
      %v1386 = vor.u32 %v1384, %v1385
      %v1387 = vshll.u32 2102212464, %v1375
      %v1388 = vshrl.u32 920167782, %v1376
      %v1389 = vor.u32 %v1387, %v1388
      %v1390 = vshll.u32 920167782, %v1375
      %v1391 = vshrl.u32 1326507024, %v1376
      %v1392 = vor.u32 %v1390, %v1391
      %vm1393 = vcmp.lt.s32.totalorder %v1374, 1
      %vm1394 = vcmp.lt.s32.totalorder %v1374, 2
      %vm1395 = vcmp.lt.s32.totalorder %v1374, 3
      %vm1396 = vcmp.lt.s32.totalorder %v1374, 4
      %v1397 = vsel %vm1393, %v1377, %v1380
      %v1398 = vsel %vm1396, %v1386, 2102212464
      %v1399 = vsel %vm1395, %v1383, %v1398
      %v1400 = vsel %vm1394, %v1397, %v1399
      %v1401 = vsel %vm1393, %v1380, %v1383
      %v1402 = vsel %vm1396, %v1389, 920167782
      %v1403 = vsel %vm1395, %v1386, %v1402
      %v1404 = vsel %vm1394, %v1401, %v1403
      %v1405 = vsel %vm1393, %v1383, %v1386
      %v1406 = vsel %vm1396, %v1392, 1326507024
      %v1407 = vsel %vm1395, %v1389, %v1406
      %v1408 = vsel %vm1394, %v1405, %v1407
      %v1409 = vshll.u32 %v1369, 8
      %v1410 = vand.u32 %v1409, 65535
      %v1411 = vshrl.u32 %v1409, 16
      %v1412 = vand.u32 %v1408, 65535
      %v1413 = vshrl.u32 %v1408, 16
      %v1414 = vmul.u32 %v1410, %v1412
      %v1415 = vmul.u32 %v1410, %v1413
      %v1416 = vmul.u32 %v1411, %v1412
      %v1417 = vmul.u32 %v1411, %v1413
      %v1418 = vshll.u32 %v1415, 16
      %v1419 = vshrl.u32 %v1415, 16
      %v1420 = vshll.u32 %v1416, 16
      %v1421 = vshrl.u32 %v1416, 16
      %vm1422 = vc.u32 %v1414, %v1418
      %v1423 = vsel %vm1422, 1, 0
      %v1424 = vadd.s32 %v1414, %v1418
      %v1425 = vadd.s32 %v1417, %v1423
      %vm1426 = vc.u32 %v1424, %v1420
      %v1427 = vsel %vm1426, 1, 0
      %v1428 = vadd.s32 %v1424, %v1420
      %v1429 = vadd.s32 %v1425, %v1427
      %v1430 = vadd.s32 %v1429, %v1419
      %v1431 = vadd.s32 %v1430, %v1421
      %v1432 = vand.u32 %v1409, 65535
      %v1433 = vshrl.u32 %v1409, 16
      %v1434 = vand.u32 %v1404, 65535
      %v1435 = vshrl.u32 %v1404, 16
      %v1436 = vmul.u32 %v1432, %v1434
      %v1437 = vmul.u32 %v1432, %v1435
      %v1438 = vmul.u32 %v1433, %v1434
      %v1439 = vmul.u32 %v1433, %v1435
      %v1440 = vshll.u32 %v1437, 16
      %v1441 = vshrl.u32 %v1437, 16
      %v1442 = vshll.u32 %v1438, 16
      %v1443 = vshrl.u32 %v1438, 16
      %vm1444 = vc.u32 %v1436, %v1440
      %v1445 = vsel %vm1444, 1, 0
      %v1446 = vadd.s32 %v1436, %v1440
      %v1447 = vadd.s32 %v1439, %v1445
      %vm1448 = vc.u32 %v1446, %v1442
      %v1449 = vsel %vm1448, 1, 0
      %v1450 = vadd.s32 %v1446, %v1442
      %v1451 = vadd.s32 %v1447, %v1449
      %v1452 = vadd.s32 %v1451, %v1441
      %v1453 = vadd.s32 %v1452, %v1443
      %v1454 = vmul.u32 %v1409, %v1400
      %v1455 = vadd.s32 %v1431, %v1450
      %vm1456 = vc.u32 %v1431, %v1450
      %v1457 = vadd.s32 %v1453, 1
      %v1458 = vsel %vm1456, %v1457, %v1453
      %v1459 = vadd.s32 %v1454, %v1458
      %v1460 = vadd.s32 %v1459, 536870912
      %v1461 = vshrl.u32 %v1460, 30
      %v1462 = vshll.u32 %v1461, 30
      %v1463 = vsub.s32 %v1459, %v1462
      %vm1464 = vcmp.lt.s32.totalorder %v1463, 0
      %v1465 = vsub.s32 0, %v1463
      %v1466 = vsel %vm1464, %v1465, %v1463
      %v1467 = vclz %v1466
      %v1468 = vsub.s32 %v1467, 2
      %vm1469 = vcmp.gt.s32.totalorder 0, %v1468
      %v1470 = vsel %vm1469, 0, %v1468
      %v1471 = vsub.s32 32, %v1470
      %v1472 = vshll.u32 %v1463, %v1470
      %v1473 = vshrl.u32 %v1455, %v1471
      %v1474 = vor.u32 %v1472, %v1473
      %v1475 = vsub.s32 4294967266, %v1470
      %v1476 = vadd.s32 %v1475, 127
      %v1477 = vshll.u32 %v1476, 23
      %v1478 = vor.u32 4788187, %v1477
      %v1479 = vand.u32 2147483647, %v1478
      %v1481 = vcvt.s32.f32 %v1474
      %v1482 = vmul.f32 %v1481, %v1479
      %v1483 = vxor.u32 %v1482, 2147483648
      %v1484 = vsel %vm1363, %v1483, %v1482
      %v1485 = vsub.s32 4, %v1461
      %v1486 = vsel %vm1363, %v1485, %v1461
      %v1487 = vsel %vm1362, %v1359, %v1484
      %v1488 = vsel %vm1362, 0, %v1486
      %v1489 = vmul.f32 %v1487, %v1487
      %v1490 = vmul.f32 %v1489, -0.001358992
      %v1491 = vadd.f32 %v1490, 0.041655596
      %v1492 = vmul.f32 %v1489, %v1491
      %v1493 = vadd.f32 %v1492, -0.4999988
      %v1494 = vmul.f32 %v1489, %v1493
      %v1495 = vadd.f32 1.0, %v1494
      %v1496 = vmul.f32 %v1487, %v1487
      %v1497 = vmul.f32 %v1496, -0.00019511016
      %v1498 = vadd.f32 %v1497, 0.008332121
      %v1499 = vmul.f32 %v1496, %v1498
      %v1500 = vadd.f32 %v1499, -0.16666654
      %v1501 = vmul.f32 %v1496, %v1500
      %v1502 = vadd.f32 %v1501, 1.0
      %v1503 = vmul.f32 %v1502, %v1487
      %vm1504 = vweird.f32 %v1359
      %v1505 = vand.u32 %v1488, 3
      %vm1506 = vcmp.lt.s32.totalorder %v1505, 2
      %vm1507 = vcmp.eq.s32.totalorder %v1505, 0
      %v1508 = vxor.u32 %v1503, 2147483648
      %v1509 = vsel %vm1507, %v1495, %v1508
      %vm1510 = vcmp.eq.s32.totalorder %v1505, 2
      %v1511 = vxor.u32 %v1495, 2147483648
      %v1512 = vsel %vm1510, %v1511, %v1503
      %v1513 = vsel %vm1506, %v1509, %v1512
      %v1514 = vsel %vm1504, nan, %v1513
      %v1515 = vand.u32 2147483647, %v1359
      %vm1516 = vcmp.le.f32.partialorder %v1515, 0.7853982
      %vm1517 = vcmp.lt.s32.totalorder %v1359, 0
      %v1518 = vand.u32 %v1359, 2139095040
      %v1519 = vshrl.u32 %v1518, 23
      %v1520 = vsub.s32 %v1519, 127
      %v1521 = vand.u32 2147483647, %v1359
      %v1522 = vand.u32 %v1521, 8388607
      %v1523 = vor.u32 %v1522, 8388608
      %v1524 = vsub.s32 0, %v1523
      %v1525 = vadd.s32 %v1520, 1
      %vm1526 = vcmp.gt.s32.totalorder %v1525, 0
      %v1527 = vsel %vm1526, %v1525, 0
      %v1528 = vshrl.u32 %v1527, 5
      %v1529 = vand.u32 %v1527, 31
      %v1530 = vsub.s32 32, %v1529
      %v1531 = vshrl.u32 683565275, %v1530
      %v1532 = vshll.u32 683565275, %v1529
      %v1533 = vshrl.u32 2475754826, %v1530
      %v1534 = vor.u32 %v1532, %v1533
      %v1535 = vshll.u32 2475754826, %v1529
      %v1536 = vshrl.u32 2131351028, %v1530
      %v1537 = vor.u32 %v1535, %v1536
      %v1538 = vshll.u32 2131351028, %v1529
      %v1539 = vshrl.u32 2102212464, %v1530
      %v1540 = vor.u32 %v1538, %v1539
      %v1541 = vshll.u32 2102212464, %v1529
      %v1542 = vshrl.u32 920167782, %v1530
      %v1543 = vor.u32 %v1541, %v1542
      %v1544 = vshll.u32 920167782, %v1529
      %v1545 = vshrl.u32 1326507024, %v1530
      %v1546 = vor.u32 %v1544, %v1545
      %vm1547 = vcmp.lt.s32.totalorder %v1528, 1
      %vm1548 = vcmp.lt.s32.totalorder %v1528, 2
      %vm1549 = vcmp.lt.s32.totalorder %v1528, 3
      %vm1550 = vcmp.lt.s32.totalorder %v1528, 4
      %v1551 = vsel %vm1547, %v1531, %v1534
      %v1552 = vsel %vm1550, %v1540, 2102212464
      %v1553 = vsel %vm1549, %v1537, %v1552
      %v1554 = vsel %vm1548, %v1551, %v1553
      %v1555 = vsel %vm1547, %v1534, %v1537
      %v1556 = vsel %vm1550, %v1543, 920167782
      %v1557 = vsel %vm1549, %v1540, %v1556
      %v1558 = vsel %vm1548, %v1555, %v1557
      %v1559 = vsel %vm1547, %v1537, %v1540
      %v1560 = vsel %vm1550, %v1546, 1326507024
      %v1561 = vsel %vm1549, %v1543, %v1560
      %v1562 = vsel %vm1548, %v1559, %v1561
      %v1563 = vshll.u32 %v1523, 8
      %v1564 = vand.u32 %v1563, 65535
      %v1565 = vshrl.u32 %v1563, 16
      %v1566 = vand.u32 %v1562, 65535
      %v1567 = vshrl.u32 %v1562, 16
      %v1568 = vmul.u32 %v1564, %v1566
      %v1569 = vmul.u32 %v1564, %v1567
      %v1570 = vmul.u32 %v1565, %v1566
      %v1571 = vmul.u32 %v1565, %v1567
      %v1572 = vshll.u32 %v1569, 16
      %v1573 = vshrl.u32 %v1569, 16
      %v1574 = vshll.u32 %v1570, 16
      %v1575 = vshrl.u32 %v1570, 16
      %vm1576 = vc.u32 %v1568, %v1572
      %v1577 = vsel %vm1576, 1, 0
      %v1578 = vadd.s32 %v1568, %v1572
      %v1579 = vadd.s32 %v1571, %v1577
      %vm1580 = vc.u32 %v1578, %v1574
      %v1581 = vsel %vm1580, 1, 0
      %v1582 = vadd.s32 %v1578, %v1574
      %v1583 = vadd.s32 %v1579, %v1581
      %v1584 = vadd.s32 %v1583, %v1573
      %v1585 = vadd.s32 %v1584, %v1575
      %v1586 = vand.u32 %v1563, 65535
      %v1587 = vshrl.u32 %v1563, 16
      %v1588 = vand.u32 %v1558, 65535
      %v1589 = vshrl.u32 %v1558, 16
      %v1590 = vmul.u32 %v1586, %v1588
      %v1591 = vmul.u32 %v1586, %v1589
      %v1592 = vmul.u32 %v1587, %v1588
      %v1593 = vmul.u32 %v1587, %v1589
      %v1594 = vshll.u32 %v1591, 16
      %v1595 = vshrl.u32 %v1591, 16
      %v1596 = vshll.u32 %v1592, 16
      %v1597 = vshrl.u32 %v1592, 16
      %vm1598 = vc.u32 %v1590, %v1594
      %v1599 = vsel %vm1598, 1, 0
      %v1600 = vadd.s32 %v1590, %v1594
      %v1601 = vadd.s32 %v1593, %v1599
      %vm1602 = vc.u32 %v1600, %v1596
      %v1603 = vsel %vm1602, 1, 0
      %v1604 = vadd.s32 %v1600, %v1596
      %v1605 = vadd.s32 %v1601, %v1603
      %v1606 = vadd.s32 %v1605, %v1595
      %v1607 = vadd.s32 %v1606, %v1597
      %v1608 = vmul.u32 %v1563, %v1554
      %v1609 = vadd.s32 %v1585, %v1604
      %vm1610 = vc.u32 %v1585, %v1604
      %v1611 = vadd.s32 %v1607, 1
      %v1612 = vsel %vm1610, %v1611, %v1607
      %v1613 = vadd.s32 %v1608, %v1612
      %v1614 = vadd.s32 %v1613, 536870912
      %v1615 = vshrl.u32 %v1614, 30
      %v1616 = vshll.u32 %v1615, 30
      %v1617 = vsub.s32 %v1613, %v1616
      %vm1618 = vcmp.lt.s32.totalorder %v1617, 0
      %v1619 = vsub.s32 0, %v1617
      %v1620 = vsel %vm1618, %v1619, %v1617
      %v1621 = vclz %v1620
      %v1622 = vsub.s32 %v1621, 2
      %vm1623 = vcmp.gt.s32.totalorder 0, %v1622
      %v1624 = vsel %vm1623, 0, %v1622
      %v1625 = vsub.s32 32, %v1624
      %v1626 = vshll.u32 %v1617, %v1624
      %v1627 = vshrl.u32 %v1609, %v1625
      %v1628 = vor.u32 %v1626, %v1627
      %v1629 = vsub.s32 4294967266, %v1624
      %v1630 = vadd.s32 %v1629, 127
      %v1631 = vshll.u32 %v1630, 23
      %v1632 = vor.u32 4788187, %v1631
      %v1633 = vand.u32 2147483647, %v1632
      %v1635 = vcvt.s32.f32 %v1628
      %v1636 = vmul.f32 %v1635, %v1633
      %v1637 = vxor.u32 %v1636, 2147483648
      %v1638 = vsel %vm1517, %v1637, %v1636
      %v1639 = vsub.s32 4, %v1615
      %v1640 = vsel %vm1517, %v1639, %v1615
      %v1641 = vsel %vm1516, %v1359, %v1638
      %v1642 = vsel %vm1516, 0, %v1640
      %v1643 = vmul.f32 %v1641, %v1641
      %v1644 = vmul.f32 %v1643, -0.001358992
      %v1645 = vadd.f32 %v1644, 0.041655596
      %v1646 = vmul.f32 %v1643, %v1645
      %v1647 = vadd.f32 %v1646, -0.4999988
      %v1648 = vmul.f32 %v1643, %v1647
      %v1649 = vadd.f32 1.0, %v1648
      %v1650 = vmul.f32 %v1641, %v1641
      %v1651 = vmul.f32 %v1650, -0.00019511016
      %v1652 = vadd.f32 %v1651, 0.008332121
      %v1653 = vmul.f32 %v1650, %v1652
      %v1654 = vadd.f32 %v1653, -0.16666654
      %v1655 = vmul.f32 %v1650, %v1654
      %v1656 = vadd.f32 %v1655, 1.0
      %v1657 = vmul.f32 %v1656, %v1641
      %vm1658 = vweird.f32 %v1359
      %v1659 = vadd.s32 %v1642, 3
      %v1660 = vand.u32 %v1659, 3
      %vm1661 = vcmp.lt.s32.totalorder %v1660, 2
      %vm1662 = vcmp.eq.s32.totalorder %v1660, 0
      %v1663 = vxor.u32 %v1657, 2147483648
      %v1664 = vsel %vm1662, %v1649, %v1663
      %vm1665 = vcmp.eq.s32.totalorder %v1660, 2
      %v1666 = vxor.u32 %v1649, 2147483648
      %v1667 = vsel %vm1665, %v1666, %v1657
      %v1668 = vsel %vm1661, %v1664, %v1667
      %v1669 = vsel %vm1658, nan, %v1668
      %v1670 = vmul.f32 %v1360, %v1360
      %v1671 = vsub.f32 1.0, %v1670
      %v1672 = vmul.f32 %v1514, %v1514
      %1674 = vrot.lane.b32.xlu0 %v1671, 8
      %v1675 = vpop.permute.xlu0 %1674
      %v1677 = vmul.f32 %v1672, %v1675
      %1679 = vrot.lane.b32.xlu0 %v1677, 120
      %v1680 = vpop.permute.xlu0 %1679
      %v1682 = vadd.f32 %v1670, %v1680
      %v1683 = vrcp.pop %v1682
      %v1684 = vmul.f32 %v1682, %v1683
      %v1685 = vsub.f32 1.0, %v1684
      %v1686 = vmul.f32 %v1683, %v1685
      %v1687 = vadd.f32 %v1683, %v1686
      %vm1688 = vweird.f32 %v1682
      %vm1689 = vweird.f32 %v1683
      %vm1690 = vmor %vm1688, %vm1689
      %v1691 = vsel %vm1690, %v1683, %v1687
      %v1692 = vand.u32 2147483647, %v1682
      %vm1693 = vcmp.eq.f32.partialorder %v1692, 8.507059e+37
      %v1694 = vand.u32 %v1682, 2147483648
      %v1695 = vor.u32 1.1754944e-38, %v1694
      %v1696 = vsel %vm1693, %v1695, %v1691
      %v1697 = vmul.f32 %v1360, %v1696
      %v1698 = vmul.f32 %v1669, %v1514
      %v1699 = vmul.f32 %v1698, %v1675
      %1701 = vrot.lane.b32.xlu0 %v1682, 8
      %v1702 = vpop.permute.xlu0 %1701
      %v1704 = vrcp.pop %v1702
      %v1705 = vmul.f32 %v1702, %v1704
      %v1706 = vsub.f32 1.0, %v1705
      %v1707 = vmul.f32 %v1704, %v1706
      %v1708 = vadd.f32 %v1704, %v1707
      %vm1709 = vweird.f32 %v1702
      %vm1710 = vweird.f32 %v1704
      %vm1711 = vmor %vm1709, %vm1710
      %v1712 = vsel %vm1711, %v1704, %v1708
      %v1713 = vand.u32 2147483647, %v1702
      %vm1714 = vcmp.eq.f32.partialorder %v1713, 8.507059e+37
      %v1715 = vand.u32 %v1702, 2147483648
      %v1716 = vor.u32 1.1754944e-38, %v1715
      %v1717 = vsel %vm1714, %v1716, %v1712
      %v1718 = vmul.f32 %v1699, %v1717
      %v1719 = vsub.f32 0.0, %v1718
      %vm1720 = vcmask 64512
      %v1721 = vsel %vm1720, %v1697, %v1719
      %1723 = vrot.lane.b32.xlu0 %v1718, 120
      %v1724 = vpop.permute.xlu0 %1723
      %1727 = vrot.lane.b32.xlu0 %v1697, 8
      %v1728 = vpop.permute.xlu0 %1727
      %v1730 = vsel %vm1720, %v1724, %v1728
      %v1732 = vsel %vm1154, %v1092, 0
      %v1735 = vsel %vm1154, %v1096, 0
      %v1738 = vsel %vm1154, %v1721, 0
      %v1741 = vsel %vm1154, %v1730, 0
      %1743 = vmatpush.xpose.msra.mxu0 0.0
      %1744 = vmatpush.xpose.msra.mxu0 0.0
      %1745 = vmatpush.xpose.msra.mxu0 0.0
      %1746 = vmatpush.xpose.msra.mxu0 0.0
      %1747 = vmatpush.xpose.msra.mxu0 0.0
      %1748 = vmatpush.xpose.msra.mxu0 0.0
      %1749 = vmatpush.xpose.msra.mxu0 0.0
      %1750 = vmatpush.xpose.msra.mxu0 0.0
      %1751 = vmatpush.xpose.msra.mxu0 0.0
      %1752 = vmatpush.xpose.msra.mxu0 0.0
      %1753 = vmatpush.xpose.msra.mxu0 0.0
      %1754 = vmatpush.xpose.msra.mxu0 0.0
      %1755 = vmatpush.xpose.msra.mxu0 0.0
      %1756 = vmatpush.xpose.msra.mxu0 0.0
      %v1757 = vand.u32 %v1741, 4294901760
      %1758 = vmatpush.xpose.msra.mxu0 %v1757
      %v1759 = vand.u32 %v1738, 4294901760
      %1760 = vmatpush.xpose.msra.mxu0 %v1759
      %v1761 = vand.u32 %v1732, 4294901760
      %v1762 = vsub.f32 %v1732, %v1761
      %v1763 = vand.u32 %v1762, 4294901760
      %v1764 = vsub.f32 %v1762, %v1763
      %v1765 = vand.u32 %v1764, 4294901760
      %1766 = vmatmul.f32.gmra.mxu0 %v1765
      %v1767 = vpop.f32.mrf.mxu0
      %v1768 = vadd.f32 0.0, %v1767
      %v1769 = vand.u32 %v1735, 4294901760
      %v1770 = vsub.f32 %v1735, %v1769
      %v1771 = vand.u32 %v1770, 4294901760
      %v1772 = vsub.f32 %v1770, %v1771
      %v1773 = vand.u32 %v1772, 4294901760
      %1774 = vmatmul.f32.gmra.mxu0 %v1773
      %v1775 = vpop.f32.mrf.mxu0
      %v1776 = vadd.f32 0.0, %v1775
      %1777 = vdwg.mxu0
      %1778 = vmatpush.xpose.msra.mxu0 0.0
      %1779 = vmatpush.xpose.msra.mxu0 0.0
      %1780 = vmatpush.xpose.msra.mxu0 0.0
      %1781 = vmatpush.xpose.msra.mxu0 0.0
      %1782 = vmatpush.xpose.msra.mxu0 0.0
      %1783 = vmatpush.xpose.msra.mxu0 0.0
      %1784 = vmatpush.xpose.msra.mxu0 0.0
      %1785 = vmatpush.xpose.msra.mxu0 0.0
      %1786 = vmatpush.xpose.msra.mxu0 0.0
      %1787 = vmatpush.xpose.msra.mxu0 0.0
      %1788 = vmatpush.xpose.msra.mxu0 0.0
      %1789 = vmatpush.xpose.msra.mxu0 0.0
      %1790 = vmatpush.xpose.msra.mxu0 0.0
      %1791 = vmatpush.xpose.msra.mxu0 0.0
      %v1792 = vand.u32 %v1741, 4294901760
      %v1793 = vsub.f32 %v1741, %v1792
      %v1794 = vand.u32 %v1793, 4294901760
      %v1795 = vsub.f32 %v1793, %v1794
      %v1796 = vand.u32 %v1795, 4294901760
      %1797 = vmatpush.xpose.msra.mxu0 %v1796
      %v1798 = vand.u32 %v1738, 4294901760
      %v1799 = vsub.f32 %v1738, %v1798
      %v1800 = vand.u32 %v1799, 4294901760
      %v1801 = vsub.f32 %v1799, %v1800
      %v1802 = vand.u32 %v1801, 4294901760
      %1803 = vmatpush.xpose.msra.mxu0 %v1802
      %v1804 = vand.u32 %v1732, 4294901760
      %1805 = vmatmul.f32.gmra.mxu0 %v1804
      %v1806 = vpop.f32.mrf.mxu0
      %v1807 = vadd.f32 %v1768, %v1806
      %v1808 = vand.u32 %v1735, 4294901760
      %1809 = vmatmul.f32.gmra.mxu0 %v1808
      %v1810 = vpop.f32.mrf.mxu0
      %v1811 = vadd.f32 %v1776, %v1810
      %1812 = vdwg.mxu0
      %1813 = vmatpush.xpose.msra.mxu0 0.0
      %1814 = vmatpush.xpose.msra.mxu0 0.0
      %1815 = vmatpush.xpose.msra.mxu0 0.0
      %1816 = vmatpush.xpose.msra.mxu0 0.0
      %1817 = vmatpush.xpose.msra.mxu0 0.0
      %1818 = vmatpush.xpose.msra.mxu0 0.0
      %1819 = vmatpush.xpose.msra.mxu0 0.0
      %1820 = vmatpush.xpose.msra.mxu0 0.0
      %1821 = vmatpush.xpose.msra.mxu0 0.0
      %1822 = vmatpush.xpose.msra.mxu0 0.0
      %1823 = vmatpush.xpose.msra.mxu0 0.0
      %1824 = vmatpush.xpose.msra.mxu0 0.0
      %1825 = vmatpush.xpose.msra.mxu0 0.0
      %1826 = vmatpush.xpose.msra.mxu0 0.0
      %v1827 = vand.u32 %v1741, 4294901760
      %v1828 = vsub.f32 %v1741, %v1827
      %1829 = vmatpush.xpose.msra.mxu0 %v1828
      %v1830 = vand.u32 %v1738, 4294901760
      %v1831 = vsub.f32 %v1738, %v1830
      %1832 = vmatpush.xpose.msra.mxu0 %v1831
      %v1833 = vand.u32 %v1732, 4294901760
      %v1834 = vsub.f32 %v1732, %v1833
      %1835 = vmatmul.f32.gmra.mxu0 %v1834
      %v1836 = vpop.f32.mrf.mxu0
      %v1837 = vadd.f32 %v1807, %v1836
      %v1838 = vand.u32 %v1735, 4294901760
      %v1839 = vsub.f32 %v1735, %v1838
      %1840 = vmatmul.f32.gmra.mxu0 %v1839
      %v1841 = vpop.f32.mrf.mxu0
      %v1842 = vadd.f32 %v1811, %v1841
      %1843 = vdwg.mxu0
      %1844 = vmatpush.xpose.msra.mxu0 0.0
      %1845 = vmatpush.xpose.msra.mxu0 0.0
      %1846 = vmatpush.xpose.msra.mxu0 0.0
      %1847 = vmatpush.xpose.msra.mxu0 0.0
      %1848 = vmatpush.xpose.msra.mxu0 0.0
      %1849 = vmatpush.xpose.msra.mxu0 0.0
      %1850 = vmatpush.xpose.msra.mxu0 0.0
      %1851 = vmatpush.xpose.msra.mxu0 0.0
      %1852 = vmatpush.xpose.msra.mxu0 0.0
      %1853 = vmatpush.xpose.msra.mxu0 0.0
      %1854 = vmatpush.xpose.msra.mxu0 0.0
      %1855 = vmatpush.xpose.msra.mxu0 0.0
      %1856 = vmatpush.xpose.msra.mxu0 0.0
      %1857 = vmatpush.xpose.msra.mxu0 0.0
      %v1858 = vand.u32 %v1741, 4294901760
      %1859 = vmatpush.xpose.msra.mxu0 %v1858
      %v1860 = vand.u32 %v1738, 4294901760
      %1861 = vmatpush.xpose.msra.mxu0 %v1860
      %v1862 = vand.u32 %v1732, 4294901760
      %v1863 = vsub.f32 %v1732, %v1862
      %v1864 = vand.u32 %v1863, 4294901760
      %1865 = vmatmul.f32.gmra.mxu0 %v1864
      %v1866 = vpop.f32.mrf.mxu0
      %v1867 = vadd.f32 %v1837, %v1866
      %v1868 = vand.u32 %v1735, 4294901760
      %v1869 = vsub.f32 %v1735, %v1868
      %v1870 = vand.u32 %v1869, 4294901760
      %1871 = vmatmul.f32.gmra.mxu0 %v1870
      %v1872 = vpop.f32.mrf.mxu0
      %v1873 = vadd.f32 %v1842, %v1872
      %1874 = vdwg.mxu0
      %1875 = vmatpush.xpose.msra.mxu0 0.0
      %1876 = vmatpush.xpose.msra.mxu0 0.0
      %1877 = vmatpush.xpose.msra.mxu0 0.0
      %1878 = vmatpush.xpose.msra.mxu0 0.0
      %1879 = vmatpush.xpose.msra.mxu0 0.0
      %1880 = vmatpush.xpose.msra.mxu0 0.0
      %1881 = vmatpush.xpose.msra.mxu0 0.0
      %1882 = vmatpush.xpose.msra.mxu0 0.0
      %1883 = vmatpush.xpose.msra.mxu0 0.0
      %1884 = vmatpush.xpose.msra.mxu0 0.0
      %1885 = vmatpush.xpose.msra.mxu0 0.0
      %1886 = vmatpush.xpose.msra.mxu0 0.0
      %1887 = vmatpush.xpose.msra.mxu0 0.0
      %1888 = vmatpush.xpose.msra.mxu0 0.0
      %v1889 = vand.u32 %v1741, 4294901760
      %v1890 = vsub.f32 %v1741, %v1889
      %v1891 = vand.u32 %v1890, 4294901760
      %1892 = vmatpush.xpose.msra.mxu0 %v1891
      %v1893 = vand.u32 %v1738, 4294901760
      %v1894 = vsub.f32 %v1738, %v1893
      %v1895 = vand.u32 %v1894, 4294901760
      %1896 = vmatpush.xpose.msra.mxu0 %v1895
      %v1897 = vand.u32 %v1732, 4294901760
      %1898 = vmatmul.f32.gmra.mxu0 %v1897
      %v1899 = vpop.f32.mrf.mxu0
      %v1900 = vadd.f32 %v1867, %v1899
      %v1901 = vand.u32 %v1735, 4294901760
      %1902 = vmatmul.f32.gmra.mxu0 %v1901
      %v1903 = vpop.f32.mrf.mxu0
      %v1904 = vadd.f32 %v1873, %v1903
      %1905 = vdwg.mxu0
      %1906 = vmatpush.xpose.msra.mxu0 0.0
      %1907 = vmatpush.xpose.msra.mxu0 0.0
      %1908 = vmatpush.xpose.msra.mxu0 0.0
      %1909 = vmatpush.xpose.msra.mxu0 0.0
      %1910 = vmatpush.xpose.msra.mxu0 0.0
      %1911 = vmatpush.xpose.msra.mxu0 0.0
      %1912 = vmatpush.xpose.msra.mxu0 0.0
      %1913 = vmatpush.xpose.msra.mxu0 0.0
      %1914 = vmatpush.xpose.msra.mxu0 0.0
      %1915 = vmatpush.xpose.msra.mxu0 0.0
      %1916 = vmatpush.xpose.msra.mxu0 0.0
      %1917 = vmatpush.xpose.msra.mxu0 0.0
      %1918 = vmatpush.xpose.msra.mxu0 0.0
      %1919 = vmatpush.xpose.msra.mxu0 0.0
      %v1920 = vand.u32 %v1741, 4294901760
      %1921 = vmatpush.xpose.msra.mxu0 %v1920
      %v1922 = vand.u32 %v1738, 4294901760
      %1923 = vmatpush.xpose.msra.mxu0 %v1922
      %v1924 = vand.u32 %v1732, 4294901760
      %1925 = vmatmul.f32.gmra.mxu0 %v1924
      %v1926 = vpop.f32.mrf.mxu0
      %v1927 = vadd.f32 %v1900, %v1926
      %v1928 = vand.u32 %v1735, 4294901760
      %1929 = vmatmul.f32.gmra.mxu0 %v1928
      %v1930 = vpop.f32.mrf.mxu0
      %v1931 = vadd.f32 %v1904, %v1930
      %1932 = vdwg.mxu0
      %1933 = vxpose.xlu0.b32.start [1/16] %v670, 128
      %1934 = vxpose.xlu0.b32.cont [2/16] %v674, 128
      %1935 = vxpose.xlu0.b32.cont [3/16] 0.0, 128
      %1936 = vxpose.xlu0.b32.cont [4/16] 0.0, 128
      %1937 = vxpose.xlu0.b32.cont [5/16] 0.0, 128
      %1938 = vxpose.xlu0.b32.cont [6/16] 0.0, 128
      %1939 = vxpose.xlu0.b32.cont [7/16] 0.0, 128
      %1940 = vxpose.xlu0.b32.cont [8/16] 0.0, 128
      %1941 = vxpose.xlu0.b32.cont [9/16] 0.0, 128
      %1942 = vxpose.xlu0.b32.cont [10/16] 0.0, 128
      %1943 = vxpose.xlu0.b32.cont [11/16] 0.0, 128
      %1944 = vxpose.xlu0.b32.cont [12/16] 0.0, 128
      %1945 = vxpose.xlu0.b32.cont [13/16] 0.0, 128
      %1946 = vxpose.xlu0.b32.cont [14/16] 0.0, 128
      %1947 = vxpose.xlu0.b32.cont [15/16] 0.0, 128
      %1948 = vxpose.xlu0.b32.end [16/16] 0.0, 128
      %v1949 = vpop.trf.xlu0
      %v1950 = vpop.trf.xlu0
      %v1951 = vpop.trf.xlu0
      %v1952 = vpop.trf.xlu0
      %v1953 = vpop.trf.xlu0
      %v1954 = vpop.trf.xlu0
      %v1955 = vpop.trf.xlu0
      %v1956 = vpop.trf.xlu0
      %v1957 = vpop.trf.xlu0
      %v1958 = vpop.trf.xlu0
      %v1959 = vpop.trf.xlu0
      %v1960 = vpop.trf.xlu0
      %v1961 = vpop.trf.xlu0
      %v1962 = vpop.trf.xlu0
      %v1963 = vpop.trf.xlu0
      %v1964 = vpop.trf.xlu0
      %v1966 = vsel %vm1154, %v1949, 0
      %v1969 = vsel %vm1154, %v1950, 0
      %1971 = vmatpush.msra.mxu0 0.0
      %1972 = vmatpush.msra.mxu0 0.0
      %1973 = vmatpush.msra.mxu0 0.0
      %1974 = vmatpush.msra.mxu0 0.0
      %1975 = vmatpush.msra.mxu0 0.0
      %1976 = vmatpush.msra.mxu0 0.0
      %1977 = vmatpush.msra.mxu0 0.0
      %1978 = vmatpush.msra.mxu0 0.0
      %1979 = vmatpush.msra.mxu0 0.0
      %1980 = vmatpush.msra.mxu0 0.0
      %1981 = vmatpush.msra.mxu0 0.0
      %1982 = vmatpush.msra.mxu0 0.0
      %1983 = vmatpush.msra.mxu0 0.0
      %1984 = vmatpush.msra.mxu0 0.0
      %v1985 = vand.u32 %v1104, 4294901760
      %1986 = vmatpush.msra.mxu0 %v1985
      %v1987 = vand.u32 %v1100, 4294901760
      %1988 = vmatpush.msra.mxu0 %v1987
      %v1989 = vand.u32 %v1966, 4294901760
      %v1990 = vsub.f32 %v1966, %v1989
      %v1991 = vand.u32 %v1990, 4294901760
      %v1992 = vsub.f32 %v1990, %v1991
      %v1993 = vand.u32 %v1992, 4294901760
      %1994 = vmatmul.f32.gmra.mxu0 %v1993
      %v1995 = vpop.f32.mrf.mxu0
      %v1996 = vadd.f32 0.0, %v1995
      %v1997 = vand.u32 %v1969, 4294901760
      %v1998 = vsub.f32 %v1969, %v1997
      %v1999 = vand.u32 %v1998, 4294901760
      %v2000 = vsub.f32 %v1998, %v1999
      %v2001 = vand.u32 %v2000, 4294901760
      %2002 = vmatmul.f32.gmra.mxu0 %v2001
      %v2003 = vpop.f32.mrf.mxu0
      %v2004 = vadd.f32 0.0, %v2003
      %2005 = vdwg.mxu0
      %2006 = vmatpush.msra.mxu0 0.0
      %2007 = vmatpush.msra.mxu0 0.0
      %2008 = vmatpush.msra.mxu0 0.0
      %2009 = vmatpush.msra.mxu0 0.0
      %2010 = vmatpush.msra.mxu0 0.0
      %2011 = vmatpush.msra.mxu0 0.0
      %2012 = vmatpush.msra.mxu0 0.0
      %2013 = vmatpush.msra.mxu0 0.0
      %2014 = vmatpush.msra.mxu0 0.0
      %2015 = vmatpush.msra.mxu0 0.0
      %2016 = vmatpush.msra.mxu0 0.0
      %2017 = vmatpush.msra.mxu0 0.0
      %2018 = vmatpush.msra.mxu0 0.0
      %2019 = vmatpush.msra.mxu0 0.0
      %v2020 = vand.u32 %v1104, 4294901760
      %v2021 = vsub.f32 %v1104, %v2020
      %v2022 = vand.u32 %v2021, 4294901760
      %v2023 = vsub.f32 %v2021, %v2022
      %v2024 = vand.u32 %v2023, 4294901760
      %2025 = vmatpush.msra.mxu0 %v2024
      %v2026 = vand.u32 %v1100, 4294901760
      %v2027 = vsub.f32 %v1100, %v2026
      %v2028 = vand.u32 %v2027, 4294901760
      %v2029 = vsub.f32 %v2027, %v2028
      %v2030 = vand.u32 %v2029, 4294901760
      %2031 = vmatpush.msra.mxu0 %v2030
      %v2032 = vand.u32 %v1966, 4294901760
      %2033 = vmatmul.f32.gmra.mxu0 %v2032
      %v2034 = vpop.f32.mrf.mxu0
      %v2035 = vadd.f32 %v1996, %v2034
      %v2036 = vand.u32 %v1969, 4294901760
      %2037 = vmatmul.f32.gmra.mxu0 %v2036
      %v2038 = vpop.f32.mrf.mxu0
      %v2039 = vadd.f32 %v2004, %v2038
      %2040 = vdwg.mxu0
      %2041 = vmatpush.msra.mxu0 0.0
      %2042 = vmatpush.msra.mxu0 0.0
      %2043 = vmatpush.msra.mxu0 0.0
      %2044 = vmatpush.msra.mxu0 0.0
      %2045 = vmatpush.msra.mxu0 0.0
      %2046 = vmatpush.msra.mxu0 0.0
      %2047 = vmatpush.msra.mxu0 0.0
      %2048 = vmatpush.msra.mxu0 0.0
      %2049 = vmatpush.msra.mxu0 0.0
      %2050 = vmatpush.msra.mxu0 0.0
      %2051 = vmatpush.msra.mxu0 0.0
      %2052 = vmatpush.msra.mxu0 0.0
      %2053 = vmatpush.msra.mxu0 0.0
      %2054 = vmatpush.msra.mxu0 0.0
      %v2055 = vand.u32 %v1104, 4294901760
      %v2056 = vsub.f32 %v1104, %v2055
      %2057 = vmatpush.msra.mxu0 %v2056
      %v2058 = vand.u32 %v1100, 4294901760
      %v2059 = vsub.f32 %v1100, %v2058
      %2060 = vmatpush.msra.mxu0 %v2059
      %v2061 = vand.u32 %v1966, 4294901760
      %v2062 = vsub.f32 %v1966, %v2061
      %2063 = vmatmul.f32.gmra.mxu0 %v2062
      %v2064 = vpop.f32.mrf.mxu0
      %v2065 = vadd.f32 %v2035, %v2064
      %v2066 = vand.u32 %v1969, 4294901760
      %v2067 = vsub.f32 %v1969, %v2066
      %2068 = vmatmul.f32.gmra.mxu0 %v2067
      %v2069 = vpop.f32.mrf.mxu0
      %v2070 = vadd.f32 %v2039, %v2069
      %2071 = vdwg.mxu0
      %2072 = vmatpush.msra.mxu0 0.0
      %2073 = vmatpush.msra.mxu0 0.0
      %2074 = vmatpush.msra.mxu0 0.0
      %2075 = vmatpush.msra.mxu0 0.0
      %2076 = vmatpush.msra.mxu0 0.0
      %2077 = vmatpush.msra.mxu0 0.0
      %2078 = vmatpush.msra.mxu0 0.0
      %2079 = vmatpush.msra.mxu0 0.0
      %2080 = vmatpush.msra.mxu0 0.0
      %2081 = vmatpush.msra.mxu0 0.0
      %2082 = vmatpush.msra.mxu0 0.0
      %2083 = vmatpush.msra.mxu0 0.0
      %2084 = vmatpush.msra.mxu0 0.0
      %2085 = vmatpush.msra.mxu0 0.0
      %v2086 = vand.u32 %v1104, 4294901760
      %2087 = vmatpush.msra.mxu0 %v2086
      %v2088 = vand.u32 %v1100, 4294901760
      %2089 = vmatpush.msra.mxu0 %v2088
      %v2090 = vand.u32 %v1966, 4294901760
      %v2091 = vsub.f32 %v1966, %v2090
      %v2092 = vand.u32 %v2091, 4294901760
      %2093 = vmatmul.f32.gmra.mxu0 %v2092
      %v2094 = vpop.f32.mrf.mxu0
      %v2095 = vadd.f32 %v2065, %v2094
      %v2096 = vand.u32 %v1969, 4294901760
      %v2097 = vsub.f32 %v1969, %v2096
      %v2098 = vand.u32 %v2097, 4294901760
      %2099 = vmatmul.f32.gmra.mxu0 %v2098
      %v2100 = vpop.f32.mrf.mxu0
      %v2101 = vadd.f32 %v2070, %v2100
      %2102 = vdwg.mxu0
      %2103 = vmatpush.msra.mxu0 0.0
      %2104 = vmatpush.msra.mxu0 0.0
      %2105 = vmatpush.msra.mxu0 0.0
      %2106 = vmatpush.msra.mxu0 0.0
      %2107 = vmatpush.msra.mxu0 0.0
      %2108 = vmatpush.msra.mxu0 0.0
      %2109 = vmatpush.msra.mxu0 0.0
      %2110 = vmatpush.msra.mxu0 0.0
      %2111 = vmatpush.msra.mxu0 0.0
      %2112 = vmatpush.msra.mxu0 0.0
      %2113 = vmatpush.msra.mxu0 0.0
      %2114 = vmatpush.msra.mxu0 0.0
      %2115 = vmatpush.msra.mxu0 0.0
      %2116 = vmatpush.msra.mxu0 0.0
      %v2117 = vand.u32 %v1104, 4294901760
      %v2118 = vsub.f32 %v1104, %v2117
      %v2119 = vand.u32 %v2118, 4294901760
      %2120 = vmatpush.msra.mxu0 %v2119
      %v2121 = vand.u32 %v1100, 4294901760
      %v2122 = vsub.f32 %v1100, %v2121
      %v2123 = vand.u32 %v2122, 4294901760
      %2124 = vmatpush.msra.mxu0 %v2123
      %v2125 = vand.u32 %v1966, 4294901760
      %2126 = vmatmul.f32.gmra.mxu0 %v2125
      %v2127 = vpop.f32.mrf.mxu0
      %v2128 = vadd.f32 %v2095, %v2127
      %v2129 = vand.u32 %v1969, 4294901760
      %2130 = vmatmul.f32.gmra.mxu0 %v2129
      %v2131 = vpop.f32.mrf.mxu0
      %v2132 = vadd.f32 %v2101, %v2131
      %2133 = vdwg.mxu0
      %2134 = vmatpush.msra.mxu0 0.0
      %2135 = vmatpush.msra.mxu0 0.0
      %2136 = vmatpush.msra.mxu0 0.0
      %2137 = vmatpush.msra.mxu0 0.0
      %2138 = vmatpush.msra.mxu0 0.0
      %2139 = vmatpush.msra.mxu0 0.0
      %2140 = vmatpush.msra.mxu0 0.0
      %2141 = vmatpush.msra.mxu0 0.0
      %2142 = vmatpush.msra.mxu0 0.0
      %2143 = vmatpush.msra.mxu0 0.0
      %2144 = vmatpush.msra.mxu0 0.0
      %2145 = vmatpush.msra.mxu0 0.0
      %2146 = vmatpush.msra.mxu0 0.0
      %2147 = vmatpush.msra.mxu0 0.0
      %v2148 = vand.u32 %v1104, 4294901760
      %2149 = vmatpush.msra.mxu0 %v2148
      %v2150 = vand.u32 %v1100, 4294901760
      %2151 = vmatpush.msra.mxu0 %v2150
      %v2152 = vand.u32 %v1966, 4294901760
      %2153 = vmatmul.f32.gmra.mxu0 %v2152
      %v2154 = vpop.f32.mrf.mxu0
      %v2155 = vadd.f32 %v2128, %v2154
      %v2156 = vand.u32 %v1969, 4294901760
      %2157 = vmatmul.f32.gmra.mxu0 %v2156
      %v2158 = vpop.f32.mrf.mxu0
      %v2159 = vadd.f32 %v2132, %v2158
      %2160 = vdwg.mxu0
      %2162 = vrot.lane.b32.xlu0 %v2159, 120
      %v2163 = vpop.permute.xlu0 %2162
      %v2165 = vsub.f32 %v2155, %v2163
      %2166 = vrot.lane.b32.xlu0 %v2159, 8
      %v2167 = vpop.permute.xlu0 %2166
      %v2169 = vadd.f32 %v2155, %v2167
      %v2170 = vtanh.pop %v2165
      %v2171 = vand.u32 2147483647, %v2169
      %vm2172 = vcmp.le.f32.partialorder %v2171, 0.7853982
      %vm2173 = vcmp.lt.s32.totalorder %v2169, 0
      %v2174 = vand.u32 %v2169, 2139095040
      %v2175 = vshrl.u32 %v2174, 23
      %v2176 = vsub.s32 %v2175, 127
      %v2177 = vand.u32 2147483647, %v2169
      %v2178 = vand.u32 %v2177, 8388607
      %v2179 = vor.u32 %v2178, 8388608
      %v2180 = vsub.s32 0, %v2179
      %v2181 = vadd.s32 %v2176, 1
      %vm2182 = vcmp.gt.s32.totalorder %v2181, 0
      %v2183 = vsel %vm2182, %v2181, 0
      %v2184 = vshrl.u32 %v2183, 5
      %v2185 = vand.u32 %v2183, 31
      %v2186 = vsub.s32 32, %v2185
      %v2187 = vshrl.u32 683565275, %v2186
      %v2188 = vshll.u32 683565275, %v2185
      %v2189 = vshrl.u32 2475754826, %v2186
      %v2190 = vor.u32 %v2188, %v2189
      %v2191 = vshll.u32 2475754826, %v2185
      %v2192 = vshrl.u32 2131351028, %v2186
      %v2193 = vor.u32 %v2191, %v2192
      %v2194 = vshll.u32 2131351028, %v2185
      %v2195 = vshrl.u32 2102212464, %v2186
      %v2196 = vor.u32 %v2194, %v2195
      %v2197 = vshll.u32 2102212464, %v2185
      %v2198 = vshrl.u32 920167782, %v2186
      %v2199 = vor.u32 %v2197, %v2198
      %v2200 = vshll.u32 920167782, %v2185
      %v2201 = vshrl.u32 1326507024, %v2186
      %v2202 = vor.u32 %v2200, %v2201
      %vm2203 = vcmp.lt.s32.totalorder %v2184, 1
      %vm2204 = vcmp.lt.s32.totalorder %v2184, 2
      %vm2205 = vcmp.lt.s32.totalorder %v2184, 3
      %vm2206 = vcmp.lt.s32.totalorder %v2184, 4
      %v2207 = vsel %vm2203, %v2187, %v2190
      %v2208 = vsel %vm2206, %v2196, 2102212464
      %v2209 = vsel %vm2205, %v2193, %v2208
      %v2210 = vsel %vm2204, %v2207, %v2209
      %v2211 = vsel %vm2203, %v2190, %v2193
      %v2212 = vsel %vm2206, %v2199, 920167782
      %v2213 = vsel %vm2205, %v2196, %v2212
      %v2214 = vsel %vm2204, %v2211, %v2213
      %v2215 = vsel %vm2203, %v2193, %v2196
      %v2216 = vsel %vm2206, %v2202, 1326507024
      %v2217 = vsel %vm2205, %v2199, %v2216
      %v2218 = vsel %vm2204, %v2215, %v2217
      %v2219 = vshll.u32 %v2179, 8
      %v2220 = vand.u32 %v2219, 65535
      %v2221 = vshrl.u32 %v2219, 16
      %v2222 = vand.u32 %v2218, 65535
      %v2223 = vshrl.u32 %v2218, 16
      %v2224 = vmul.u32 %v2220, %v2222
      %v2225 = vmul.u32 %v2220, %v2223
      %v2226 = vmul.u32 %v2221, %v2222
      %v2227 = vmul.u32 %v2221, %v2223
      %v2228 = vshll.u32 %v2225, 16
      %v2229 = vshrl.u32 %v2225, 16
      %v2230 = vshll.u32 %v2226, 16
      %v2231 = vshrl.u32 %v2226, 16
      %vm2232 = vc.u32 %v2224, %v2228
      %v2233 = vsel %vm2232, 1, 0
      %v2234 = vadd.s32 %v2224, %v2228
      %v2235 = vadd.s32 %v2227, %v2233
      %vm2236 = vc.u32 %v2234, %v2230
      %v2237 = vsel %vm2236, 1, 0
      %v2238 = vadd.s32 %v2234, %v2230
      %v2239 = vadd.s32 %v2235, %v2237
      %v2240 = vadd.s32 %v2239, %v2229
      %v2241 = vadd.s32 %v2240, %v2231
      %v2242 = vand.u32 %v2219, 65535
      %v2243 = vshrl.u32 %v2219, 16
      %v2244 = vand.u32 %v2214, 65535
      %v2245 = vshrl.u32 %v2214, 16
      %v2246 = vmul.u32 %v2242, %v2244
      %v2247 = vmul.u32 %v2242, %v2245
      %v2248 = vmul.u32 %v2243, %v2244
      %v2249 = vmul.u32 %v2243, %v2245
      %v2250 = vshll.u32 %v2247, 16
      %v2251 = vshrl.u32 %v2247, 16
      %v2252 = vshll.u32 %v2248, 16
      %v2253 = vshrl.u32 %v2248, 16
      %vm2254 = vc.u32 %v2246, %v2250
      %v2255 = vsel %vm2254, 1, 0
      %v2256 = vadd.s32 %v2246, %v2250
      %v2257 = vadd.s32 %v2249, %v2255
      %vm2258 = vc.u32 %v2256, %v2252
      %v2259 = vsel %vm2258, 1, 0
      %v2260 = vadd.s32 %v2256, %v2252
      %v2261 = vadd.s32 %v2257, %v2259
      %v2262 = vadd.s32 %v2261, %v2251
      %v2263 = vadd.s32 %v2262, %v2253
      %v2264 = vmul.u32 %v2219, %v2210
      %v2265 = vadd.s32 %v2241, %v2260
      %vm2266 = vc.u32 %v2241, %v2260
      %v2267 = vadd.s32 %v2263, 1
      %v2268 = vsel %vm2266, %v2267, %v2263
      %v2269 = vadd.s32 %v2264, %v2268
      %v2270 = vadd.s32 %v2269, 536870912
      %v2271 = vshrl.u32 %v2270, 30
      %v2272 = vshll.u32 %v2271, 30
      %v2273 = vsub.s32 %v2269, %v2272
      %vm2274 = vcmp.lt.s32.totalorder %v2273, 0
      %v2275 = vsub.s32 0, %v2273
      %v2276 = vsel %vm2274, %v2275, %v2273
      %v2277 = vclz %v2276
      %v2278 = vsub.s32 %v2277, 2
      %vm2279 = vcmp.gt.s32.totalorder 0, %v2278
      %v2280 = vsel %vm2279, 0, %v2278
      %v2281 = vsub.s32 32, %v2280
      %v2282 = vshll.u32 %v2273, %v2280
      %v2283 = vshrl.u32 %v2265, %v2281
      %v2284 = vor.u32 %v2282, %v2283
      %v2285 = vsub.s32 4294967266, %v2280
      %v2286 = vadd.s32 %v2285, 127
      %v2287 = vshll.u32 %v2286, 23
      %v2288 = vor.u32 4788187, %v2287
      %v2289 = vand.u32 2147483647, %v2288
      %v2291 = vcvt.s32.f32 %v2284
      %v2292 = vmul.f32 %v2291, %v2289
      %v2293 = vxor.u32 %v2292, 2147483648
      %v2294 = vsel %vm2173, %v2293, %v2292
      %v2295 = vsub.s32 4, %v2271
      %v2296 = vsel %vm2173, %v2295, %v2271
      %v2297 = vsel %vm2172, %v2169, %v2294
      %v2298 = vsel %vm2172, 0, %v2296
      %v2299 = vmul.f32 %v2297, %v2297
      %v2300 = vmul.f32 %v2299, -0.001358992
      %v2301 = vadd.f32 %v2300, 0.041655596
      %v2302 = vmul.f32 %v2299, %v2301
      %v2303 = vadd.f32 %v2302, -0.4999988
      %v2304 = vmul.f32 %v2299, %v2303
      %v2305 = vadd.f32 1.0, %v2304
      %v2306 = vmul.f32 %v2297, %v2297
      %v2307 = vmul.f32 %v2306, -0.00019511016
      %v2308 = vadd.f32 %v2307, 0.008332121
      %v2309 = vmul.f32 %v2306, %v2308
      %v2310 = vadd.f32 %v2309, -0.16666654
      %v2311 = vmul.f32 %v2306, %v2310
      %v2312 = vadd.f32 %v2311, 1.0
      %v2313 = vmul.f32 %v2312, %v2297
      %vm2314 = vweird.f32 %v2169
      %v2315 = vand.u32 %v2298, 3
      %vm2316 = vcmp.lt.s32.totalorder %v2315, 2
      %vm2317 = vcmp.eq.s32.totalorder %v2315, 0
      %v2318 = vxor.u32 %v2313, 2147483648
      %v2319 = vsel %vm2317, %v2305, %v2318
      %vm2320 = vcmp.eq.s32.totalorder %v2315, 2
      %v2321 = vxor.u32 %v2305, 2147483648
      %v2322 = vsel %vm2320, %v2321, %v2313
      %v2323 = vsel %vm2316, %v2319, %v2322
      %v2324 = vsel %vm2314, nan, %v2323
      %v2325 = vand.u32 2147483647, %v2169
      %vm2326 = vcmp.le.f32.partialorder %v2325, 0.7853982
      %vm2327 = vcmp.lt.s32.totalorder %v2169, 0
      %v2328 = vand.u32 %v2169, 2139095040
      %v2329 = vshrl.u32 %v2328, 23
      %v2330 = vsub.s32 %v2329, 127
      %v2331 = vand.u32 2147483647, %v2169
      %v2332 = vand.u32 %v2331, 8388607
      %v2333 = vor.u32 %v2332, 8388608
      %v2334 = vsub.s32 0, %v2333
      %v2335 = vadd.s32 %v2330, 1
      %vm2336 = vcmp.gt.s32.totalorder %v2335, 0
      %v2337 = vsel %vm2336, %v2335, 0
      %v2338 = vshrl.u32 %v2337, 5
      %v2339 = vand.u32 %v2337, 31
      %v2340 = vsub.s32 32, %v2339
      %v2341 = vshrl.u32 683565275, %v2340
      %v2342 = vshll.u32 683565275, %v2339
      %v2343 = vshrl.u32 2475754826, %v2340
      %v2344 = vor.u32 %v2342, %v2343
      %v2345 = vshll.u32 2475754826, %v2339
      %v2346 = vshrl.u32 2131351028, %v2340
      %v2347 = vor.u32 %v2345, %v2346
      %v2348 = vshll.u32 2131351028, %v2339
      %v2349 = vshrl.u32 2102212464, %v2340
      %v2350 = vor.u32 %v2348, %v2349
      %v2351 = vshll.u32 2102212464, %v2339
      %v2352 = vshrl.u32 920167782, %v2340
      %v2353 = vor.u32 %v2351, %v2352
      %v2354 = vshll.u32 920167782, %v2339
      %v2355 = vshrl.u32 1326507024, %v2340
      %v2356 = vor.u32 %v2354, %v2355
      %vm2357 = vcmp.lt.s32.totalorder %v2338, 1
      %vm2358 = vcmp.lt.s32.totalorder %v2338, 2
      %vm2359 = vcmp.lt.s32.totalorder %v2338, 3
      %vm2360 = vcmp.lt.s32.totalorder %v2338, 4
      %v2361 = vsel %vm2357, %v2341, %v2344
      %v2362 = vsel %vm2360, %v2350, 2102212464
      %v2363 = vsel %vm2359, %v2347, %v2362
      %v2364 = vsel %vm2358, %v2361, %v2363
      %v2365 = vsel %vm2357, %v2344, %v2347
      %v2366 = vsel %vm2360, %v2353, 920167782
      %v2367 = vsel %vm2359, %v2350, %v2366
      %v2368 = vsel %vm2358, %v2365, %v2367
      %v2369 = vsel %vm2357, %v2347, %v2350
      %v2370 = vsel %vm2360, %v2356, 1326507024
      %v2371 = vsel %vm2359, %v2353, %v2370
      %v2372 = vsel %vm2358, %v2369, %v2371
      %v2373 = vshll.u32 %v2333, 8
      %v2374 = vand.u32 %v2373, 65535
      %v2375 = vshrl.u32 %v2373, 16
      %v2376 = vand.u32 %v2372, 65535
      %v2377 = vshrl.u32 %v2372, 16
      %v2378 = vmul.u32 %v2374, %v2376
      %v2379 = vmul.u32 %v2374, %v2377
      %v2380 = vmul.u32 %v2375, %v2376
      %v2381 = vmul.u32 %v2375, %v2377
      %v2382 = vshll.u32 %v2379, 16
      %v2383 = vshrl.u32 %v2379, 16
      %v2384 = vshll.u32 %v2380, 16
      %v2385 = vshrl.u32 %v2380, 16
      %vm2386 = vc.u32 %v2378, %v2382
      %v2387 = vsel %vm2386, 1, 0
      %v2388 = vadd.s32 %v2378, %v2382
      %v2389 = vadd.s32 %v2381, %v2387
      %vm2390 = vc.u32 %v2388, %v2384
      %v2391 = vsel %vm2390, 1, 0
      %v2392 = vadd.s32 %v2388, %v2384
      %v2393 = vadd.s32 %v2389, %v2391
      %v2394 = vadd.s32 %v2393, %v2383
      %v2395 = vadd.s32 %v2394, %v2385
      %v2396 = vand.u32 %v2373, 65535
      %v2397 = vshrl.u32 %v2373, 16
      %v2398 = vand.u32 %v2368, 65535
      %v2399 = vshrl.u32 %v2368, 16
      %v2400 = vmul.u32 %v2396, %v2398
      %v2401 = vmul.u32 %v2396, %v2399
      %v2402 = vmul.u32 %v2397, %v2398
      %v2403 = vmul.u32 %v2397, %v2399
      %v2404 = vshll.u32 %v2401, 16
      %v2405 = vshrl.u32 %v2401, 16
      %v2406 = vshll.u32 %v2402, 16
      %v2407 = vshrl.u32 %v2402, 16
      %vm2408 = vc.u32 %v2400, %v2404
      %v2409 = vsel %vm2408, 1, 0
      %v2410 = vadd.s32 %v2400, %v2404
      %v2411 = vadd.s32 %v2403, %v2409
      %vm2412 = vc.u32 %v2410, %v2406
      %v2413 = vsel %vm2412, 1, 0
      %v2414 = vadd.s32 %v2410, %v2406
      %v2415 = vadd.s32 %v2411, %v2413
      %v2416 = vadd.s32 %v2415, %v2405
      %v2417 = vadd.s32 %v2416, %v2407
      %v2418 = vmul.u32 %v2373, %v2364
      %v2419 = vadd.s32 %v2395, %v2414
      %vm2420 = vc.u32 %v2395, %v2414
      %v2421 = vadd.s32 %v2417, 1
      %v2422 = vsel %vm2420, %v2421, %v2417
      %v2423 = vadd.s32 %v2418, %v2422
      %v2424 = vadd.s32 %v2423, 536870912
      %v2425 = vshrl.u32 %v2424, 30
      %v2426 = vshll.u32 %v2425, 30
      %v2427 = vsub.s32 %v2423, %v2426
      %vm2428 = vcmp.lt.s32.totalorder %v2427, 0
      %v2429 = vsub.s32 0, %v2427
      %v2430 = vsel %vm2428, %v2429, %v2427
      %v2431 = vclz %v2430
      %v2432 = vsub.s32 %v2431, 2
      %vm2433 = vcmp.gt.s32.totalorder 0, %v2432
      %v2434 = vsel %vm2433, 0, %v2432
      %v2435 = vsub.s32 32, %v2434
      %v2436 = vshll.u32 %v2427, %v2434
      %v2437 = vshrl.u32 %v2419, %v2435
      %v2438 = vor.u32 %v2436, %v2437
      %v2439 = vsub.s32 4294967266, %v2434
      %v2440 = vadd.s32 %v2439, 127
      %v2441 = vshll.u32 %v2440, 23
      %v2442 = vor.u32 4788187, %v2441
      %v2443 = vand.u32 2147483647, %v2442
      %v2445 = vcvt.s32.f32 %v2438
      %v2446 = vmul.f32 %v2445, %v2443
      %v2447 = vxor.u32 %v2446, 2147483648
      %v2448 = vsel %vm2327, %v2447, %v2446
      %v2449 = vsub.s32 4, %v2425
      %v2450 = vsel %vm2327, %v2449, %v2425
      %v2451 = vsel %vm2326, %v2169, %v2448
      %v2452 = vsel %vm2326, 0, %v2450
      %v2453 = vmul.f32 %v2451, %v2451
      %v2454 = vmul.f32 %v2453, -0.001358992
      %v2455 = vadd.f32 %v2454, 0.041655596
      %v2456 = vmul.f32 %v2453, %v2455
      %v2457 = vadd.f32 %v2456, -0.4999988
      %v2458 = vmul.f32 %v2453, %v2457
      %v2459 = vadd.f32 1.0, %v2458
      %v2460 = vmul.f32 %v2451, %v2451
      %v2461 = vmul.f32 %v2460, -0.00019511016
      %v2462 = vadd.f32 %v2461, 0.008332121
      %v2463 = vmul.f32 %v2460, %v2462
      %v2464 = vadd.f32 %v2463, -0.16666654
      %v2465 = vmul.f32 %v2460, %v2464
      %v2466 = vadd.f32 %v2465, 1.0
      %v2467 = vmul.f32 %v2466, %v2451
      %vm2468 = vweird.f32 %v2169
      %v2469 = vadd.s32 %v2452, 3
      %v2470 = vand.u32 %v2469, 3
      %vm2471 = vcmp.lt.s32.totalorder %v2470, 2
      %vm2472 = vcmp.eq.s32.totalorder %v2470, 0
      %v2473 = vxor.u32 %v2467, 2147483648
      %v2474 = vsel %vm2472, %v2459, %v2473
      %vm2475 = vcmp.eq.s32.totalorder %v2470, 2
      %v2476 = vxor.u32 %v2459, 2147483648
      %v2477 = vsel %vm2475, %v2476, %v2467
      %v2478 = vsel %vm2471, %v2474, %v2477
      %v2479 = vsel %vm2468, nan, %v2478
      %v2480 = vmul.f32 %v2170, %v2170
      %v2481 = vsub.f32 1.0, %v2480
      %v2482 = vmul.f32 %v2324, %v2324
      %2484 = vrot.lane.b32.xlu0 %v2481, 8
      %v2485 = vpop.permute.xlu0 %2484
      %v2487 = vmul.f32 %v2482, %v2485
      %2489 = vrot.lane.b32.xlu0 %v2487, 120
      %v2490 = vpop.permute.xlu0 %2489
      %v2492 = vadd.f32 %v2480, %v2490
      %v2493 = vrcp.pop %v2492
      %v2494 = vmul.f32 %v2492, %v2493
      %v2495 = vsub.f32 1.0, %v2494
      %v2496 = vmul.f32 %v2493, %v2495
      %v2497 = vadd.f32 %v2493, %v2496
      %vm2498 = vweird.f32 %v2492
      %vm2499 = vweird.f32 %v2493
      %vm2500 = vmor %vm2498, %vm2499
      %v2501 = vsel %vm2500, %v2493, %v2497
      %v2502 = vand.u32 2147483647, %v2492
      %vm2503 = vcmp.eq.f32.partialorder %v2502, 8.507059e+37
      %v2504 = vand.u32 %v2492, 2147483648
      %v2505 = vor.u32 1.1754944e-38, %v2504
      %v2506 = vsel %vm2503, %v2505, %v2501
      %v2507 = vmul.f32 %v2170, %v2506
      %v2508 = vmul.f32 %v2479, %v2324
      %v2509 = vmul.f32 %v2508, %v2485
      %2511 = vrot.lane.b32.xlu0 %v2492, 8
      %v2512 = vpop.permute.xlu0 %2511
      %v2514 = vrcp.pop %v2512
      %v2515 = vmul.f32 %v2512, %v2514
      %v2516 = vsub.f32 1.0, %v2515
      %v2517 = vmul.f32 %v2514, %v2516
      %v2518 = vadd.f32 %v2514, %v2517
      %vm2519 = vweird.f32 %v2512
      %vm2520 = vweird.f32 %v2514
      %vm2521 = vmor %vm2519, %vm2520
      %v2522 = vsel %vm2521, %v2514, %v2518
      %v2523 = vand.u32 2147483647, %v2512
      %vm2524 = vcmp.eq.f32.partialorder %v2523, 8.507059e+37
      %v2525 = vand.u32 %v2512, 2147483648
      %v2526 = vor.u32 1.1754944e-38, %v2525
      %v2527 = vsel %vm2524, %v2526, %v2522
      %v2528 = vmul.f32 %v2509, %v2527
      %v2529 = vsub.f32 0.0, %v2528
      %v2530 = vsel %vm1720, %v2507, %v2529
      %2532 = vrot.lane.b32.xlu0 %v2528, 120
      %v2533 = vpop.permute.xlu0 %2532
      %2536 = vrot.lane.b32.xlu0 %v2507, 8
      %v2537 = vpop.permute.xlu0 %2536
      %v2539 = vsel %vm1720, %v2533, %v2537
      %v2541 = vsel %vm1154, %v1100, 0
      %v2544 = vsel %vm1154, %v1104, 0
      %v2547 = vsel %vm1154, %v2530, 0
      %v2550 = vsel %vm1154, %v2539, 0
      %2552 = vmatpush.xpose.msra.mxu0 0.0
      %2553 = vmatpush.xpose.msra.mxu0 0.0
      %2554 = vmatpush.xpose.msra.mxu0 0.0
      %2555 = vmatpush.xpose.msra.mxu0 0.0
      %2556 = vmatpush.xpose.msra.mxu0 0.0
      %2557 = vmatpush.xpose.msra.mxu0 0.0
      %2558 = vmatpush.xpose.msra.mxu0 0.0
      %2559 = vmatpush.xpose.msra.mxu0 0.0
      %2560 = vmatpush.xpose.msra.mxu0 0.0
      %2561 = vmatpush.xpose.msra.mxu0 0.0
      %2562 = vmatpush.xpose.msra.mxu0 0.0
      %2563 = vmatpush.xpose.msra.mxu0 0.0
      %2564 = vmatpush.xpose.msra.mxu0 0.0
      %2565 = vmatpush.xpose.msra.mxu0 0.0
      %v2566 = vand.u32 %v2550, 4294901760
      %2567 = vmatpush.xpose.msra.mxu0 %v2566
      %v2568 = vand.u32 %v2547, 4294901760
      %2569 = vmatpush.xpose.msra.mxu0 %v2568
      %v2570 = vand.u32 %v2541, 4294901760
      %v2571 = vsub.f32 %v2541, %v2570
      %v2572 = vand.u32 %v2571, 4294901760
      %v2573 = vsub.f32 %v2571, %v2572
      %v2574 = vand.u32 %v2573, 4294901760
      %2575 = vmatmul.f32.gmra.mxu0 %v2574
      %v2576 = vpop.f32.mrf.mxu0
      %v2577 = vadd.f32 0.0, %v2576
      %v2578 = vand.u32 %v2544, 4294901760
      %v2579 = vsub.f32 %v2544, %v2578
      %v2580 = vand.u32 %v2579, 4294901760
      %v2581 = vsub.f32 %v2579, %v2580
      %v2582 = vand.u32 %v2581, 4294901760
      %2583 = vmatmul.f32.gmra.mxu0 %v2582
      %v2584 = vpop.f32.mrf.mxu0
      %v2585 = vadd.f32 0.0, %v2584
      %2586 = vdwg.mxu0
      %2587 = vmatpush.xpose.msra.mxu0 0.0
      %2588 = vmatpush.xpose.msra.mxu0 0.0
      %2589 = vmatpush.xpose.msra.mxu0 0.0
      %2590 = vmatpush.xpose.msra.mxu0 0.0
      %2591 = vmatpush.xpose.msra.mxu0 0.0
      %2592 = vmatpush.xpose.msra.mxu0 0.0
      %2593 = vmatpush.xpose.msra.mxu0 0.0
      %2594 = vmatpush.xpose.msra.mxu0 0.0
      %2595 = vmatpush.xpose.msra.mxu0 0.0
      %2596 = vmatpush.xpose.msra.mxu0 0.0
      %2597 = vmatpush.xpose.msra.mxu0 0.0
      %2598 = vmatpush.xpose.msra.mxu0 0.0
      %2599 = vmatpush.xpose.msra.mxu0 0.0
      %2600 = vmatpush.xpose.msra.mxu0 0.0
      %v2601 = vand.u32 %v2550, 4294901760
      %v2602 = vsub.f32 %v2550, %v2601
      %v2603 = vand.u32 %v2602, 4294901760
      %v2604 = vsub.f32 %v2602, %v2603
      %v2605 = vand.u32 %v2604, 4294901760
      %2606 = vmatpush.xpose.msra.mxu0 %v2605
      %v2607 = vand.u32 %v2547, 4294901760
      %v2608 = vsub.f32 %v2547, %v2607
      %v2609 = vand.u32 %v2608, 4294901760
      %v2610 = vsub.f32 %v2608, %v2609
      %v2611 = vand.u32 %v2610, 4294901760
      %2612 = vmatpush.xpose.msra.mxu0 %v2611
      %v2613 = vand.u32 %v2541, 4294901760
      %2614 = vmatmul.f32.gmra.mxu0 %v2613
      %v2615 = vpop.f32.mrf.mxu0
      %v2616 = vadd.f32 %v2577, %v2615
      %v2617 = vand.u32 %v2544, 4294901760
      %2618 = vmatmul.f32.gmra.mxu0 %v2617
      %v2619 = vpop.f32.mrf.mxu0
      %v2620 = vadd.f32 %v2585, %v2619
      %2621 = vdwg.mxu0
      %2622 = vmatpush.xpose.msra.mxu0 0.0
      %2623 = vmatpush.xpose.msra.mxu0 0.0
      %2624 = vmatpush.xpose.msra.mxu0 0.0
      %2625 = vmatpush.xpose.msra.mxu0 0.0
      %2626 = vmatpush.xpose.msra.mxu0 0.0
      %2627 = vmatpush.xpose.msra.mxu0 0.0
      %2628 = vmatpush.xpose.msra.mxu0 0.0
      %2629 = vmatpush.xpose.msra.mxu0 0.0
      %2630 = vmatpush.xpose.msra.mxu0 0.0
      %2631 = vmatpush.xpose.msra.mxu0 0.0
      %2632 = vmatpush.xpose.msra.mxu0 0.0
      %2633 = vmatpush.xpose.msra.mxu0 0.0
      %2634 = vmatpush.xpose.msra.mxu0 0.0
      %2635 = vmatpush.xpose.msra.mxu0 0.0
      %v2636 = vand.u32 %v2550, 4294901760
      %v2637 = vsub.f32 %v2550, %v2636
      %2638 = vmatpush.xpose.msra.mxu0 %v2637
      %v2639 = vand.u32 %v2547, 4294901760
      %v2640 = vsub.f32 %v2547, %v2639
      %2641 = vmatpush.xpose.msra.mxu0 %v2640
      %v2642 = vand.u32 %v2541, 4294901760
      %v2643 = vsub.f32 %v2541, %v2642
      %2644 = vmatmul.f32.gmra.mxu0 %v2643
      %v2645 = vpop.f32.mrf.mxu0
      %v2646 = vadd.f32 %v2616, %v2645
      %v2647 = vand.u32 %v2544, 4294901760
      %v2648 = vsub.f32 %v2544, %v2647
      %2649 = vmatmul.f32.gmra.mxu0 %v2648
      %v2650 = vpop.f32.mrf.mxu0
      %v2651 = vadd.f32 %v2620, %v2650
      %2652 = vdwg.mxu0
      %2653 = vmatpush.xpose.msra.mxu0 0.0
      %2654 = vmatpush.xpose.msra.mxu0 0.0
      %2655 = vmatpush.xpose.msra.mxu0 0.0
      %2656 = vmatpush.xpose.msra.mxu0 0.0
      %2657 = vmatpush.xpose.msra.mxu0 0.0
      %2658 = vmatpush.xpose.msra.mxu0 0.0
      %2659 = vmatpush.xpose.msra.mxu0 0.0
      %2660 = vmatpush.xpose.msra.mxu0 0.0
      %2661 = vmatpush.xpose.msra.mxu0 0.0
      %2662 = vmatpush.xpose.msra.mxu0 0.0
      %2663 = vmatpush.xpose.msra.mxu0 0.0
      %2664 = vmatpush.xpose.msra.mxu0 0.0
      %2665 = vmatpush.xpose.msra.mxu0 0.0
      %2666 = vmatpush.xpose.msra.mxu0 0.0
      %v2667 = vand.u32 %v2550, 4294901760
      %2668 = vmatpush.xpose.msra.mxu0 %v2667
      %v2669 = vand.u32 %v2547, 4294901760
      %2670 = vmatpush.xpose.msra.mxu0 %v2669
      %v2671 = vand.u32 %v2541, 4294901760
      %v2672 = vsub.f32 %v2541, %v2671
      %v2673 = vand.u32 %v2672, 4294901760
      %2674 = vmatmul.f32.gmra.mxu0 %v2673
      %v2675 = vpop.f32.mrf.mxu0
      %v2676 = vadd.f32 %v2646, %v2675
      %v2677 = vand.u32 %v2544, 4294901760
      %v2678 = vsub.f32 %v2544, %v2677
      %v2679 = vand.u32 %v2678, 4294901760
      %2680 = vmatmul.f32.gmra.mxu0 %v2679
      %v2681 = vpop.f32.mrf.mxu0
      %v2682 = vadd.f32 %v2651, %v2681
      %2683 = vdwg.mxu0
      %2684 = vmatpush.xpose.msra.mxu0 0.0
      %2685 = vmatpush.xpose.msra.mxu0 0.0
      %2686 = vmatpush.xpose.msra.mxu0 0.0
      %2687 = vmatpush.xpose.msra.mxu0 0.0
      %2688 = vmatpush.xpose.msra.mxu0 0.0
      %2689 = vmatpush.xpose.msra.mxu0 0.0
      %2690 = vmatpush.xpose.msra.mxu0 0.0
      %2691 = vmatpush.xpose.msra.mxu0 0.0
      %2692 = vmatpush.xpose.msra.mxu0 0.0
      %2693 = vmatpush.xpose.msra.mxu0 0.0
      %2694 = vmatpush.xpose.msra.mxu0 0.0
      %2695 = vmatpush.xpose.msra.mxu0 0.0
      %2696 = vmatpush.xpose.msra.mxu0 0.0
      %2697 = vmatpush.xpose.msra.mxu0 0.0
      %v2698 = vand.u32 %v2550, 4294901760
      %v2699 = vsub.f32 %v2550, %v2698
      %v2700 = vand.u32 %v2699, 4294901760
      %2701 = vmatpush.xpose.msra.mxu0 %v2700
      %v2702 = vand.u32 %v2547, 4294901760
      %v2703 = vsub.f32 %v2547, %v2702
      %v2704 = vand.u32 %v2703, 4294901760
      %2705 = vmatpush.xpose.msra.mxu0 %v2704
      %v2706 = vand.u32 %v2541, 4294901760
      %2707 = vmatmul.f32.gmra.mxu0 %v2706
      %v2708 = vpop.f32.mrf.mxu0
      %v2709 = vadd.f32 %v2676, %v2708
      %v2710 = vand.u32 %v2544, 4294901760
      %2711 = vmatmul.f32.gmra.mxu0 %v2710
      %v2712 = vpop.f32.mrf.mxu0
      %v2713 = vadd.f32 %v2682, %v2712
      %2714 = vdwg.mxu0
      %2715 = vmatpush.xpose.msra.mxu0 0.0
      %2716 = vmatpush.xpose.msra.mxu0 0.0
      %2717 = vmatpush.xpose.msra.mxu0 0.0
      %2718 = vmatpush.xpose.msra.mxu0 0.0
      %2719 = vmatpush.xpose.msra.mxu0 0.0
      %2720 = vmatpush.xpose.msra.mxu0 0.0
      %2721 = vmatpush.xpose.msra.mxu0 0.0
      %2722 = vmatpush.xpose.msra.mxu0 0.0
      %2723 = vmatpush.xpose.msra.mxu0 0.0
      %2724 = vmatpush.xpose.msra.mxu0 0.0
      %2725 = vmatpush.xpose.msra.mxu0 0.0
      %2726 = vmatpush.xpose.msra.mxu0 0.0
      %2727 = vmatpush.xpose.msra.mxu0 0.0
      %2728 = vmatpush.xpose.msra.mxu0 0.0
      %v2729 = vand.u32 %v2550, 4294901760
      %2730 = vmatpush.xpose.msra.mxu0 %v2729
      %v2731 = vand.u32 %v2547, 4294901760
      %2732 = vmatpush.xpose.msra.mxu0 %v2731
      %v2733 = vand.u32 %v2541, 4294901760
      %2734 = vmatmul.f32.gmra.mxu0 %v2733
      %v2735 = vpop.f32.mrf.mxu0
      %v2736 = vadd.f32 %v2709, %v2735
      %v2737 = vand.u32 %v2544, 4294901760
      %2738 = vmatmul.f32.gmra.mxu0 %v2737
      %v2739 = vpop.f32.mrf.mxu0
      %v2740 = vadd.f32 %v2713, %v2739
      %2741 = vdwg.mxu0
      %2742 = vxpose.xlu0.b32.start [1/16] %v678, 128
      %2743 = vxpose.xlu0.b32.cont [2/16] %v682, 128
      %2744 = vxpose.xlu0.b32.cont [3/16] 0.0, 128
      %2745 = vxpose.xlu0.b32.cont [4/16] 0.0, 128
      %2746 = vxpose.xlu0.b32.cont [5/16] 0.0, 128
      %2747 = vxpose.xlu0.b32.cont [6/16] 0.0, 128
      %2748 = vxpose.xlu0.b32.cont [7/16] 0.0, 128
      %2749 = vxpose.xlu0.b32.cont [8/16] 0.0, 128
      %2750 = vxpose.xlu0.b32.cont [9/16] 0.0, 128
      %2751 = vxpose.xlu0.b32.cont [10/16] 0.0, 128
      %2752 = vxpose.xlu0.b32.cont [11/16] 0.0, 128
      %2753 = vxpose.xlu0.b32.cont [12/16] 0.0, 128
      %2754 = vxpose.xlu0.b32.cont [13/16] 0.0, 128
      %2755 = vxpose.xlu0.b32.cont [14/16] 0.0, 128
      %2756 = vxpose.xlu0.b32.cont [15/16] 0.0, 128
      %2757 = vxpose.xlu0.b32.end [16/16] 0.0, 128
      %v2758 = vpop.trf.xlu0
      %v2759 = vpop.trf.xlu0
      %v2760 = vpop.trf.xlu0
      %v2761 = vpop.trf.xlu0
      %v2762 = vpop.trf.xlu0
      %v2763 = vpop.trf.xlu0
      %v2764 = vpop.trf.xlu0
      %v2765 = vpop.trf.xlu0
      %v2766 = vpop.trf.xlu0
      %v2767 = vpop.trf.xlu0
      %v2768 = vpop.trf.xlu0
      %v2769 = vpop.trf.xlu0
      %v2770 = vpop.trf.xlu0
      %v2771 = vpop.trf.xlu0
      %v2772 = vpop.trf.xlu0
      %v2773 = vpop.trf.xlu0
      %v2775 = vsel %vm1154, %v2758, 0
      %v2778 = vsel %vm1154, %v2759, 0
      %2780 = vmatpush.msra.mxu0 0.0
      %2781 = vmatpush.msra.mxu0 0.0
      %2782 = vmatpush.msra.mxu0 0.0
      %2783 = vmatpush.msra.mxu0 0.0
      %2784 = vmatpush.msra.mxu0 0.0
      %2785 = vmatpush.msra.mxu0 0.0
      %2786 = vmatpush.msra.mxu0 0.0
      %2787 = vmatpush.msra.mxu0 0.0
      %2788 = vmatpush.msra.mxu0 0.0
      %2789 = vmatpush.msra.mxu0 0.0
      %2790 = vmatpush.msra.mxu0 0.0
      %2791 = vmatpush.msra.mxu0 0.0
      %2792 = vmatpush.msra.mxu0 0.0
      %2793 = vmatpush.msra.mxu0 0.0
      %v2794 = vand.u32 %v1112, 4294901760
      %2795 = vmatpush.msra.mxu0 %v2794
      %v2796 = vand.u32 %v1108, 4294901760
      %2797 = vmatpush.msra.mxu0 %v2796
      %v2798 = vand.u32 %v2775, 4294901760
      %v2799 = vsub.f32 %v2775, %v2798
      %v2800 = vand.u32 %v2799, 4294901760
      %v2801 = vsub.f32 %v2799, %v2800
      %v2802 = vand.u32 %v2801, 4294901760
      %2803 = vmatmul.f32.gmra.mxu0 %v2802
      %v2804 = vpop.f32.mrf.mxu0
      %v2805 = vadd.f32 0.0, %v2804
      %v2806 = vand.u32 %v2778, 4294901760
      %v2807 = vsub.f32 %v2778, %v2806
      %v2808 = vand.u32 %v2807, 4294901760
      %v2809 = vsub.f32 %v2807, %v2808
      %v2810 = vand.u32 %v2809, 4294901760
      %2811 = vmatmul.f32.gmra.mxu0 %v2810
      %v2812 = vpop.f32.mrf.mxu0
      %v2813 = vadd.f32 0.0, %v2812
      %2814 = vdwg.mxu0
      %2815 = vmatpush.msra.mxu0 0.0
      %2816 = vmatpush.msra.mxu0 0.0
      %2817 = vmatpush.msra.mxu0 0.0
      %2818 = vmatpush.msra.mxu0 0.0
      %2819 = vmatpush.msra.mxu0 0.0
      %2820 = vmatpush.msra.mxu0 0.0
      %2821 = vmatpush.msra.mxu0 0.0
      %2822 = vmatpush.msra.mxu0 0.0
      %2823 = vmatpush.msra.mxu0 0.0
      %2824 = vmatpush.msra.mxu0 0.0
      %2825 = vmatpush.msra.mxu0 0.0
      %2826 = vmatpush.msra.mxu0 0.0
      %2827 = vmatpush.msra.mxu0 0.0
      %2828 = vmatpush.msra.mxu0 0.0
      %v2829 = vand.u32 %v1112, 4294901760
      %v2830 = vsub.f32 %v1112, %v2829
      %v2831 = vand.u32 %v2830, 4294901760
      %v2832 = vsub.f32 %v2830, %v2831
      %v2833 = vand.u32 %v2832, 4294901760
      %2834 = vmatpush.msra.mxu0 %v2833
      %v2835 = vand.u32 %v1108, 4294901760
      %v2836 = vsub.f32 %v1108, %v2835
      %v2837 = vand.u32 %v2836, 4294901760
      %v2838 = vsub.f32 %v2836, %v2837
      %v2839 = vand.u32 %v2838, 4294901760
      %2840 = vmatpush.msra.mxu0 %v2839
      %v2841 = vand.u32 %v2775, 4294901760
      %2842 = vmatmul.f32.gmra.mxu0 %v2841
      %v2843 = vpop.f32.mrf.mxu0
      %v2844 = vadd.f32 %v2805, %v2843
      %v2845 = vand.u32 %v2778, 4294901760
      %2846 = vmatmul.f32.gmra.mxu0 %v2845
      %v2847 = vpop.f32.mrf.mxu0
      %v2848 = vadd.f32 %v2813, %v2847
      %2849 = vdwg.mxu0
      %2850 = vmatpush.msra.mxu0 0.0
      %2851 = vmatpush.msra.mxu0 0.0
      %2852 = vmatpush.msra.mxu0 0.0
      %2853 = vmatpush.msra.mxu0 0.0
      %2854 = vmatpush.msra.mxu0 0.0
      %2855 = vmatpush.msra.mxu0 0.0
      %2856 = vmatpush.msra.mxu0 0.0
      %2857 = vmatpush.msra.mxu0 0.0
      %2858 = vmatpush.msra.mxu0 0.0
      %2859 = vmatpush.msra.mxu0 0.0
      %2860 = vmatpush.msra.mxu0 0.0
      %2861 = vmatpush.msra.mxu0 0.0
      %2862 = vmatpush.msra.mxu0 0.0
      %2863 = vmatpush.msra.mxu0 0.0
      %v2864 = vand.u32 %v1112, 4294901760
      %v2865 = vsub.f32 %v1112, %v2864
      %2866 = vmatpush.msra.mxu0 %v2865
      %v2867 = vand.u32 %v1108, 4294901760
      %v2868 = vsub.f32 %v1108, %v2867
      %2869 = vmatpush.msra.mxu0 %v2868
      %v2870 = vand.u32 %v2775, 4294901760
      %v2871 = vsub.f32 %v2775, %v2870
      %2872 = vmatmul.f32.gmra.mxu0 %v2871
      %v2873 = vpop.f32.mrf.mxu0
      %v2874 = vadd.f32 %v2844, %v2873
      %v2875 = vand.u32 %v2778, 4294901760
      %v2876 = vsub.f32 %v2778, %v2875
      %2877 = vmatmul.f32.gmra.mxu0 %v2876
      %v2878 = vpop.f32.mrf.mxu0
      %v2879 = vadd.f32 %v2848, %v2878
      %2880 = vdwg.mxu0
      %2881 = vmatpush.msra.mxu0 0.0
      %2882 = vmatpush.msra.mxu0 0.0
      %2883 = vmatpush.msra.mxu0 0.0
      %2884 = vmatpush.msra.mxu0 0.0
      %2885 = vmatpush.msra.mxu0 0.0
      %2886 = vmatpush.msra.mxu0 0.0
      %2887 = vmatpush.msra.mxu0 0.0
      %2888 = vmatpush.msra.mxu0 0.0
      %2889 = vmatpush.msra.mxu0 0.0
      %2890 = vmatpush.msra.mxu0 0.0
      %2891 = vmatpush.msra.mxu0 0.0
      %2892 = vmatpush.msra.mxu0 0.0
      %2893 = vmatpush.msra.mxu0 0.0
      %2894 = vmatpush.msra.mxu0 0.0
      %v2895 = vand.u32 %v1112, 4294901760
      %2896 = vmatpush.msra.mxu0 %v2895
      %v2897 = vand.u32 %v1108, 4294901760
      %2898 = vmatpush.msra.mxu0 %v2897
      %v2899 = vand.u32 %v2775, 4294901760
      %v2900 = vsub.f32 %v2775, %v2899
      %v2901 = vand.u32 %v2900, 4294901760
      %2902 = vmatmul.f32.gmra.mxu0 %v2901
      %v2903 = vpop.f32.mrf.mxu0
      %v2904 = vadd.f32 %v2874, %v2903
      %v2905 = vand.u32 %v2778, 4294901760
      %v2906 = vsub.f32 %v2778, %v2905
      %v2907 = vand.u32 %v2906, 4294901760
      %2908 = vmatmul.f32.gmra.mxu0 %v2907
      %v2909 = vpop.f32.mrf.mxu0
      %v2910 = vadd.f32 %v2879, %v2909
      %2911 = vdwg.mxu0
      %2912 = vmatpush.msra.mxu0 0.0
      %2913 = vmatpush.msra.mxu0 0.0
      %2914 = vmatpush.msra.mxu0 0.0
      %2915 = vmatpush.msra.mxu0 0.0
      %2916 = vmatpush.msra.mxu0 0.0
      %2917 = vmatpush.msra.mxu0 0.0
      %2918 = vmatpush.msra.mxu0 0.0
      %2919 = vmatpush.msra.mxu0 0.0
      %2920 = vmatpush.msra.mxu0 0.0
      %2921 = vmatpush.msra.mxu0 0.0
      %2922 = vmatpush.msra.mxu0 0.0
      %2923 = vmatpush.msra.mxu0 0.0
      %2924 = vmatpush.msra.mxu0 0.0
      %2925 = vmatpush.msra.mxu0 0.0
      %v2926 = vand.u32 %v1112, 4294901760
      %v2927 = vsub.f32 %v1112, %v2926
      %v2928 = vand.u32 %v2927, 4294901760
      %2929 = vmatpush.msra.mxu0 %v2928
      %v2930 = vand.u32 %v1108, 4294901760
      %v2931 = vsub.f32 %v1108, %v2930
      %v2932 = vand.u32 %v2931, 4294901760
      %2933 = vmatpush.msra.mxu0 %v2932
      %v2934 = vand.u32 %v2775, 4294901760
      %2935 = vmatmul.f32.gmra.mxu0 %v2934
      %v2936 = vpop.f32.mrf.mxu0
      %v2937 = vadd.f32 %v2904, %v2936
      %v2938 = vand.u32 %v2778, 4294901760
      %2939 = vmatmul.f32.gmra.mxu0 %v2938
      %v2940 = vpop.f32.mrf.mxu0
      %v2941 = vadd.f32 %v2910, %v2940
      %2942 = vdwg.mxu0
      %2943 = vmatpush.msra.mxu0 0.0
      %2944 = vmatpush.msra.mxu0 0.0
      %2945 = vmatpush.msra.mxu0 0.0
      %2946 = vmatpush.msra.mxu0 0.0
      %2947 = vmatpush.msra.mxu0 0.0
      %2948 = vmatpush.msra.mxu0 0.0
      %2949 = vmatpush.msra.mxu0 0.0
      %2950 = vmatpush.msra.mxu0 0.0
      %2951 = vmatpush.msra.mxu0 0.0
      %2952 = vmatpush.msra.mxu0 0.0
      %2953 = vmatpush.msra.mxu0 0.0
      %2954 = vmatpush.msra.mxu0 0.0
      %2955 = vmatpush.msra.mxu0 0.0
      %2956 = vmatpush.msra.mxu0 0.0
      %v2957 = vand.u32 %v1112, 4294901760
      %2958 = vmatpush.msra.mxu0 %v2957
      %v2959 = vand.u32 %v1108, 4294901760
      %2960 = vmatpush.msra.mxu0 %v2959
      %v2961 = vand.u32 %v2775, 4294901760
      %2962 = vmatmul.f32.gmra.mxu0 %v2961
      %v2963 = vpop.f32.mrf.mxu0
      %v2964 = vadd.f32 %v2937, %v2963
      %v2965 = vand.u32 %v2778, 4294901760
      %2966 = vmatmul.f32.gmra.mxu0 %v2965
      %v2967 = vpop.f32.mrf.mxu0
      %v2968 = vadd.f32 %v2941, %v2967
      %2969 = vdwg.mxu0
      %2971 = vrot.lane.b32.xlu0 %v2968, 120
      %v2972 = vpop.permute.xlu0 %2971
      %v2974 = vsub.f32 %v2964, %v2972
      %2975 = vrot.lane.b32.xlu0 %v2968, 8
      %v2976 = vpop.permute.xlu0 %2975
      %v2978 = vadd.f32 %v2964, %v2976
      %v2979 = vtanh.pop %v2974
      %v2980 = vand.u32 2147483647, %v2978
      %vm2981 = vcmp.le.f32.partialorder %v2980, 0.7853982
      %vm2982 = vcmp.lt.s32.totalorder %v2978, 0
      %v2983 = vand.u32 %v2978, 2139095040
      %v2984 = vshrl.u32 %v2983, 23
      %v2985 = vsub.s32 %v2984, 127
      %v2986 = vand.u32 2147483647, %v2978
      %v2987 = vand.u32 %v2986, 8388607
      %v2988 = vor.u32 %v2987, 8388608
      %v2989 = vsub.s32 0, %v2988
      %v2990 = vadd.s32 %v2985, 1
      %vm2991 = vcmp.gt.s32.totalorder %v2990, 0
      %v2992 = vsel %vm2991, %v2990, 0
      %v2993 = vshrl.u32 %v2992, 5
      %v2994 = vand.u32 %v2992, 31
      %v2995 = vsub.s32 32, %v2994
      %v2996 = vshrl.u32 683565275, %v2995
      %v2997 = vshll.u32 683565275, %v2994
      %v2998 = vshrl.u32 2475754826, %v2995
      %v2999 = vor.u32 %v2997, %v2998
      %v3000 = vshll.u32 2475754826, %v2994
      %v3001 = vshrl.u32 2131351028, %v2995
      %v3002 = vor.u32 %v3000, %v3001
      %v3003 = vshll.u32 2131351028, %v2994
      %v3004 = vshrl.u32 2102212464, %v2995
      %v3005 = vor.u32 %v3003, %v3004
      %v3006 = vshll.u32 2102212464, %v2994
      %v3007 = vshrl.u32 920167782, %v2995
      %v3008 = vor.u32 %v3006, %v3007
      %v3009 = vshll.u32 920167782, %v2994
      %v3010 = vshrl.u32 1326507024, %v2995
      %v3011 = vor.u32 %v3009, %v3010
      %vm3012 = vcmp.lt.s32.totalorder %v2993, 1
      %vm3013 = vcmp.lt.s32.totalorder %v2993, 2
      %vm3014 = vcmp.lt.s32.totalorder %v2993, 3
      %vm3015 = vcmp.lt.s32.totalorder %v2993, 4
      %v3016 = vsel %vm3012, %v2996, %v2999
      %v3017 = vsel %vm3015, %v3005, 2102212464
      %v3018 = vsel %vm3014, %v3002, %v3017
      %v3019 = vsel %vm3013, %v3016, %v3018
      %v3020 = vsel %vm3012, %v2999, %v3002
      %v3021 = vsel %vm3015, %v3008, 920167782
      %v3022 = vsel %vm3014, %v3005, %v3021
      %v3023 = vsel %vm3013, %v3020, %v3022
      %v3024 = vsel %vm3012, %v3002, %v3005
      %v3025 = vsel %vm3015, %v3011, 1326507024
      %v3026 = vsel %vm3014, %v3008, %v3025
      %v3027 = vsel %vm3013, %v3024, %v3026
      %v3028 = vshll.u32 %v2988, 8
      %v3029 = vand.u32 %v3028, 65535
      %v3030 = vshrl.u32 %v3028, 16
      %v3031 = vand.u32 %v3027, 65535
      %v3032 = vshrl.u32 %v3027, 16
      %v3033 = vmul.u32 %v3029, %v3031
      %v3034 = vmul.u32 %v3029, %v3032
      %v3035 = vmul.u32 %v3030, %v3031
      %v3036 = vmul.u32 %v3030, %v3032
      %v3037 = vshll.u32 %v3034, 16
      %v3038 = vshrl.u32 %v3034, 16
      %v3039 = vshll.u32 %v3035, 16
      %v3040 = vshrl.u32 %v3035, 16
      %vm3041 = vc.u32 %v3033, %v3037
      %v3042 = vsel %vm3041, 1, 0
      %v3043 = vadd.s32 %v3033, %v3037
      %v3044 = vadd.s32 %v3036, %v3042
      %vm3045 = vc.u32 %v3043, %v3039
      %v3046 = vsel %vm3045, 1, 0
      %v3047 = vadd.s32 %v3043, %v3039
      %v3048 = vadd.s32 %v3044, %v3046
      %v3049 = vadd.s32 %v3048, %v3038
      %v3050 = vadd.s32 %v3049, %v3040
      %v3051 = vand.u32 %v3028, 65535
      %v3052 = vshrl.u32 %v3028, 16
      %v3053 = vand.u32 %v3023, 65535
      %v3054 = vshrl.u32 %v3023, 16
      %v3055 = vmul.u32 %v3051, %v3053
      %v3056 = vmul.u32 %v3051, %v3054
      %v3057 = vmul.u32 %v3052, %v3053
      %v3058 = vmul.u32 %v3052, %v3054
      %v3059 = vshll.u32 %v3056, 16
      %v3060 = vshrl.u32 %v3056, 16
      %v3061 = vshll.u32 %v3057, 16
      %v3062 = vshrl.u32 %v3057, 16
      %vm3063 = vc.u32 %v3055, %v3059
      %v3064 = vsel %vm3063, 1, 0
      %v3065 = vadd.s32 %v3055, %v3059
      %v3066 = vadd.s32 %v3058, %v3064
      %vm3067 = vc.u32 %v3065, %v3061
      %v3068 = vsel %vm3067, 1, 0
      %v3069 = vadd.s32 %v3065, %v3061
      %v3070 = vadd.s32 %v3066, %v3068
      %v3071 = vadd.s32 %v3070, %v3060
      %v3072 = vadd.s32 %v3071, %v3062
      %v3073 = vmul.u32 %v3028, %v3019
      %v3074 = vadd.s32 %v3050, %v3069
      %vm3075 = vc.u32 %v3050, %v3069
      %v3076 = vadd.s32 %v3072, 1
      %v3077 = vsel %vm3075, %v3076, %v3072
      %v3078 = vadd.s32 %v3073, %v3077
      %v3079 = vadd.s32 %v3078, 536870912
      %v3080 = vshrl.u32 %v3079, 30
      %v3081 = vshll.u32 %v3080, 30
      %v3082 = vsub.s32 %v3078, %v3081
      %vm3083 = vcmp.lt.s32.totalorder %v3082, 0
      %v3084 = vsub.s32 0, %v3082
      %v3085 = vsel %vm3083, %v3084, %v3082
      %v3086 = vclz %v3085
      %v3087 = vsub.s32 %v3086, 2
      %vm3088 = vcmp.gt.s32.totalorder 0, %v3087
      %v3089 = vsel %vm3088, 0, %v3087
      %v3090 = vsub.s32 32, %v3089
      %v3091 = vshll.u32 %v3082, %v3089
      %v3092 = vshrl.u32 %v3074, %v3090
      %v3093 = vor.u32 %v3091, %v3092
      %v3094 = vsub.s32 4294967266, %v3089
      %v3095 = vadd.s32 %v3094, 127
      %v3096 = vshll.u32 %v3095, 23
      %v3097 = vor.u32 4788187, %v3096
      %v3098 = vand.u32 2147483647, %v3097
      %v3100 = vcvt.s32.f32 %v3093
      %v3101 = vmul.f32 %v3100, %v3098
      %v3102 = vxor.u32 %v3101, 2147483648
      %v3103 = vsel %vm2982, %v3102, %v3101
      %v3104 = vsub.s32 4, %v3080
      %v3105 = vsel %vm2982, %v3104, %v3080
      %v3106 = vsel %vm2981, %v2978, %v3103
      %v3107 = vsel %vm2981, 0, %v3105
      %v3108 = vmul.f32 %v3106, %v3106
      %v3109 = vmul.f32 %v3108, -0.001358992
      %v3110 = vadd.f32 %v3109, 0.041655596
      %v3111 = vmul.f32 %v3108, %v3110
      %v3112 = vadd.f32 %v3111, -0.4999988
      %v3113 = vmul.f32 %v3108, %v3112
      %v3114 = vadd.f32 1.0, %v3113
      %v3115 = vmul.f32 %v3106, %v3106
      %v3116 = vmul.f32 %v3115, -0.00019511016
      %v3117 = vadd.f32 %v3116, 0.008332121
      %v3118 = vmul.f32 %v3115, %v3117
      %v3119 = vadd.f32 %v3118, -0.16666654
      %v3120 = vmul.f32 %v3115, %v3119
      %v3121 = vadd.f32 %v3120, 1.0
      %v3122 = vmul.f32 %v3121, %v3106
      %vm3123 = vweird.f32 %v2978
      %v3124 = vand.u32 %v3107, 3
      %vm3125 = vcmp.lt.s32.totalorder %v3124, 2
      %vm3126 = vcmp.eq.s32.totalorder %v3124, 0
      %v3127 = vxor.u32 %v3122, 2147483648
      %v3128 = vsel %vm3126, %v3114, %v3127
      %vm3129 = vcmp.eq.s32.totalorder %v3124, 2
      %v3130 = vxor.u32 %v3114, 2147483648
      %v3131 = vsel %vm3129, %v3130, %v3122
      %v3132 = vsel %vm3125, %v3128, %v3131
      %v3133 = vsel %vm3123, nan, %v3132
      %v3134 = vand.u32 2147483647, %v2978
      %vm3135 = vcmp.le.f32.partialorder %v3134, 0.7853982
      %vm3136 = vcmp.lt.s32.totalorder %v2978, 0
      %v3137 = vand.u32 %v2978, 2139095040
      %v3138 = vshrl.u32 %v3137, 23
      %v3139 = vsub.s32 %v3138, 127
      %v3140 = vand.u32 2147483647, %v2978
      %v3141 = vand.u32 %v3140, 8388607
      %v3142 = vor.u32 %v3141, 8388608
      %v3143 = vsub.s32 0, %v3142
      %v3144 = vadd.s32 %v3139, 1
      %vm3145 = vcmp.gt.s32.totalorder %v3144, 0
      %v3146 = vsel %vm3145, %v3144, 0
      %v3147 = vshrl.u32 %v3146, 5
      %v3148 = vand.u32 %v3146, 31
      %v3149 = vsub.s32 32, %v3148
      %v3150 = vshrl.u32 683565275, %v3149
      %v3151 = vshll.u32 683565275, %v3148
      %v3152 = vshrl.u32 2475754826, %v3149
      %v3153 = vor.u32 %v3151, %v3152
      %v3154 = vshll.u32 2475754826, %v3148
      %v3155 = vshrl.u32 2131351028, %v3149
      %v3156 = vor.u32 %v3154, %v3155
      %v3157 = vshll.u32 2131351028, %v3148
      %v3158 = vshrl.u32 2102212464, %v3149
      %v3159 = vor.u32 %v3157, %v3158
      %v3160 = vshll.u32 2102212464, %v3148
      %v3161 = vshrl.u32 920167782, %v3149
      %v3162 = vor.u32 %v3160, %v3161
      %v3163 = vshll.u32 920167782, %v3148
      %v3164 = vshrl.u32 1326507024, %v3149
      %v3165 = vor.u32 %v3163, %v3164
      %vm3166 = vcmp.lt.s32.totalorder %v3147, 1
      %vm3167 = vcmp.lt.s32.totalorder %v3147, 2
      %vm3168 = vcmp.lt.s32.totalorder %v3147, 3
      %vm3169 = vcmp.lt.s32.totalorder %v3147, 4
      %v3170 = vsel %vm3166, %v3150, %v3153
      %v3171 = vsel %vm3169, %v3159, 2102212464
      %v3172 = vsel %vm3168, %v3156, %v3171
      %v3173 = vsel %vm3167, %v3170, %v3172
      %v3174 = vsel %vm3166, %v3153, %v3156
      %v3175 = vsel %vm3169, %v3162, 920167782
      %v3176 = vsel %vm3168, %v3159, %v3175
      %v3177 = vsel %vm3167, %v3174, %v3176
      %v3178 = vsel %vm3166, %v3156, %v3159
      %v3179 = vsel %vm3169, %v3165, 1326507024
      %v3180 = vsel %vm3168, %v3162, %v3179
      %v3181 = vsel %vm3167, %v3178, %v3180
      %v3182 = vshll.u32 %v3142, 8
      %v3183 = vand.u32 %v3182, 65535
      %v3184 = vshrl.u32 %v3182, 16
      %v3185 = vand.u32 %v3181, 65535
      %v3186 = vshrl.u32 %v3181, 16
      %v3187 = vmul.u32 %v3183, %v3185
      %v3188 = vmul.u32 %v3183, %v3186
      %v3189 = vmul.u32 %v3184, %v3185
      %v3190 = vmul.u32 %v3184, %v3186
      %v3191 = vshll.u32 %v3188, 16
      %v3192 = vshrl.u32 %v3188, 16
      %v3193 = vshll.u32 %v3189, 16
      %v3194 = vshrl.u32 %v3189, 16
      %vm3195 = vc.u32 %v3187, %v3191
      %v3196 = vsel %vm3195, 1, 0
      %v3197 = vadd.s32 %v3187, %v3191
      %v3198 = vadd.s32 %v3190, %v3196
      %vm3199 = vc.u32 %v3197, %v3193
      %v3200 = vsel %vm3199, 1, 0
      %v3201 = vadd.s32 %v3197, %v3193
      %v3202 = vadd.s32 %v3198, %v3200
      %v3203 = vadd.s32 %v3202, %v3192
      %v3204 = vadd.s32 %v3203, %v3194
      %v3205 = vand.u32 %v3182, 65535
      %v3206 = vshrl.u32 %v3182, 16
      %v3207 = vand.u32 %v3177, 65535
      %v3208 = vshrl.u32 %v3177, 16
      %v3209 = vmul.u32 %v3205, %v3207
      %v3210 = vmul.u32 %v3205, %v3208
      %v3211 = vmul.u32 %v3206, %v3207
      %v3212 = vmul.u32 %v3206, %v3208
      %v3213 = vshll.u32 %v3210, 16
      %v3214 = vshrl.u32 %v3210, 16
      %v3215 = vshll.u32 %v3211, 16
      %v3216 = vshrl.u32 %v3211, 16
      %vm3217 = vc.u32 %v3209, %v3213
      %v3218 = vsel %vm3217, 1, 0
      %v3219 = vadd.s32 %v3209, %v3213
      %v3220 = vadd.s32 %v3212, %v3218
      %vm3221 = vc.u32 %v3219, %v3215
      %v3222 = vsel %vm3221, 1, 0
      %v3223 = vadd.s32 %v3219, %v3215
      %v3224 = vadd.s32 %v3220, %v3222
      %v3225 = vadd.s32 %v3224, %v3214
      %v3226 = vadd.s32 %v3225, %v3216
      %v3227 = vmul.u32 %v3182, %v3173
      %v3228 = vadd.s32 %v3204, %v3223
      %vm3229 = vc.u32 %v3204, %v3223
      %v3230 = vadd.s32 %v3226, 1
      %v3231 = vsel %vm3229, %v3230, %v3226
      %v3232 = vadd.s32 %v3227, %v3231
      %v3233 = vadd.s32 %v3232, 536870912
      %v3234 = vshrl.u32 %v3233, 30
      %v3235 = vshll.u32 %v3234, 30
      %v3236 = vsub.s32 %v3232, %v3235
      %vm3237 = vcmp.lt.s32.totalorder %v3236, 0
      %v3238 = vsub.s32 0, %v3236
      %v3239 = vsel %vm3237, %v3238, %v3236
      %v3240 = vclz %v3239
      %v3241 = vsub.s32 %v3240, 2
      %vm3242 = vcmp.gt.s32.totalorder 0, %v3241
      %v3243 = vsel %vm3242, 0, %v3241
      %v3244 = vsub.s32 32, %v3243
      %v3245 = vshll.u32 %v3236, %v3243
      %v3246 = vshrl.u32 %v3228, %v3244
      %v3247 = vor.u32 %v3245, %v3246
      %v3248 = vsub.s32 4294967266, %v3243
      %v3249 = vadd.s32 %v3248, 127
      %v3250 = vshll.u32 %v3249, 23
      %v3251 = vor.u32 4788187, %v3250
      %v3252 = vand.u32 2147483647, %v3251
      %v3254 = vcvt.s32.f32 %v3247
      %v3255 = vmul.f32 %v3254, %v3252
      %v3256 = vxor.u32 %v3255, 2147483648
      %v3257 = vsel %vm3136, %v3256, %v3255
      %v3258 = vsub.s32 4, %v3234
      %v3259 = vsel %vm3136, %v3258, %v3234
      %v3260 = vsel %vm3135, %v2978, %v3257
      %v3261 = vsel %vm3135, 0, %v3259
      %v3262 = vmul.f32 %v3260, %v3260
      %v3263 = vmul.f32 %v3262, -0.001358992
      %v3264 = vadd.f32 %v3263, 0.041655596
      %v3265 = vmul.f32 %v3262, %v3264
      %v3266 = vadd.f32 %v3265, -0.4999988
      %v3267 = vmul.f32 %v3262, %v3266
      %v3268 = vadd.f32 1.0, %v3267
      %v3269 = vmul.f32 %v3260, %v3260
      %v3270 = vmul.f32 %v3269, -0.00019511016
      %v3271 = vadd.f32 %v3270, 0.008332121
      %v3272 = vmul.f32 %v3269, %v3271
      %v3273 = vadd.f32 %v3272, -0.16666654
      %v3274 = vmul.f32 %v3269, %v3273
      %v3275 = vadd.f32 %v3274, 1.0
      %v3276 = vmul.f32 %v3275, %v3260
      %vm3277 = vweird.f32 %v2978
      %v3278 = vadd.s32 %v3261, 3
      %v3279 = vand.u32 %v3278, 3
      %vm3280 = vcmp.lt.s32.totalorder %v3279, 2
      %vm3281 = vcmp.eq.s32.totalorder %v3279, 0
      %v3282 = vxor.u32 %v3276, 2147483648
      %v3283 = vsel %vm3281, %v3268, %v3282
      %vm3284 = vcmp.eq.s32.totalorder %v3279, 2
      %v3285 = vxor.u32 %v3268, 2147483648
      %v3286 = vsel %vm3284, %v3285, %v3276
      %v3287 = vsel %vm3280, %v3283, %v3286
      %v3288 = vsel %vm3277, nan, %v3287
      %v3289 = vmul.f32 %v2979, %v2979
      %v3290 = vsub.f32 1.0, %v3289
      %v3291 = vmul.f32 %v3133, %v3133
      %3293 = vrot.lane.b32.xlu0 %v3290, 8
      %v3294 = vpop.permute.xlu0 %3293
      %v3296 = vmul.f32 %v3291, %v3294
      %3298 = vrot.lane.b32.xlu0 %v3296, 120
      %v3299 = vpop.permute.xlu0 %3298
      %v3301 = vadd.f32 %v3289, %v3299
      %v3302 = vrcp.pop %v3301
      %v3303 = vmul.f32 %v3301, %v3302
      %v3304 = vsub.f32 1.0, %v3303
      %v3305 = vmul.f32 %v3302, %v3304
      %v3306 = vadd.f32 %v3302, %v3305
      %vm3307 = vweird.f32 %v3301
      %vm3308 = vweird.f32 %v3302
      %vm3309 = vmor %vm3307, %vm3308
      %v3310 = vsel %vm3309, %v3302, %v3306
      %v3311 = vand.u32 2147483647, %v3301
      %vm3312 = vcmp.eq.f32.partialorder %v3311, 8.507059e+37
      %v3313 = vand.u32 %v3301, 2147483648
      %v3314 = vor.u32 1.1754944e-38, %v3313
      %v3315 = vsel %vm3312, %v3314, %v3310
      %v3316 = vmul.f32 %v2979, %v3315
      %v3317 = vmul.f32 %v3288, %v3133
      %v3318 = vmul.f32 %v3317, %v3294
      %3320 = vrot.lane.b32.xlu0 %v3301, 8
      %v3321 = vpop.permute.xlu0 %3320
      %v3323 = vrcp.pop %v3321
      %v3324 = vmul.f32 %v3321, %v3323
      %v3325 = vsub.f32 1.0, %v3324
      %v3326 = vmul.f32 %v3323, %v3325
      %v3327 = vadd.f32 %v3323, %v3326
      %vm3328 = vweird.f32 %v3321
      %vm3329 = vweird.f32 %v3323
      %vm3330 = vmor %vm3328, %vm3329
      %v3331 = vsel %vm3330, %v3323, %v3327
      %v3332 = vand.u32 2147483647, %v3321
      %vm3333 = vcmp.eq.f32.partialorder %v3332, 8.507059e+37
      %v3334 = vand.u32 %v3321, 2147483648
      %v3335 = vor.u32 1.1754944e-38, %v3334
      %v3336 = vsel %vm3333, %v3335, %v3331
      %v3337 = vmul.f32 %v3318, %v3336
      %v3338 = vsub.f32 0.0, %v3337
      %v3339 = vsel %vm1720, %v3316, %v3338
      %3341 = vrot.lane.b32.xlu0 %v3337, 120
      %v3342 = vpop.permute.xlu0 %3341
      %3345 = vrot.lane.b32.xlu0 %v3316, 8
      %v3346 = vpop.permute.xlu0 %3345
      %v3348 = vsel %vm1720, %v3342, %v3346
      %v3350 = vsel %vm1154, %v1108, 0
      %v3353 = vsel %vm1154, %v1112, 0
      %v3356 = vsel %vm1154, %v3339, 0
      %v3359 = vsel %vm1154, %v3348, 0
      %3361 = vmatpush.xpose.msra.mxu0 0.0
      %3362 = vmatpush.xpose.msra.mxu0 0.0
      %3363 = vmatpush.xpose.msra.mxu0 0.0
      %3364 = vmatpush.xpose.msra.mxu0 0.0
      %3365 = vmatpush.xpose.msra.mxu0 0.0
      %3366 = vmatpush.xpose.msra.mxu0 0.0
      %3367 = vmatpush.xpose.msra.mxu0 0.0
      %3368 = vmatpush.xpose.msra.mxu0 0.0
      %3369 = vmatpush.xpose.msra.mxu0 0.0
      %3370 = vmatpush.xpose.msra.mxu0 0.0
      %3371 = vmatpush.xpose.msra.mxu0 0.0
      %3372 = vmatpush.xpose.msra.mxu0 0.0
      %3373 = vmatpush.xpose.msra.mxu0 0.0
      %3374 = vmatpush.xpose.msra.mxu0 0.0
      %v3375 = vand.u32 %v3359, 4294901760
      %3376 = vmatpush.xpose.msra.mxu0 %v3375
      %v3377 = vand.u32 %v3356, 4294901760
      %3378 = vmatpush.xpose.msra.mxu0 %v3377
      %v3379 = vand.u32 %v3350, 4294901760
      %v3380 = vsub.f32 %v3350, %v3379
      %v3381 = vand.u32 %v3380, 4294901760
      %v3382 = vsub.f32 %v3380, %v3381
      %v3383 = vand.u32 %v3382, 4294901760
      %3384 = vmatmul.f32.gmra.mxu0 %v3383
      %v3385 = vpop.f32.mrf.mxu0
      %v3386 = vadd.f32 0.0, %v3385
      %v3387 = vand.u32 %v3353, 4294901760
      %v3388 = vsub.f32 %v3353, %v3387
      %v3389 = vand.u32 %v3388, 4294901760
      %v3390 = vsub.f32 %v3388, %v3389
      %v3391 = vand.u32 %v3390, 4294901760
      %3392 = vmatmul.f32.gmra.mxu0 %v3391
      %v3393 = vpop.f32.mrf.mxu0
      %v3394 = vadd.f32 0.0, %v3393
      %3395 = vdwg.mxu0
      %3396 = vmatpush.xpose.msra.mxu0 0.0
      %3397 = vmatpush.xpose.msra.mxu0 0.0
      %3398 = vmatpush.xpose.msra.mxu0 0.0
      %3399 = vmatpush.xpose.msra.mxu0 0.0
      %3400 = vmatpush.xpose.msra.mxu0 0.0
      %3401 = vmatpush.xpose.msra.mxu0 0.0
      %3402 = vmatpush.xpose.msra.mxu0 0.0
      %3403 = vmatpush.xpose.msra.mxu0 0.0
      %3404 = vmatpush.xpose.msra.mxu0 0.0
      %3405 = vmatpush.xpose.msra.mxu0 0.0
      %3406 = vmatpush.xpose.msra.mxu0 0.0
      %3407 = vmatpush.xpose.msra.mxu0 0.0
      %3408 = vmatpush.xpose.msra.mxu0 0.0
      %3409 = vmatpush.xpose.msra.mxu0 0.0
      %v3410 = vand.u32 %v3359, 4294901760
      %v3411 = vsub.f32 %v3359, %v3410
      %v3412 = vand.u32 %v3411, 4294901760
      %v3413 = vsub.f32 %v3411, %v3412
      %v3414 = vand.u32 %v3413, 4294901760
      %3415 = vmatpush.xpose.msra.mxu0 %v3414
      %v3416 = vand.u32 %v3356, 4294901760
      %v3417 = vsub.f32 %v3356, %v3416
      %v3418 = vand.u32 %v3417, 4294901760
      %v3419 = vsub.f32 %v3417, %v3418
      %v3420 = vand.u32 %v3419, 4294901760
      %3421 = vmatpush.xpose.msra.mxu0 %v3420
      %v3422 = vand.u32 %v3350, 4294901760
      %3423 = vmatmul.f32.gmra.mxu0 %v3422
      %v3424 = vpop.f32.mrf.mxu0
      %v3425 = vadd.f32 %v3386, %v3424
      %v3426 = vand.u32 %v3353, 4294901760
      %3427 = vmatmul.f32.gmra.mxu0 %v3426
      %v3428 = vpop.f32.mrf.mxu0
      %v3429 = vadd.f32 %v3394, %v3428
      %3430 = vdwg.mxu0
      %3431 = vmatpush.xpose.msra.mxu0 0.0
      %3432 = vmatpush.xpose.msra.mxu0 0.0
      %3433 = vmatpush.xpose.msra.mxu0 0.0
      %3434 = vmatpush.xpose.msra.mxu0 0.0
      %3435 = vmatpush.xpose.msra.mxu0 0.0
      %3436 = vmatpush.xpose.msra.mxu0 0.0
      %3437 = vmatpush.xpose.msra.mxu0 0.0
      %3438 = vmatpush.xpose.msra.mxu0 0.0
      %3439 = vmatpush.xpose.msra.mxu0 0.0
      %3440 = vmatpush.xpose.msra.mxu0 0.0
      %3441 = vmatpush.xpose.msra.mxu0 0.0
      %3442 = vmatpush.xpose.msra.mxu0 0.0
      %3443 = vmatpush.xpose.msra.mxu0 0.0
      %3444 = vmatpush.xpose.msra.mxu0 0.0
      %v3445 = vand.u32 %v3359, 4294901760
      %v3446 = vsub.f32 %v3359, %v3445
      %3447 = vmatpush.xpose.msra.mxu0 %v3446
      %v3448 = vand.u32 %v3356, 4294901760
      %v3449 = vsub.f32 %v3356, %v3448
      %3450 = vmatpush.xpose.msra.mxu0 %v3449
      %v3451 = vand.u32 %v3350, 4294901760
      %v3452 = vsub.f32 %v3350, %v3451
      %3453 = vmatmul.f32.gmra.mxu0 %v3452
      %v3454 = vpop.f32.mrf.mxu0
      %v3455 = vadd.f32 %v3425, %v3454
      %v3456 = vand.u32 %v3353, 4294901760
      %v3457 = vsub.f32 %v3353, %v3456
      %3458 = vmatmul.f32.gmra.mxu0 %v3457
      %v3459 = vpop.f32.mrf.mxu0
      %v3460 = vadd.f32 %v3429, %v3459
      %3461 = vdwg.mxu0
      %3462 = vmatpush.xpose.msra.mxu0 0.0
      %3463 = vmatpush.xpose.msra.mxu0 0.0
      %3464 = vmatpush.xpose.msra.mxu0 0.0
      %3465 = vmatpush.xpose.msra.mxu0 0.0
      %3466 = vmatpush.xpose.msra.mxu0 0.0
      %3467 = vmatpush.xpose.msra.mxu0 0.0
      %3468 = vmatpush.xpose.msra.mxu0 0.0
      %3469 = vmatpush.xpose.msra.mxu0 0.0
      %3470 = vmatpush.xpose.msra.mxu0 0.0
      %3471 = vmatpush.xpose.msra.mxu0 0.0
      %3472 = vmatpush.xpose.msra.mxu0 0.0
      %3473 = vmatpush.xpose.msra.mxu0 0.0
      %3474 = vmatpush.xpose.msra.mxu0 0.0
      %3475 = vmatpush.xpose.msra.mxu0 0.0
      %v3476 = vand.u32 %v3359, 4294901760
      %3477 = vmatpush.xpose.msra.mxu0 %v3476
      %v3478 = vand.u32 %v3356, 4294901760
      %3479 = vmatpush.xpose.msra.mxu0 %v3478
      %v3480 = vand.u32 %v3350, 4294901760
      %v3481 = vsub.f32 %v3350, %v3480
      %v3482 = vand.u32 %v3481, 4294901760
      %3483 = vmatmul.f32.gmra.mxu0 %v3482
      %v3484 = vpop.f32.mrf.mxu0
      %v3485 = vadd.f32 %v3455, %v3484
      %v3486 = vand.u32 %v3353, 4294901760
      %v3487 = vsub.f32 %v3353, %v3486
      %v3488 = vand.u32 %v3487, 4294901760
      %3489 = vmatmul.f32.gmra.mxu0 %v3488
      %v3490 = vpop.f32.mrf.mxu0
      %v3491 = vadd.f32 %v3460, %v3490
      %3492 = vdwg.mxu0
      %3493 = vmatpush.xpose.msra.mxu0 0.0
      %3494 = vmatpush.xpose.msra.mxu0 0.0
      %3495 = vmatpush.xpose.msra.mxu0 0.0
      %3496 = vmatpush.xpose.msra.mxu0 0.0
      %3497 = vmatpush.xpose.msra.mxu0 0.0
      %3498 = vmatpush.xpose.msra.mxu0 0.0
      %3499 = vmatpush.xpose.msra.mxu0 0.0
      %3500 = vmatpush.xpose.msra.mxu0 0.0
      %3501 = vmatpush.xpose.msra.mxu0 0.0
      %3502 = vmatpush.xpose.msra.mxu0 0.0
      %3503 = vmatpush.xpose.msra.mxu0 0.0
      %3504 = vmatpush.xpose.msra.mxu0 0.0
      %3505 = vmatpush.xpose.msra.mxu0 0.0
      %3506 = vmatpush.xpose.msra.mxu0 0.0
      %v3507 = vand.u32 %v3359, 4294901760
      %v3508 = vsub.f32 %v3359, %v3507
      %v3509 = vand.u32 %v3508, 4294901760
      %3510 = vmatpush.xpose.msra.mxu0 %v3509
      %v3511 = vand.u32 %v3356, 4294901760
      %v3512 = vsub.f32 %v3356, %v3511
      %v3513 = vand.u32 %v3512, 4294901760
      %3514 = vmatpush.xpose.msra.mxu0 %v3513
      %v3515 = vand.u32 %v3350, 4294901760
      %3516 = vmatmul.f32.gmra.mxu0 %v3515
      %v3517 = vpop.f32.mrf.mxu0
      %v3518 = vadd.f32 %v3485, %v3517
      %v3519 = vand.u32 %v3353, 4294901760
      %3520 = vmatmul.f32.gmra.mxu0 %v3519
      %v3521 = vpop.f32.mrf.mxu0
      %v3522 = vadd.f32 %v3491, %v3521
      %3523 = vdwg.mxu0
      %3524 = vmatpush.xpose.msra.mxu0 0.0
      %3525 = vmatpush.xpose.msra.mxu0 0.0
      %3526 = vmatpush.xpose.msra.mxu0 0.0
      %3527 = vmatpush.xpose.msra.mxu0 0.0
      %3528 = vmatpush.xpose.msra.mxu0 0.0
      %3529 = vmatpush.xpose.msra.mxu0 0.0
      %3530 = vmatpush.xpose.msra.mxu0 0.0
      %3531 = vmatpush.xpose.msra.mxu0 0.0
      %3532 = vmatpush.xpose.msra.mxu0 0.0
      %3533 = vmatpush.xpose.msra.mxu0 0.0
      %3534 = vmatpush.xpose.msra.mxu0 0.0
      %3535 = vmatpush.xpose.msra.mxu0 0.0
      %3536 = vmatpush.xpose.msra.mxu0 0.0
      %3537 = vmatpush.xpose.msra.mxu0 0.0
      %v3538 = vand.u32 %v3359, 4294901760
      %3539 = vmatpush.xpose.msra.mxu0 %v3538
      %v3540 = vand.u32 %v3356, 4294901760
      %3541 = vmatpush.xpose.msra.mxu0 %v3540
      %v3542 = vand.u32 %v3350, 4294901760
      %3543 = vmatmul.f32.gmra.mxu0 %v3542
      %v3544 = vpop.f32.mrf.mxu0
      %v3545 = vadd.f32 %v3518, %v3544
      %v3546 = vand.u32 %v3353, 4294901760
      %3547 = vmatmul.f32.gmra.mxu0 %v3546
      %v3548 = vpop.f32.mrf.mxu0
      %v3549 = vadd.f32 %v3522, %v3548
      %3550 = vdwg.mxu0
      %3551 = vxpose.xlu0.b32.start [1/16] %v686, 128
      %3552 = vxpose.xlu0.b32.cont [2/16] %v690, 128
      %3553 = vxpose.xlu0.b32.cont [3/16] 0.0, 128
      %3554 = vxpose.xlu0.b32.cont [4/16] 0.0, 128
      %3555 = vxpose.xlu0.b32.cont [5/16] 0.0, 128
      %3556 = vxpose.xlu0.b32.cont [6/16] 0.0, 128
      %3557 = vxpose.xlu0.b32.cont [7/16] 0.0, 128
      %3558 = vxpose.xlu0.b32.cont [8/16] 0.0, 128
      %3559 = vxpose.xlu0.b32.cont [9/16] 0.0, 128
      %3560 = vxpose.xlu0.b32.cont [10/16] 0.0, 128
      %3561 = vxpose.xlu0.b32.cont [11/16] 0.0, 128
      %3562 = vxpose.xlu0.b32.cont [12/16] 0.0, 128
      %3563 = vxpose.xlu0.b32.cont [13/16] 0.0, 128
      %3564 = vxpose.xlu0.b32.cont [14/16] 0.0, 128
      %3565 = vxpose.xlu0.b32.cont [15/16] 0.0, 128
      %3566 = vxpose.xlu0.b32.end [16/16] 0.0, 128
      %v3567 = vpop.trf.xlu0
      %v3568 = vpop.trf.xlu0
      %v3569 = vpop.trf.xlu0
      %v3570 = vpop.trf.xlu0
      %v3571 = vpop.trf.xlu0
      %v3572 = vpop.trf.xlu0
      %v3573 = vpop.trf.xlu0
      %v3574 = vpop.trf.xlu0
      %v3575 = vpop.trf.xlu0
      %v3576 = vpop.trf.xlu0
      %v3577 = vpop.trf.xlu0
      %v3578 = vpop.trf.xlu0
      %v3579 = vpop.trf.xlu0
      %v3580 = vpop.trf.xlu0
      %v3581 = vpop.trf.xlu0
      %v3582 = vpop.trf.xlu0
      %v3584 = vsel %vm1154, %v3567, 0
      %v3587 = vsel %vm1154, %v3568, 0
      %3589 = vmatpush.msra.mxu0 0.0
      %3590 = vmatpush.msra.mxu0 0.0
      %3591 = vmatpush.msra.mxu0 0.0
      %3592 = vmatpush.msra.mxu0 0.0
      %3593 = vmatpush.msra.mxu0 0.0
      %3594 = vmatpush.msra.mxu0 0.0
      %3595 = vmatpush.msra.mxu0 0.0
      %3596 = vmatpush.msra.mxu0 0.0
      %3597 = vmatpush.msra.mxu0 0.0
      %3598 = vmatpush.msra.mxu0 0.0
      %3599 = vmatpush.msra.mxu0 0.0
      %3600 = vmatpush.msra.mxu0 0.0
      %3601 = vmatpush.msra.mxu0 0.0
      %3602 = vmatpush.msra.mxu0 0.0
      %v3603 = vand.u32 %v1120, 4294901760
      %3604 = vmatpush.msra.mxu0 %v3603
      %v3605 = vand.u32 %v1116, 4294901760
      %3606 = vmatpush.msra.mxu0 %v3605
      %v3607 = vand.u32 %v3584, 4294901760
      %v3608 = vsub.f32 %v3584, %v3607
      %v3609 = vand.u32 %v3608, 4294901760
      %v3610 = vsub.f32 %v3608, %v3609
      %v3611 = vand.u32 %v3610, 4294901760
      %3612 = vmatmul.f32.gmra.mxu0 %v3611
      %v3613 = vpop.f32.mrf.mxu0
      %v3614 = vadd.f32 0.0, %v3613
      %v3615 = vand.u32 %v3587, 4294901760
      %v3616 = vsub.f32 %v3587, %v3615
      %v3617 = vand.u32 %v3616, 4294901760
      %v3618 = vsub.f32 %v3616, %v3617
      %v3619 = vand.u32 %v3618, 4294901760
      %3620 = vmatmul.f32.gmra.mxu0 %v3619
      %v3621 = vpop.f32.mrf.mxu0
      %v3622 = vadd.f32 0.0, %v3621
      %3623 = vdwg.mxu0
      %3624 = vmatpush.msra.mxu0 0.0
      %3625 = vmatpush.msra.mxu0 0.0
      %3626 = vmatpush.msra.mxu0 0.0
      %3627 = vmatpush.msra.mxu0 0.0
      %3628 = vmatpush.msra.mxu0 0.0
      %3629 = vmatpush.msra.mxu0 0.0
      %3630 = vmatpush.msra.mxu0 0.0
      %3631 = vmatpush.msra.mxu0 0.0
      %3632 = vmatpush.msra.mxu0 0.0
      %3633 = vmatpush.msra.mxu0 0.0
      %3634 = vmatpush.msra.mxu0 0.0
      %3635 = vmatpush.msra.mxu0 0.0
      %3636 = vmatpush.msra.mxu0 0.0
      %3637 = vmatpush.msra.mxu0 0.0
      %v3638 = vand.u32 %v1120, 4294901760
      %v3639 = vsub.f32 %v1120, %v3638
      %v3640 = vand.u32 %v3639, 4294901760
      %v3641 = vsub.f32 %v3639, %v3640
      %v3642 = vand.u32 %v3641, 4294901760
      %3643 = vmatpush.msra.mxu0 %v3642
      %v3644 = vand.u32 %v1116, 4294901760
      %v3645 = vsub.f32 %v1116, %v3644
      %v3646 = vand.u32 %v3645, 4294901760
      %v3647 = vsub.f32 %v3645, %v3646
      %v3648 = vand.u32 %v3647, 4294901760
      %3649 = vmatpush.msra.mxu0 %v3648
      %v3650 = vand.u32 %v3584, 4294901760
      %3651 = vmatmul.f32.gmra.mxu0 %v3650
      %v3652 = vpop.f32.mrf.mxu0
      %v3653 = vadd.f32 %v3614, %v3652
      %v3654 = vand.u32 %v3587, 4294901760
      %3655 = vmatmul.f32.gmra.mxu0 %v3654
      %v3656 = vpop.f32.mrf.mxu0
      %v3657 = vadd.f32 %v3622, %v3656
      %3658 = vdwg.mxu0
      %3659 = vmatpush.msra.mxu0 0.0
      %3660 = vmatpush.msra.mxu0 0.0
      %3661 = vmatpush.msra.mxu0 0.0
      %3662 = vmatpush.msra.mxu0 0.0
      %3663 = vmatpush.msra.mxu0 0.0
      %3664 = vmatpush.msra.mxu0 0.0
      %3665 = vmatpush.msra.mxu0 0.0
      %3666 = vmatpush.msra.mxu0 0.0
      %3667 = vmatpush.msra.mxu0 0.0
      %3668 = vmatpush.msra.mxu0 0.0
      %3669 = vmatpush.msra.mxu0 0.0
      %3670 = vmatpush.msra.mxu0 0.0
      %3671 = vmatpush.msra.mxu0 0.0
      %3672 = vmatpush.msra.mxu0 0.0
      %v3673 = vand.u32 %v1120, 4294901760
      %v3674 = vsub.f32 %v1120, %v3673
      %3675 = vmatpush.msra.mxu0 %v3674
      %v3676 = vand.u32 %v1116, 4294901760
      %v3677 = vsub.f32 %v1116, %v3676
      %3678 = vmatpush.msra.mxu0 %v3677
      %v3679 = vand.u32 %v3584, 4294901760
      %v3680 = vsub.f32 %v3584, %v3679
      %3681 = vmatmul.f32.gmra.mxu0 %v3680
      %v3682 = vpop.f32.mrf.mxu0
      %v3683 = vadd.f32 %v3653, %v3682
      %v3684 = vand.u32 %v3587, 4294901760
      %v3685 = vsub.f32 %v3587, %v3684
      %3686 = vmatmul.f32.gmra.mxu0 %v3685
      %v3687 = vpop.f32.mrf.mxu0
      %v3688 = vadd.f32 %v3657, %v3687
      %3689 = vdwg.mxu0
      %3690 = vmatpush.msra.mxu0 0.0
      %3691 = vmatpush.msra.mxu0 0.0
      %3692 = vmatpush.msra.mxu0 0.0
      %3693 = vmatpush.msra.mxu0 0.0
      %3694 = vmatpush.msra.mxu0 0.0
      %3695 = vmatpush.msra.mxu0 0.0
      %3696 = vmatpush.msra.mxu0 0.0
      %3697 = vmatpush.msra.mxu0 0.0
      %3698 = vmatpush.msra.mxu0 0.0
      %3699 = vmatpush.msra.mxu0 0.0
      %3700 = vmatpush.msra.mxu0 0.0
      %3701 = vmatpush.msra.mxu0 0.0
      %3702 = vmatpush.msra.mxu0 0.0
      %3703 = vmatpush.msra.mxu0 0.0
      %v3704 = vand.u32 %v1120, 4294901760
      %3705 = vmatpush.msra.mxu0 %v3704
      %v3706 = vand.u32 %v1116, 4294901760
      %3707 = vmatpush.msra.mxu0 %v3706
      %v3708 = vand.u32 %v3584, 4294901760
      %v3709 = vsub.f32 %v3584, %v3708
      %v3710 = vand.u32 %v3709, 4294901760
      %3711 = vmatmul.f32.gmra.mxu0 %v3710
      %v3712 = vpop.f32.mrf.mxu0
      %v3713 = vadd.f32 %v3683, %v3712
      %v3714 = vand.u32 %v3587, 4294901760
      %v3715 = vsub.f32 %v3587, %v3714
      %v3716 = vand.u32 %v3715, 4294901760
      %3717 = vmatmul.f32.gmra.mxu0 %v3716
      %v3718 = vpop.f32.mrf.mxu0
      %v3719 = vadd.f32 %v3688, %v3718
      %3720 = vdwg.mxu0
      %3721 = vmatpush.msra.mxu0 0.0
      %3722 = vmatpush.msra.mxu0 0.0
      %3723 = vmatpush.msra.mxu0 0.0
      %3724 = vmatpush.msra.mxu0 0.0
      %3725 = vmatpush.msra.mxu0 0.0
      %3726 = vmatpush.msra.mxu0 0.0
      %3727 = vmatpush.msra.mxu0 0.0
      %3728 = vmatpush.msra.mxu0 0.0
      %3729 = vmatpush.msra.mxu0 0.0
      %3730 = vmatpush.msra.mxu0 0.0
      %3731 = vmatpush.msra.mxu0 0.0
      %3732 = vmatpush.msra.mxu0 0.0
      %3733 = vmatpush.msra.mxu0 0.0
      %3734 = vmatpush.msra.mxu0 0.0
      %v3735 = vand.u32 %v1120, 4294901760
      %v3736 = vsub.f32 %v1120, %v3735
      %v3737 = vand.u32 %v3736, 4294901760
      %3738 = vmatpush.msra.mxu0 %v3737
      %v3739 = vand.u32 %v1116, 4294901760
      %v3740 = vsub.f32 %v1116, %v3739
      %v3741 = vand.u32 %v3740, 4294901760
      %3742 = vmatpush.msra.mxu0 %v3741
      %v3743 = vand.u32 %v3584, 4294901760
      %3744 = vmatmul.f32.gmra.mxu0 %v3743
      %v3745 = vpop.f32.mrf.mxu0
      %v3746 = vadd.f32 %v3713, %v3745
      %v3747 = vand.u32 %v3587, 4294901760
      %3748 = vmatmul.f32.gmra.mxu0 %v3747
      %v3749 = vpop.f32.mrf.mxu0
      %v3750 = vadd.f32 %v3719, %v3749
      %3751 = vdwg.mxu0
      %3752 = vmatpush.msra.mxu0 0.0
      %3753 = vmatpush.msra.mxu0 0.0
      %3754 = vmatpush.msra.mxu0 0.0
      %3755 = vmatpush.msra.mxu0 0.0
      %3756 = vmatpush.msra.mxu0 0.0
      %3757 = vmatpush.msra.mxu0 0.0
      %3758 = vmatpush.msra.mxu0 0.0
      %3759 = vmatpush.msra.mxu0 0.0
      %3760 = vmatpush.msra.mxu0 0.0
      %3761 = vmatpush.msra.mxu0 0.0
      %3762 = vmatpush.msra.mxu0 0.0
      %3763 = vmatpush.msra.mxu0 0.0
      %3764 = vmatpush.msra.mxu0 0.0
      %3765 = vmatpush.msra.mxu0 0.0
      %v3766 = vand.u32 %v1120, 4294901760
      %3767 = vmatpush.msra.mxu0 %v3766
      %v3768 = vand.u32 %v1116, 4294901760
      %3769 = vmatpush.msra.mxu0 %v3768
      %v3770 = vand.u32 %v3584, 4294901760
      %3771 = vmatmul.f32.gmra.mxu0 %v3770
      %v3772 = vpop.f32.mrf.mxu0
      %v3773 = vadd.f32 %v3746, %v3772
      %v3774 = vand.u32 %v3587, 4294901760
      %3775 = vmatmul.f32.gmra.mxu0 %v3774
      %v3776 = vpop.f32.mrf.mxu0
      %v3777 = vadd.f32 %v3750, %v3776
      %3778 = vdwg.mxu0
      %3780 = vrot.lane.b32.xlu0 %v3777, 120
      %v3781 = vpop.permute.xlu0 %3780
      %v3783 = vsub.f32 %v3773, %v3781
      %3784 = vrot.lane.b32.xlu0 %v3777, 8
      %v3785 = vpop.permute.xlu0 %3784
      %v3787 = vadd.f32 %v3773, %v3785
      %v3788 = vtanh.pop %v3783
      %v3789 = vand.u32 2147483647, %v3787
      %vm3790 = vcmp.le.f32.partialorder %v3789, 0.7853982
      %vm3791 = vcmp.lt.s32.totalorder %v3787, 0
      %v3792 = vand.u32 %v3787, 2139095040
      %v3793 = vshrl.u32 %v3792, 23
      %v3794 = vsub.s32 %v3793, 127
      %v3795 = vand.u32 2147483647, %v3787
      %v3796 = vand.u32 %v3795, 8388607
      %v3797 = vor.u32 %v3796, 8388608
      %v3798 = vsub.s32 0, %v3797
      %v3799 = vadd.s32 %v3794, 1
      %vm3800 = vcmp.gt.s32.totalorder %v3799, 0
      %v3801 = vsel %vm3800, %v3799, 0
      %v3802 = vshrl.u32 %v3801, 5
      %v3803 = vand.u32 %v3801, 31
      %v3804 = vsub.s32 32, %v3803
      %v3805 = vshrl.u32 683565275, %v3804
      %v3806 = vshll.u32 683565275, %v3803
      %v3807 = vshrl.u32 2475754826, %v3804
      %v3808 = vor.u32 %v3806, %v3807
      %v3809 = vshll.u32 2475754826, %v3803
      %v3810 = vshrl.u32 2131351028, %v3804
      %v3811 = vor.u32 %v3809, %v3810
      %v3812 = vshll.u32 2131351028, %v3803
      %v3813 = vshrl.u32 2102212464, %v3804
      %v3814 = vor.u32 %v3812, %v3813
      %v3815 = vshll.u32 2102212464, %v3803
      %v3816 = vshrl.u32 920167782, %v3804
      %v3817 = vor.u32 %v3815, %v3816
      %v3818 = vshll.u32 920167782, %v3803
      %v3819 = vshrl.u32 1326507024, %v3804
      %v3820 = vor.u32 %v3818, %v3819
      %vm3821 = vcmp.lt.s32.totalorder %v3802, 1
      %vm3822 = vcmp.lt.s32.totalorder %v3802, 2
      %vm3823 = vcmp.lt.s32.totalorder %v3802, 3
      %vm3824 = vcmp.lt.s32.totalorder %v3802, 4
      %v3825 = vsel %vm3821, %v3805, %v3808
      %v3826 = vsel %vm3824, %v3814, 2102212464
      %v3827 = vsel %vm3823, %v3811, %v3826
      %v3828 = vsel %vm3822, %v3825, %v3827
      %v3829 = vsel %vm3821, %v3808, %v3811
      %v3830 = vsel %vm3824, %v3817, 920167782
      %v3831 = vsel %vm3823, %v3814, %v3830
      %v3832 = vsel %vm3822, %v3829, %v3831
      %v3833 = vsel %vm3821, %v3811, %v3814
      %v3834 = vsel %vm3824, %v3820, 1326507024
      %v3835 = vsel %vm3823, %v3817, %v3834
      %v3836 = vsel %vm3822, %v3833, %v3835
      %v3837 = vshll.u32 %v3797, 8
      %v3838 = vand.u32 %v3837, 65535
      %v3839 = vshrl.u32 %v3837, 16
      %v3840 = vand.u32 %v3836, 65535
      %v3841 = vshrl.u32 %v3836, 16
      %v3842 = vmul.u32 %v3838, %v3840
      %v3843 = vmul.u32 %v3838, %v3841
      %v3844 = vmul.u32 %v3839, %v3840
      %v3845 = vmul.u32 %v3839, %v3841
      %v3846 = vshll.u32 %v3843, 16
      %v3847 = vshrl.u32 %v3843, 16
      %v3848 = vshll.u32 %v3844, 16
      %v3849 = vshrl.u32 %v3844, 16
      %vm3850 = vc.u32 %v3842, %v3846
      %v3851 = vsel %vm3850, 1, 0
      %v3852 = vadd.s32 %v3842, %v3846
      %v3853 = vadd.s32 %v3845, %v3851
      %vm3854 = vc.u32 %v3852, %v3848
      %v3855 = vsel %vm3854, 1, 0
      %v3856 = vadd.s32 %v3852, %v3848
      %v3857 = vadd.s32 %v3853, %v3855
      %v3858 = vadd.s32 %v3857, %v3847
      %v3859 = vadd.s32 %v3858, %v3849
      %v3860 = vand.u32 %v3837, 65535
      %v3861 = vshrl.u32 %v3837, 16
      %v3862 = vand.u32 %v3832, 65535
      %v3863 = vshrl.u32 %v3832, 16
      %v3864 = vmul.u32 %v3860, %v3862
      %v3865 = vmul.u32 %v3860, %v3863
      %v3866 = vmul.u32 %v3861, %v3862
      %v3867 = vmul.u32 %v3861, %v3863
      %v3868 = vshll.u32 %v3865, 16
      %v3869 = vshrl.u32 %v3865, 16
      %v3870 = vshll.u32 %v3866, 16
      %v3871 = vshrl.u32 %v3866, 16
      %vm3872 = vc.u32 %v3864, %v3868
      %v3873 = vsel %vm3872, 1, 0
      %v3874 = vadd.s32 %v3864, %v3868
      %v3875 = vadd.s32 %v3867, %v3873
      %vm3876 = vc.u32 %v3874, %v3870
      %v3877 = vsel %vm3876, 1, 0
      %v3878 = vadd.s32 %v3874, %v3870
      %v3879 = vadd.s32 %v3875, %v3877
      %v3880 = vadd.s32 %v3879, %v3869
      %v3881 = vadd.s32 %v3880, %v3871
      %v3882 = vmul.u32 %v3837, %v3828
      %v3883 = vadd.s32 %v3859, %v3878
      %vm3884 = vc.u32 %v3859, %v3878
      %v3885 = vadd.s32 %v3881, 1
      %v3886 = vsel %vm3884, %v3885, %v3881
      %v3887 = vadd.s32 %v3882, %v3886
      %v3888 = vadd.s32 %v3887, 536870912
      %v3889 = vshrl.u32 %v3888, 30
      %v3890 = vshll.u32 %v3889, 30
      %v3891 = vsub.s32 %v3887, %v3890
      %vm3892 = vcmp.lt.s32.totalorder %v3891, 0
      %v3893 = vsub.s32 0, %v3891
      %v3894 = vsel %vm3892, %v3893, %v3891
      %v3895 = vclz %v3894
      %v3896 = vsub.s32 %v3895, 2
      %vm3897 = vcmp.gt.s32.totalorder 0, %v3896
      %v3898 = vsel %vm3897, 0, %v3896
      %v3899 = vsub.s32 32, %v3898
      %v3900 = vshll.u32 %v3891, %v3898
      %v3901 = vshrl.u32 %v3883, %v3899
      %v3902 = vor.u32 %v3900, %v3901
      %v3903 = vsub.s32 4294967266, %v3898
      %v3904 = vadd.s32 %v3903, 127
      %v3905 = vshll.u32 %v3904, 23
      %v3906 = vor.u32 4788187, %v3905
      %v3907 = vand.u32 2147483647, %v3906
      %v3909 = vcvt.s32.f32 %v3902
      %v3910 = vmul.f32 %v3909, %v3907
      %v3911 = vxor.u32 %v3910, 2147483648
      %v3912 = vsel %vm3791, %v3911, %v3910
      %v3913 = vsub.s32 4, %v3889
      %v3914 = vsel %vm3791, %v3913, %v3889
      %v3915 = vsel %vm3790, %v3787, %v3912
      %v3916 = vsel %vm3790, 0, %v3914
      %v3917 = vmul.f32 %v3915, %v3915
      %v3918 = vmul.f32 %v3917, -0.001358992
      %v3919 = vadd.f32 %v3918, 0.041655596
      %v3920 = vmul.f32 %v3917, %v3919
      %v3921 = vadd.f32 %v3920, -0.4999988
      %v3922 = vmul.f32 %v3917, %v3921
      %v3923 = vadd.f32 1.0, %v3922
      %v3924 = vmul.f32 %v3915, %v3915
      %v3925 = vmul.f32 %v3924, -0.00019511016
      %v3926 = vadd.f32 %v3925, 0.008332121
      %v3927 = vmul.f32 %v3924, %v3926
      %v3928 = vadd.f32 %v3927, -0.16666654
      %v3929 = vmul.f32 %v3924, %v3928
      %v3930 = vadd.f32 %v3929, 1.0
      %v3931 = vmul.f32 %v3930, %v3915
      %vm3932 = vweird.f32 %v3787
      %v3933 = vand.u32 %v3916, 3
      %vm3934 = vcmp.lt.s32.totalorder %v3933, 2
      %vm3935 = vcmp.eq.s32.totalorder %v3933, 0
      %v3936 = vxor.u32 %v3931, 2147483648
      %v3937 = vsel %vm3935, %v3923, %v3936
      %vm3938 = vcmp.eq.s32.totalorder %v3933, 2
      %v3939 = vxor.u32 %v3923, 2147483648
      %v3940 = vsel %vm3938, %v3939, %v3931
      %v3941 = vsel %vm3934, %v3937, %v3940
      %v3942 = vsel %vm3932, nan, %v3941
      %v3943 = vand.u32 2147483647, %v3787
      %vm3944 = vcmp.le.f32.partialorder %v3943, 0.7853982
      %vm3945 = vcmp.lt.s32.totalorder %v3787, 0
      %v3946 = vand.u32 %v3787, 2139095040
      %v3947 = vshrl.u32 %v3946, 23
      %v3948 = vsub.s32 %v3947, 127
      %v3949 = vand.u32 2147483647, %v3787
      %v3950 = vand.u32 %v3949, 8388607
      %v3951 = vor.u32 %v3950, 8388608
      %v3952 = vsub.s32 0, %v3951
      %v3953 = vadd.s32 %v3948, 1
      %vm3954 = vcmp.gt.s32.totalorder %v3953, 0
      %v3955 = vsel %vm3954, %v3953, 0
      %v3956 = vshrl.u32 %v3955, 5
      %v3957 = vand.u32 %v3955, 31
      %v3958 = vsub.s32 32, %v3957
      %v3959 = vshrl.u32 683565275, %v3958
      %v3960 = vshll.u32 683565275, %v3957
      %v3961 = vshrl.u32 2475754826, %v3958
      %v3962 = vor.u32 %v3960, %v3961
      %v3963 = vshll.u32 2475754826, %v3957
      %v3964 = vshrl.u32 2131351028, %v3958
      %v3965 = vor.u32 %v3963, %v3964
      %v3966 = vshll.u32 2131351028, %v3957
      %v3967 = vshrl.u32 2102212464, %v3958
      %v3968 = vor.u32 %v3966, %v3967
      %v3969 = vshll.u32 2102212464, %v3957
      %v3970 = vshrl.u32 920167782, %v3958
      %v3971 = vor.u32 %v3969, %v3970
      %v3972 = vshll.u32 920167782, %v3957
      %v3973 = vshrl.u32 1326507024, %v3958
      %v3974 = vor.u32 %v3972, %v3973
      %vm3975 = vcmp.lt.s32.totalorder %v3956, 1
      %vm3976 = vcmp.lt.s32.totalorder %v3956, 2
      %vm3977 = vcmp.lt.s32.totalorder %v3956, 3
      %vm3978 = vcmp.lt.s32.totalorder %v3956, 4
      %v3979 = vsel %vm3975, %v3959, %v3962
      %v3980 = vsel %vm3978, %v3968, 2102212464
      %v3981 = vsel %vm3977, %v3965, %v3980
      %v3982 = vsel %vm3976, %v3979, %v3981
      %v3983 = vsel %vm3975, %v3962, %v3965
      %v3984 = vsel %vm3978, %v3971, 920167782
      %v3985 = vsel %vm3977, %v3968, %v3984
      %v3986 = vsel %vm3976, %v3983, %v3985
      %v3987 = vsel %vm3975, %v3965, %v3968
      %v3988 = vsel %vm3978, %v3974, 1326507024
      %v3989 = vsel %vm3977, %v3971, %v3988
      %v3990 = vsel %vm3976, %v3987, %v3989
      %v3991 = vshll.u32 %v3951, 8
      %v3992 = vand.u32 %v3991, 65535
      %v3993 = vshrl.u32 %v3991, 16
      %v3994 = vand.u32 %v3990, 65535
      %v3995 = vshrl.u32 %v3990, 16
      %v3996 = vmul.u32 %v3992, %v3994
      %v3997 = vmul.u32 %v3992, %v3995
      %v3998 = vmul.u32 %v3993, %v3994
      %v3999 = vmul.u32 %v3993, %v3995
      %v4000 = vshll.u32 %v3997, 16
      %v4001 = vshrl.u32 %v3997, 16
      %v4002 = vshll.u32 %v3998, 16
      %v4003 = vshrl.u32 %v3998, 16
      %vm4004 = vc.u32 %v3996, %v4000
      %v4005 = vsel %vm4004, 1, 0
      %v4006 = vadd.s32 %v3996, %v4000
      %v4007 = vadd.s32 %v3999, %v4005
      %vm4008 = vc.u32 %v4006, %v4002
      %v4009 = vsel %vm4008, 1, 0
      %v4010 = vadd.s32 %v4006, %v4002
      %v4011 = vadd.s32 %v4007, %v4009
      %v4012 = vadd.s32 %v4011, %v4001
      %v4013 = vadd.s32 %v4012, %v4003
      %v4014 = vand.u32 %v3991, 65535
      %v4015 = vshrl.u32 %v3991, 16
      %v4016 = vand.u32 %v3986, 65535
      %v4017 = vshrl.u32 %v3986, 16
      %v4018 = vmul.u32 %v4014, %v4016
      %v4019 = vmul.u32 %v4014, %v4017
      %v4020 = vmul.u32 %v4015, %v4016
      %v4021 = vmul.u32 %v4015, %v4017
      %v4022 = vshll.u32 %v4019, 16
      %v4023 = vshrl.u32 %v4019, 16
      %v4024 = vshll.u32 %v4020, 16
      %v4025 = vshrl.u32 %v4020, 16
      %vm4026 = vc.u32 %v4018, %v4022
      %v4027 = vsel %vm4026, 1, 0
      %v4028 = vadd.s32 %v4018, %v4022
      %v4029 = vadd.s32 %v4021, %v4027
      %vm4030 = vc.u32 %v4028, %v4024
      %v4031 = vsel %vm4030, 1, 0
      %v4032 = vadd.s32 %v4028, %v4024
      %v4033 = vadd.s32 %v4029, %v4031
      %v4034 = vadd.s32 %v4033, %v4023
      %v4035 = vadd.s32 %v4034, %v4025
      %v4036 = vmul.u32 %v3991, %v3982
      %v4037 = vadd.s32 %v4013, %v4032
      %vm4038 = vc.u32 %v4013, %v4032
      %v4039 = vadd.s32 %v4035, 1
      %v4040 = vsel %vm4038, %v4039, %v4035
      %v4041 = vadd.s32 %v4036, %v4040
      %v4042 = vadd.s32 %v4041, 536870912
      %v4043 = vshrl.u32 %v4042, 30
      %v4044 = vshll.u32 %v4043, 30
      %v4045 = vsub.s32 %v4041, %v4044
      %vm4046 = vcmp.lt.s32.totalorder %v4045, 0
      %v4047 = vsub.s32 0, %v4045
      %v4048 = vsel %vm4046, %v4047, %v4045
      %v4049 = vclz %v4048
      %v4050 = vsub.s32 %v4049, 2
      %vm4051 = vcmp.gt.s32.totalorder 0, %v4050
      %v4052 = vsel %vm4051, 0, %v4050
      %v4053 = vsub.s32 32, %v4052
      %v4054 = vshll.u32 %v4045, %v4052
      %v4055 = vshrl.u32 %v4037, %v4053
      %v4056 = vor.u32 %v4054, %v4055
      %v4057 = vsub.s32 4294967266, %v4052
      %v4058 = vadd.s32 %v4057, 127
      %v4059 = vshll.u32 %v4058, 23
      %v4060 = vor.u32 4788187, %v4059
      %v4061 = vand.u32 2147483647, %v4060
      %v4063 = vcvt.s32.f32 %v4056
      %v4064 = vmul.f32 %v4063, %v4061
      %v4065 = vxor.u32 %v4064, 2147483648
      %v4066 = vsel %vm3945, %v4065, %v4064
      %v4067 = vsub.s32 4, %v4043
      %v4068 = vsel %vm3945, %v4067, %v4043
      %v4069 = vsel %vm3944, %v3787, %v4066
      %v4070 = vsel %vm3944, 0, %v4068
      %v4071 = vmul.f32 %v4069, %v4069
      %v4072 = vmul.f32 %v4071, -0.001358992
      %v4073 = vadd.f32 %v4072, 0.041655596
      %v4074 = vmul.f32 %v4071, %v4073
      %v4075 = vadd.f32 %v4074, -0.4999988
      %v4076 = vmul.f32 %v4071, %v4075
      %v4077 = vadd.f32 1.0, %v4076
      %v4078 = vmul.f32 %v4069, %v4069
      %v4079 = vmul.f32 %v4078, -0.00019511016
      %v4080 = vadd.f32 %v4079, 0.008332121
      %v4081 = vmul.f32 %v4078, %v4080
      %v4082 = vadd.f32 %v4081, -0.16666654
      %v4083 = vmul.f32 %v4078, %v4082
      %v4084 = vadd.f32 %v4083, 1.0
      %v4085 = vmul.f32 %v4084, %v4069
      %vm4086 = vweird.f32 %v3787
      %v4087 = vadd.s32 %v4070, 3
      %v4088 = vand.u32 %v4087, 3
      %vm4089 = vcmp.lt.s32.totalorder %v4088, 2
      %vm4090 = vcmp.eq.s32.totalorder %v4088, 0
      %v4091 = vxor.u32 %v4085, 2147483648
      %v4092 = vsel %vm4090, %v4077, %v4091
      %vm4093 = vcmp.eq.s32.totalorder %v4088, 2
      %v4094 = vxor.u32 %v4077, 2147483648
      %v4095 = vsel %vm4093, %v4094, %v4085
      %v4096 = vsel %vm4089, %v4092, %v4095
      %v4097 = vsel %vm4086, nan, %v4096
      %v4098 = vmul.f32 %v3788, %v3788
      %v4099 = vsub.f32 1.0, %v4098
      %v4100 = vmul.f32 %v3942, %v3942
      %4102 = vrot.lane.b32.xlu0 %v4099, 8
      %v4103 = vpop.permute.xlu0 %4102
      %v4105 = vmul.f32 %v4100, %v4103
      %4107 = vrot.lane.b32.xlu0 %v4105, 120
      %v4108 = vpop.permute.xlu0 %4107
      %v4110 = vadd.f32 %v4098, %v4108
      %v4111 = vrcp.pop %v4110
      %v4112 = vmul.f32 %v4110, %v4111
      %v4113 = vsub.f32 1.0, %v4112
      %v4114 = vmul.f32 %v4111, %v4113
      %v4115 = vadd.f32 %v4111, %v4114
      %vm4116 = vweird.f32 %v4110
      %vm4117 = vweird.f32 %v4111
      %vm4118 = vmor %vm4116, %vm4117
      %v4119 = vsel %vm4118, %v4111, %v4115
      %v4120 = vand.u32 2147483647, %v4110
      %vm4121 = vcmp.eq.f32.partialorder %v4120, 8.507059e+37
      %v4122 = vand.u32 %v4110, 2147483648
      %v4123 = vor.u32 1.1754944e-38, %v4122
      %v4124 = vsel %vm4121, %v4123, %v4119
      %v4125 = vmul.f32 %v3788, %v4124
      %v4126 = vmul.f32 %v4097, %v3942
      %v4127 = vmul.f32 %v4126, %v4103
      %4129 = vrot.lane.b32.xlu0 %v4110, 8
      %v4130 = vpop.permute.xlu0 %4129
      %v4132 = vrcp.pop %v4130
      %v4133 = vmul.f32 %v4130, %v4132
      %v4134 = vsub.f32 1.0, %v4133
      %v4135 = vmul.f32 %v4132, %v4134
      %v4136 = vadd.f32 %v4132, %v4135
      %vm4137 = vweird.f32 %v4130
      %vm4138 = vweird.f32 %v4132
      %vm4139 = vmor %vm4137, %vm4138
      %v4140 = vsel %vm4139, %v4132, %v4136
      %v4141 = vand.u32 2147483647, %v4130
      %vm4142 = vcmp.eq.f32.partialorder %v4141, 8.507059e+37
      %v4143 = vand.u32 %v4130, 2147483648
      %v4144 = vor.u32 1.1754944e-38, %v4143
      %v4145 = vsel %vm4142, %v4144, %v4140
      %v4146 = vmul.f32 %v4127, %v4145
      %v4147 = vsub.f32 0.0, %v4146
      %v4148 = vsel %vm1720, %v4125, %v4147
      %4150 = vrot.lane.b32.xlu0 %v4146, 120
      %v4151 = vpop.permute.xlu0 %4150
      %4154 = vrot.lane.b32.xlu0 %v4125, 8
      %v4155 = vpop.permute.xlu0 %4154
      %v4157 = vsel %vm1720, %v4151, %v4155
      %v4159 = vsel %vm1154, %v1116, 0
      %v4162 = vsel %vm1154, %v1120, 0
      %v4165 = vsel %vm1154, %v4148, 0
      %v4168 = vsel %vm1154, %v4157, 0
      %4170 = vmatpush.xpose.msra.mxu0 0.0
      %4171 = vmatpush.xpose.msra.mxu0 0.0
      %4172 = vmatpush.xpose.msra.mxu0 0.0
      %4173 = vmatpush.xpose.msra.mxu0 0.0
      %4174 = vmatpush.xpose.msra.mxu0 0.0
      %4175 = vmatpush.xpose.msra.mxu0 0.0
      %4176 = vmatpush.xpose.msra.mxu0 0.0
      %4177 = vmatpush.xpose.msra.mxu0 0.0
      %4178 = vmatpush.xpose.msra.mxu0 0.0
      %4179 = vmatpush.xpose.msra.mxu0 0.0
      %4180 = vmatpush.xpose.msra.mxu0 0.0
      %4181 = vmatpush.xpose.msra.mxu0 0.0
      %4182 = vmatpush.xpose.msra.mxu0 0.0
      %4183 = vmatpush.xpose.msra.mxu0 0.0
      %v4184 = vand.u32 %v4168, 4294901760
      %4185 = vmatpush.xpose.msra.mxu0 %v4184
      %v4186 = vand.u32 %v4165, 4294901760
      %4187 = vmatpush.xpose.msra.mxu0 %v4186
      %v4188 = vand.u32 %v4159, 4294901760
      %v4189 = vsub.f32 %v4159, %v4188
      %v4190 = vand.u32 %v4189, 4294901760
      %v4191 = vsub.f32 %v4189, %v4190
      %v4192 = vand.u32 %v4191, 4294901760
      %4193 = vmatmul.f32.gmra.mxu0 %v4192
      %v4194 = vpop.f32.mrf.mxu0
      %v4195 = vadd.f32 0.0, %v4194
      %v4196 = vand.u32 %v4162, 4294901760
      %v4197 = vsub.f32 %v4162, %v4196
      %v4198 = vand.u32 %v4197, 4294901760
      %v4199 = vsub.f32 %v4197, %v4198
      %v4200 = vand.u32 %v4199, 4294901760
      %4201 = vmatmul.f32.gmra.mxu0 %v4200
      %v4202 = vpop.f32.mrf.mxu0
      %v4203 = vadd.f32 0.0, %v4202
      %4204 = vdwg.mxu0
      %4205 = vmatpush.xpose.msra.mxu0 0.0
      %4206 = vmatpush.xpose.msra.mxu0 0.0
      %4207 = vmatpush.xpose.msra.mxu0 0.0
      %4208 = vmatpush.xpose.msra.mxu0 0.0
      %4209 = vmatpush.xpose.msra.mxu0 0.0
      %4210 = vmatpush.xpose.msra.mxu0 0.0
      %4211 = vmatpush.xpose.msra.mxu0 0.0
      %4212 = vmatpush.xpose.msra.mxu0 0.0
      %4213 = vmatpush.xpose.msra.mxu0 0.0
      %4214 = vmatpush.xpose.msra.mxu0 0.0
      %4215 = vmatpush.xpose.msra.mxu0 0.0
      %4216 = vmatpush.xpose.msra.mxu0 0.0
      %4217 = vmatpush.xpose.msra.mxu0 0.0
      %4218 = vmatpush.xpose.msra.mxu0 0.0
      %v4219 = vand.u32 %v4168, 4294901760
      %v4220 = vsub.f32 %v4168, %v4219
      %v4221 = vand.u32 %v4220, 4294901760
      %v4222 = vsub.f32 %v4220, %v4221
      %v4223 = vand.u32 %v4222, 4294901760
      %4224 = vmatpush.xpose.msra.mxu0 %v4223
      %v4225 = vand.u32 %v4165, 4294901760
      %v4226 = vsub.f32 %v4165, %v4225
      %v4227 = vand.u32 %v4226, 4294901760
      %v4228 = vsub.f32 %v4226, %v4227
      %v4229 = vand.u32 %v4228, 4294901760
      %4230 = vmatpush.xpose.msra.mxu0 %v4229
      %v4231 = vand.u32 %v4159, 4294901760
      %4232 = vmatmul.f32.gmra.mxu0 %v4231
      %v4233 = vpop.f32.mrf.mxu0
      %v4234 = vadd.f32 %v4195, %v4233
      %v4235 = vand.u32 %v4162, 4294901760
      %4236 = vmatmul.f32.gmra.mxu0 %v4235
      %v4237 = vpop.f32.mrf.mxu0
      %v4238 = vadd.f32 %v4203, %v4237
      %4239 = vdwg.mxu0
      %4240 = vmatpush.xpose.msra.mxu0 0.0
      %4241 = vmatpush.xpose.msra.mxu0 0.0
      %4242 = vmatpush.xpose.msra.mxu0 0.0
      %4243 = vmatpush.xpose.msra.mxu0 0.0
      %4244 = vmatpush.xpose.msra.mxu0 0.0
      %4245 = vmatpush.xpose.msra.mxu0 0.0
      %4246 = vmatpush.xpose.msra.mxu0 0.0
      %4247 = vmatpush.xpose.msra.mxu0 0.0
      %4248 = vmatpush.xpose.msra.mxu0 0.0
      %4249 = vmatpush.xpose.msra.mxu0 0.0
      %4250 = vmatpush.xpose.msra.mxu0 0.0
      %4251 = vmatpush.xpose.msra.mxu0 0.0
      %4252 = vmatpush.xpose.msra.mxu0 0.0
      %4253 = vmatpush.xpose.msra.mxu0 0.0
      %v4254 = vand.u32 %v4168, 4294901760
      %v4255 = vsub.f32 %v4168, %v4254
      %4256 = vmatpush.xpose.msra.mxu0 %v4255
      %v4257 = vand.u32 %v4165, 4294901760
      %v4258 = vsub.f32 %v4165, %v4257
      %4259 = vmatpush.xpose.msra.mxu0 %v4258
      %v4260 = vand.u32 %v4159, 4294901760
      %v4261 = vsub.f32 %v4159, %v4260
      %4262 = vmatmul.f32.gmra.mxu0 %v4261
      %v4263 = vpop.f32.mrf.mxu0
      %v4264 = vadd.f32 %v4234, %v4263
      %v4265 = vand.u32 %v4162, 4294901760
      %v4266 = vsub.f32 %v4162, %v4265
      %4267 = vmatmul.f32.gmra.mxu0 %v4266
      %v4268 = vpop.f32.mrf.mxu0
      %v4269 = vadd.f32 %v4238, %v4268
      %4270 = vdwg.mxu0
      %4271 = vmatpush.xpose.msra.mxu0 0.0
      %4272 = vmatpush.xpose.msra.mxu0 0.0
      %4273 = vmatpush.xpose.msra.mxu0 0.0
      %4274 = vmatpush.xpose.msra.mxu0 0.0
      %4275 = vmatpush.xpose.msra.mxu0 0.0
      %4276 = vmatpush.xpose.msra.mxu0 0.0
      %4277 = vmatpush.xpose.msra.mxu0 0.0
      %4278 = vmatpush.xpose.msra.mxu0 0.0
      %4279 = vmatpush.xpose.msra.mxu0 0.0
      %4280 = vmatpush.xpose.msra.mxu0 0.0
      %4281 = vmatpush.xpose.msra.mxu0 0.0
      %4282 = vmatpush.xpose.msra.mxu0 0.0
      %4283 = vmatpush.xpose.msra.mxu0 0.0
      %4284 = vmatpush.xpose.msra.mxu0 0.0
      %v4285 = vand.u32 %v4168, 4294901760
      %4286 = vmatpush.xpose.msra.mxu0 %v4285
      %v4287 = vand.u32 %v4165, 4294901760
      %4288 = vmatpush.xpose.msra.mxu0 %v4287
      %v4289 = vand.u32 %v4159, 4294901760
      %v4290 = vsub.f32 %v4159, %v4289
      %v4291 = vand.u32 %v4290, 4294901760
      %4292 = vmatmul.f32.gmra.mxu0 %v4291
      %v4293 = vpop.f32.mrf.mxu0
      %v4294 = vadd.f32 %v4264, %v4293
      %v4295 = vand.u32 %v4162, 4294901760
      %v4296 = vsub.f32 %v4162, %v4295
      %v4297 = vand.u32 %v4296, 4294901760
      %4298 = vmatmul.f32.gmra.mxu0 %v4297
      %v4299 = vpop.f32.mrf.mxu0
      %v4300 = vadd.f32 %v4269, %v4299
      %4301 = vdwg.mxu0
      %4302 = vmatpush.xpose.msra.mxu0 0.0
      %4303 = vmatpush.xpose.msra.mxu0 0.0
      %4304 = vmatpush.xpose.msra.mxu0 0.0
      %4305 = vmatpush.xpose.msra.mxu0 0.0
      %4306 = vmatpush.xpose.msra.mxu0 0.0
      %4307 = vmatpush.xpose.msra.mxu0 0.0
      %4308 = vmatpush.xpose.msra.mxu0 0.0
      %4309 = vmatpush.xpose.msra.mxu0 0.0
      %4310 = vmatpush.xpose.msra.mxu0 0.0
      %4311 = vmatpush.xpose.msra.mxu0 0.0
      %4312 = vmatpush.xpose.msra.mxu0 0.0
      %4313 = vmatpush.xpose.msra.mxu0 0.0
      %4314 = vmatpush.xpose.msra.mxu0 0.0
      %4315 = vmatpush.xpose.msra.mxu0 0.0
      %v4316 = vand.u32 %v4168, 4294901760
      %v4317 = vsub.f32 %v4168, %v4316
      %v4318 = vand.u32 %v4317, 4294901760
      %4319 = vmatpush.xpose.msra.mxu0 %v4318
      %v4320 = vand.u32 %v4165, 4294901760
      %v4321 = vsub.f32 %v4165, %v4320
      %v4322 = vand.u32 %v4321, 4294901760
      %4323 = vmatpush.xpose.msra.mxu0 %v4322
      %v4324 = vand.u32 %v4159, 4294901760
      %4325 = vmatmul.f32.gmra.mxu0 %v4324
      %v4326 = vpop.f32.mrf.mxu0
      %v4327 = vadd.f32 %v4294, %v4326
      %v4328 = vand.u32 %v4162, 4294901760
      %4329 = vmatmul.f32.gmra.mxu0 %v4328
      %v4330 = vpop.f32.mrf.mxu0
      %v4331 = vadd.f32 %v4300, %v4330
      %4332 = vdwg.mxu0
      %4333 = vmatpush.xpose.msra.mxu0 0.0
      %4334 = vmatpush.xpose.msra.mxu0 0.0
      %4335 = vmatpush.xpose.msra.mxu0 0.0
      %4336 = vmatpush.xpose.msra.mxu0 0.0
      %4337 = vmatpush.xpose.msra.mxu0 0.0
      %4338 = vmatpush.xpose.msra.mxu0 0.0
      %4339 = vmatpush.xpose.msra.mxu0 0.0
      %4340 = vmatpush.xpose.msra.mxu0 0.0
      %4341 = vmatpush.xpose.msra.mxu0 0.0
      %4342 = vmatpush.xpose.msra.mxu0 0.0
      %4343 = vmatpush.xpose.msra.mxu0 0.0
      %4344 = vmatpush.xpose.msra.mxu0 0.0
      %4345 = vmatpush.xpose.msra.mxu0 0.0
      %4346 = vmatpush.xpose.msra.mxu0 0.0
      %v4347 = vand.u32 %v4168, 4294901760
      %4348 = vmatpush.xpose.msra.mxu0 %v4347
      %v4349 = vand.u32 %v4165, 4294901760
      %4350 = vmatpush.xpose.msra.mxu0 %v4349
      %v4351 = vand.u32 %v4159, 4294901760
      %4352 = vmatmul.f32.gmra.mxu0 %v4351
      %v4353 = vpop.f32.mrf.mxu0
      %v4354 = vadd.f32 %v4327, %v4353
      %v4355 = vand.u32 %v4162, 4294901760
      %4356 = vmatmul.f32.gmra.mxu0 %v4355
      %v4357 = vpop.f32.mrf.mxu0
      %v4358 = vadd.f32 %v4331, %v4357
      %4359 = vdwg.mxu0
      %v4360 = vld [vmem:[%s4] sm:$0xff]
      %v4361 = vld [vmem:[%s4 + $0x8] sm:$0xff]
      %v4363 = vsel %vm1154, %v1927, 0
      %v4366 = vsel %vm1154, %v1931, 0
      %v4369 = vsel %vm1154, %v2736, 0
      %v4372 = vsel %vm1154, %v2740, 0
      %v4375 = vsel %vm1154, %v3545, 0
      %v4378 = vsel %vm1154, %v3549, 0
      %v4381 = vsel %vm1154, %v4354, 0
      %v4384 = vsel %vm1154, %v4358, 0
      %4386 = vmatpush.msra.mxu0 0.0
      %4387 = vmatpush.msra.mxu0 0.0
      %4388 = vmatpush.msra.mxu0 0.0
      %4389 = vmatpush.msra.mxu0 0.0
      %4390 = vmatpush.msra.mxu0 0.0
      %4391 = vmatpush.msra.mxu0 0.0
      %4392 = vmatpush.msra.mxu0 0.0
      %4393 = vmatpush.msra.mxu0 0.0
      %4394 = vmatpush.msra.mxu0 0.0
      %4395 = vmatpush.msra.mxu0 0.0
      %4396 = vmatpush.msra.mxu0 0.0
      %4397 = vmatpush.msra.mxu0 0.0
      %4398 = vmatpush.msra.mxu0 0.0
      %4399 = vmatpush.msra.mxu0 0.0
      %v4400 = vand.u32 %v4361, 4294901760
      %4401 = vmatpush.msra.mxu0 %v4400
      %v4402 = vand.u32 %v4360, 4294901760
      %4403 = vmatpush.msra.mxu0 %v4402
      %v4404 = vand.u32 %v4363, 4294901760
      %v4405 = vsub.f32 %v4363, %v4404
      %v4406 = vand.u32 %v4405, 4294901760
      %v4407 = vsub.f32 %v4405, %v4406
      %v4408 = vand.u32 %v4407, 4294901760
      %4409 = vmatmul.f32.gmra.mxu0 %v4408
      %v4410 = vpop.f32.mrf.mxu0
      %v4411 = vadd.f32 0.0, %v4410
      %v4412 = vand.u32 %v4366, 4294901760
      %v4413 = vsub.f32 %v4366, %v4412
      %v4414 = vand.u32 %v4413, 4294901760
      %v4415 = vsub.f32 %v4413, %v4414
      %v4416 = vand.u32 %v4415, 4294901760
      %4417 = vmatmul.f32.gmra.mxu0 %v4416
      %v4418 = vpop.f32.mrf.mxu0
      %v4419 = vadd.f32 0.0, %v4418
      %v4420 = vand.u32 %v4369, 4294901760
      %v4421 = vsub.f32 %v4369, %v4420
      %v4422 = vand.u32 %v4421, 4294901760
      %v4423 = vsub.f32 %v4421, %v4422
      %v4424 = vand.u32 %v4423, 4294901760
      %4425 = vmatmul.f32.gmra.mxu0 %v4424
      %v4426 = vpop.f32.mrf.mxu0
      %v4427 = vadd.f32 0.0, %v4426
      %v4428 = vand.u32 %v4372, 4294901760
      %v4429 = vsub.f32 %v4372, %v4428
      %v4430 = vand.u32 %v4429, 4294901760
      %v4431 = vsub.f32 %v4429, %v4430
      %v4432 = vand.u32 %v4431, 4294901760
      %4433 = vmatmul.f32.gmra.mxu0 %v4432
      %v4434 = vpop.f32.mrf.mxu0
      %v4435 = vadd.f32 0.0, %v4434
      %v4436 = vand.u32 %v4375, 4294901760
      %v4437 = vsub.f32 %v4375, %v4436
      %v4438 = vand.u32 %v4437, 4294901760
      %v4439 = vsub.f32 %v4437, %v4438
      %v4440 = vand.u32 %v4439, 4294901760
      %4441 = vmatmul.f32.gmra.mxu0 %v4440
      %v4442 = vpop.f32.mrf.mxu0
      %v4443 = vadd.f32 0.0, %v4442
      %v4444 = vand.u32 %v4378, 4294901760
      %v4445 = vsub.f32 %v4378, %v4444
      %v4446 = vand.u32 %v4445, 4294901760
      %v4447 = vsub.f32 %v4445, %v4446
      %v4448 = vand.u32 %v4447, 4294901760
      %4449 = vmatmul.f32.gmra.mxu0 %v4448
      %v4450 = vpop.f32.mrf.mxu0
      %v4451 = vadd.f32 0.0, %v4450
      %v4452 = vand.u32 %v4381, 4294901760
      %v4453 = vsub.f32 %v4381, %v4452
      %v4454 = vand.u32 %v4453, 4294901760
      %v4455 = vsub.f32 %v4453, %v4454
      %v4456 = vand.u32 %v4455, 4294901760
      %4457 = vmatmul.f32.gmra.mxu0 %v4456
      %v4458 = vpop.f32.mrf.mxu0
      %v4459 = vadd.f32 0.0, %v4458
      %v4460 = vand.u32 %v4384, 4294901760
      %v4461 = vsub.f32 %v4384, %v4460
      %v4462 = vand.u32 %v4461, 4294901760
      %v4463 = vsub.f32 %v4461, %v4462
      %v4464 = vand.u32 %v4463, 4294901760
      %4465 = vmatmul.f32.gmra.mxu0 %v4464
      %v4466 = vpop.f32.mrf.mxu0
      %v4467 = vadd.f32 0.0, %v4466
      %4468 = vdwg.mxu0
      %4469 = vmatpush.msra.mxu0 0.0
      %4470 = vmatpush.msra.mxu0 0.0
      %4471 = vmatpush.msra.mxu0 0.0
      %4472 = vmatpush.msra.mxu0 0.0
      %4473 = vmatpush.msra.mxu0 0.0
      %4474 = vmatpush.msra.mxu0 0.0
      %4475 = vmatpush.msra.mxu0 0.0
      %4476 = vmatpush.msra.mxu0 0.0
      %4477 = vmatpush.msra.mxu0 0.0
      %4478 = vmatpush.msra.mxu0 0.0
      %4479 = vmatpush.msra.mxu0 0.0
      %4480 = vmatpush.msra.mxu0 0.0
      %4481 = vmatpush.msra.mxu0 0.0
      %4482 = vmatpush.msra.mxu0 0.0
      %v4483 = vand.u32 %v4361, 4294901760
      %v4484 = vsub.f32 %v4361, %v4483
      %v4485 = vand.u32 %v4484, 4294901760
      %v4486 = vsub.f32 %v4484, %v4485
      %v4487 = vand.u32 %v4486, 4294901760
      %4488 = vmatpush.msra.mxu0 %v4487
      %v4489 = vand.u32 %v4360, 4294901760
      %v4490 = vsub.f32 %v4360, %v4489
      %v4491 = vand.u32 %v4490, 4294901760
      %v4492 = vsub.f32 %v4490, %v4491
      %v4493 = vand.u32 %v4492, 4294901760
      %4494 = vmatpush.msra.mxu0 %v4493
      %v4495 = vand.u32 %v4363, 4294901760
      %4496 = vmatmul.f32.gmra.mxu0 %v4495
      %v4497 = vpop.f32.mrf.mxu0
      %v4498 = vadd.f32 %v4411, %v4497
      %v4499 = vand.u32 %v4366, 4294901760
      %4500 = vmatmul.f32.gmra.mxu0 %v4499
      %v4501 = vpop.f32.mrf.mxu0
      %v4502 = vadd.f32 %v4419, %v4501
      %v4503 = vand.u32 %v4369, 4294901760
      %4504 = vmatmul.f32.gmra.mxu0 %v4503
      %v4505 = vpop.f32.mrf.mxu0
      %v4506 = vadd.f32 %v4427, %v4505
      %v4507 = vand.u32 %v4372, 4294901760
      %4508 = vmatmul.f32.gmra.mxu0 %v4507
      %v4509 = vpop.f32.mrf.mxu0
      %v4510 = vadd.f32 %v4435, %v4509
      %v4511 = vand.u32 %v4375, 4294901760
      %4512 = vmatmul.f32.gmra.mxu0 %v4511
      %v4513 = vpop.f32.mrf.mxu0
      %v4514 = vadd.f32 %v4443, %v4513
      %v4515 = vand.u32 %v4378, 4294901760
      %4516 = vmatmul.f32.gmra.mxu0 %v4515
      %v4517 = vpop.f32.mrf.mxu0
      %v4518 = vadd.f32 %v4451, %v4517
      %v4519 = vand.u32 %v4381, 4294901760
      %4520 = vmatmul.f32.gmra.mxu0 %v4519
      %v4521 = vpop.f32.mrf.mxu0
      %v4522 = vadd.f32 %v4459, %v4521
      %v4523 = vand.u32 %v4384, 4294901760
      %4524 = vmatmul.f32.gmra.mxu0 %v4523
      %v4525 = vpop.f32.mrf.mxu0
      %v4526 = vadd.f32 %v4467, %v4525
      %4527 = vdwg.mxu0
      %4528 = vmatpush.msra.mxu0 0.0
      %4529 = vmatpush.msra.mxu0 0.0
      %4530 = vmatpush.msra.mxu0 0.0
      %4531 = vmatpush.msra.mxu0 0.0
      %4532 = vmatpush.msra.mxu0 0.0
      %4533 = vmatpush.msra.mxu0 0.0
      %4534 = vmatpush.msra.mxu0 0.0
      %4535 = vmatpush.msra.mxu0 0.0
      %4536 = vmatpush.msra.mxu0 0.0
      %4537 = vmatpush.msra.mxu0 0.0
      %4538 = vmatpush.msra.mxu0 0.0
      %4539 = vmatpush.msra.mxu0 0.0
      %4540 = vmatpush.msra.mxu0 0.0
      %4541 = vmatpush.msra.mxu0 0.0
      %v4542 = vand.u32 %v4361, 4294901760
      %v4543 = vsub.f32 %v4361, %v4542
      %4544 = vmatpush.msra.mxu0 %v4543
      %v4545 = vand.u32 %v4360, 4294901760
      %v4546 = vsub.f32 %v4360, %v4545
      %4547 = vmatpush.msra.mxu0 %v4546
      %v4548 = vand.u32 %v4363, 4294901760
      %v4549 = vsub.f32 %v4363, %v4548
      %4550 = vmatmul.f32.gmra.mxu0 %v4549
      %v4551 = vpop.f32.mrf.mxu0
      %v4552 = vadd.f32 %v4498, %v4551
      %v4553 = vand.u32 %v4366, 4294901760
      %v4554 = vsub.f32 %v4366, %v4553
      %4555 = vmatmul.f32.gmra.mxu0 %v4554
      %v4556 = vpop.f32.mrf.mxu0
      %v4557 = vadd.f32 %v4502, %v4556
      %v4558 = vand.u32 %v4369, 4294901760
      %v4559 = vsub.f32 %v4369, %v4558
      %4560 = vmatmul.f32.gmra.mxu0 %v4559
      %v4561 = vpop.f32.mrf.mxu0
      %v4562 = vadd.f32 %v4506, %v4561
      %v4563 = vand.u32 %v4372, 4294901760
      %v4564 = vsub.f32 %v4372, %v4563
      %4565 = vmatmul.f32.gmra.mxu0 %v4564
      %v4566 = vpop.f32.mrf.mxu0
      %v4567 = vadd.f32 %v4510, %v4566
      %v4568 = vand.u32 %v4375, 4294901760
      %v4569 = vsub.f32 %v4375, %v4568
      %4570 = vmatmul.f32.gmra.mxu0 %v4569
      %v4571 = vpop.f32.mrf.mxu0
      %v4572 = vadd.f32 %v4514, %v4571
      %v4573 = vand.u32 %v4378, 4294901760
      %v4574 = vsub.f32 %v4378, %v4573
      %4575 = vmatmul.f32.gmra.mxu0 %v4574
      %v4576 = vpop.f32.mrf.mxu0
      %v4577 = vadd.f32 %v4518, %v4576
      %v4578 = vand.u32 %v4381, 4294901760
      %v4579 = vsub.f32 %v4381, %v4578
      %4580 = vmatmul.f32.gmra.mxu0 %v4579
      %v4581 = vpop.f32.mrf.mxu0
      %v4582 = vadd.f32 %v4522, %v4581
      %v4583 = vand.u32 %v4384, 4294901760
      %v4584 = vsub.f32 %v4384, %v4583
      %4585 = vmatmul.f32.gmra.mxu0 %v4584
      %v4586 = vpop.f32.mrf.mxu0
      %v4587 = vadd.f32 %v4526, %v4586
      %4588 = vdwg.mxu0
      %4589 = vmatpush.msra.mxu0 0.0
      %4590 = vmatpush.msra.mxu0 0.0
      %4591 = vmatpush.msra.mxu0 0.0
      %4592 = vmatpush.msra.mxu0 0.0
      %4593 = vmatpush.msra.mxu0 0.0
      %4594 = vmatpush.msra.mxu0 0.0
      %4595 = vmatpush.msra.mxu0 0.0
      %4596 = vmatpush.msra.mxu0 0.0
      %4597 = vmatpush.msra.mxu0 0.0
      %4598 = vmatpush.msra.mxu0 0.0
      %4599 = vmatpush.msra.mxu0 0.0
      %4600 = vmatpush.msra.mxu0 0.0
      %4601 = vmatpush.msra.mxu0 0.0
      %4602 = vmatpush.msra.mxu0 0.0
      %v4603 = vand.u32 %v4361, 4294901760
      %4604 = vmatpush.msra.mxu0 %v4603
      %v4605 = vand.u32 %v4360, 4294901760
      %4606 = vmatpush.msra.mxu0 %v4605
      %v4607 = vand.u32 %v4363, 4294901760
      %v4608 = vsub.f32 %v4363, %v4607
      %v4609 = vand.u32 %v4608, 4294901760
      %4610 = vmatmul.f32.gmra.mxu0 %v4609
      %v4611 = vpop.f32.mrf.mxu0
      %v4612 = vadd.f32 %v4552, %v4611
      %v4613 = vand.u32 %v4366, 4294901760
      %v4614 = vsub.f32 %v4366, %v4613
      %v4615 = vand.u32 %v4614, 4294901760
      %4616 = vmatmul.f32.gmra.mxu0 %v4615
      %v4617 = vpop.f32.mrf.mxu0
      %v4618 = vadd.f32 %v4557, %v4617
      %v4619 = vand.u32 %v4369, 4294901760
      %v4620 = vsub.f32 %v4369, %v4619
      %v4621 = vand.u32 %v4620, 4294901760
      %4622 = vmatmul.f32.gmra.mxu0 %v4621
      %v4623 = vpop.f32.mrf.mxu0
      %v4624 = vadd.f32 %v4562, %v4623
      %v4625 = vand.u32 %v4372, 4294901760
      %v4626 = vsub.f32 %v4372, %v4625
      %v4627 = vand.u32 %v4626, 4294901760
      %4628 = vmatmul.f32.gmra.mxu0 %v4627
      %v4629 = vpop.f32.mrf.mxu0
      %v4630 = vadd.f32 %v4567, %v4629
      %v4631 = vand.u32 %v4375, 4294901760
      %v4632 = vsub.f32 %v4375, %v4631
      %v4633 = vand.u32 %v4632, 4294901760
      %4634 = vmatmul.f32.gmra.mxu0 %v4633
      %v4635 = vpop.f32.mrf.mxu0
      %v4636 = vadd.f32 %v4572, %v4635
      %v4637 = vand.u32 %v4378, 4294901760
      %v4638 = vsub.f32 %v4378, %v4637
      %v4639 = vand.u32 %v4638, 4294901760
      %4640 = vmatmul.f32.gmra.mxu0 %v4639
      %v4641 = vpop.f32.mrf.mxu0
      %v4642 = vadd.f32 %v4577, %v4641
      %v4643 = vand.u32 %v4381, 4294901760
      %v4644 = vsub.f32 %v4381, %v4643
      %v4645 = vand.u32 %v4644, 4294901760
      %4646 = vmatmul.f32.gmra.mxu0 %v4645
      %v4647 = vpop.f32.mrf.mxu0
      %v4648 = vadd.f32 %v4582, %v4647
      %v4649 = vand.u32 %v4384, 4294901760
      %v4650 = vsub.f32 %v4384, %v4649
      %v4651 = vand.u32 %v4650, 4294901760
      %4652 = vmatmul.f32.gmra.mxu0 %v4651
      %v4653 = vpop.f32.mrf.mxu0
      %v4654 = vadd.f32 %v4587, %v4653
      %4655 = vdwg.mxu0
      %4656 = vmatpush.msra.mxu0 0.0
      %4657 = vmatpush.msra.mxu0 0.0
      %4658 = vmatpush.msra.mxu0 0.0
      %4659 = vmatpush.msra.mxu0 0.0
      %4660 = vmatpush.msra.mxu0 0.0
      %4661 = vmatpush.msra.mxu0 0.0
      %4662 = vmatpush.msra.mxu0 0.0
      %4663 = vmatpush.msra.mxu0 0.0
      %4664 = vmatpush.msra.mxu0 0.0
      %4665 = vmatpush.msra.mxu0 0.0
      %4666 = vmatpush.msra.mxu0 0.0
      %4667 = vmatpush.msra.mxu0 0.0
      %4668 = vmatpush.msra.mxu0 0.0
      %4669 = vmatpush.msra.mxu0 0.0
      %v4670 = vand.u32 %v4361, 4294901760
      %v4671 = vsub.f32 %v4361, %v4670
      %v4672 = vand.u32 %v4671, 4294901760
      %4673 = vmatpush.msra.mxu0 %v4672
      %v4674 = vand.u32 %v4360, 4294901760
      %v4675 = vsub.f32 %v4360, %v4674
      %v4676 = vand.u32 %v4675, 4294901760
      %4677 = vmatpush.msra.mxu0 %v4676
      %v4678 = vand.u32 %v4363, 4294901760
      %4679 = vmatmul.f32.gmra.mxu0 %v4678
      %v4680 = vpop.f32.mrf.mxu0
      %v4681 = vadd.f32 %v4612, %v4680
      %v4682 = vand.u32 %v4366, 4294901760
      %4683 = vmatmul.f32.gmra.mxu0 %v4682
      %v4684 = vpop.f32.mrf.mxu0
      %v4685 = vadd.f32 %v4618, %v4684
      %v4686 = vand.u32 %v4369, 4294901760
      %4687 = vmatmul.f32.gmra.mxu0 %v4686
      %v4688 = vpop.f32.mrf.mxu0
      %v4689 = vadd.f32 %v4624, %v4688
      %v4690 = vand.u32 %v4372, 4294901760
      %4691 = vmatmul.f32.gmra.mxu0 %v4690
      %v4692 = vpop.f32.mrf.mxu0
      %v4693 = vadd.f32 %v4630, %v4692
      %v4694 = vand.u32 %v4375, 4294901760
      %4695 = vmatmul.f32.gmra.mxu0 %v4694
      %v4696 = vpop.f32.mrf.mxu0
      %v4697 = vadd.f32 %v4636, %v4696
      %v4698 = vand.u32 %v4378, 4294901760
      %4699 = vmatmul.f32.gmra.mxu0 %v4698
      %v4700 = vpop.f32.mrf.mxu0
      %v4701 = vadd.f32 %v4642, %v4700
      %v4702 = vand.u32 %v4381, 4294901760
      %4703 = vmatmul.f32.gmra.mxu0 %v4702
      %v4704 = vpop.f32.mrf.mxu0
      %v4705 = vadd.f32 %v4648, %v4704
      %v4706 = vand.u32 %v4384, 4294901760
      %4707 = vmatmul.f32.gmra.mxu0 %v4706
      %v4708 = vpop.f32.mrf.mxu0
      %v4709 = vadd.f32 %v4654, %v4708
      %4710 = vdwg.mxu0
      %4711 = vmatpush.msra.mxu0 0.0
      %4712 = vmatpush.msra.mxu0 0.0
      %4713 = vmatpush.msra.mxu0 0.0
      %4714 = vmatpush.msra.mxu0 0.0
      %4715 = vmatpush.msra.mxu0 0.0
      %4716 = vmatpush.msra.mxu0 0.0
      %4717 = vmatpush.msra.mxu0 0.0
      %4718 = vmatpush.msra.mxu0 0.0
      %4719 = vmatpush.msra.mxu0 0.0
      %4720 = vmatpush.msra.mxu0 0.0
      %4721 = vmatpush.msra.mxu0 0.0
      %4722 = vmatpush.msra.mxu0 0.0
      %4723 = vmatpush.msra.mxu0 0.0
      %4724 = vmatpush.msra.mxu0 0.0
      %v4725 = vand.u32 %v4361, 4294901760
      %4726 = vmatpush.msra.mxu0 %v4725
      %v4727 = vand.u32 %v4360, 4294901760
      %4728 = vmatpush.msra.mxu0 %v4727
      %v4729 = vand.u32 %v4363, 4294901760
      %4730 = vmatmul.f32.gmra.mxu0 %v4729
      %v4731 = vpop.f32.mrf.mxu0
      %v4732 = vadd.f32 %v4681, %v4731
      %v4733 = vand.u32 %v4366, 4294901760
      %4734 = vmatmul.f32.gmra.mxu0 %v4733
      %v4735 = vpop.f32.mrf.mxu0
      %v4736 = vadd.f32 %v4685, %v4735
      %v4737 = vand.u32 %v4369, 4294901760
      %4738 = vmatmul.f32.gmra.mxu0 %v4737
      %v4739 = vpop.f32.mrf.mxu0
      %v4740 = vadd.f32 %v4689, %v4739
      %v4741 = vand.u32 %v4372, 4294901760
      %4742 = vmatmul.f32.gmra.mxu0 %v4741
      %v4743 = vpop.f32.mrf.mxu0
      %v4744 = vadd.f32 %v4693, %v4743
      %v4745 = vand.u32 %v4375, 4294901760
      %4746 = vmatmul.f32.gmra.mxu0 %v4745
      %v4747 = vpop.f32.mrf.mxu0
      %v4748 = vadd.f32 %v4697, %v4747
      %v4749 = vand.u32 %v4378, 4294901760
      %4750 = vmatmul.f32.gmra.mxu0 %v4749
      %v4751 = vpop.f32.mrf.mxu0
      %v4752 = vadd.f32 %v4701, %v4751
      %v4753 = vand.u32 %v4381, 4294901760
      %4754 = vmatmul.f32.gmra.mxu0 %v4753
      %v4755 = vpop.f32.mrf.mxu0
      %v4756 = vadd.f32 %v4705, %v4755
      %v4757 = vand.u32 %v4384, 4294901760
      %4758 = vmatmul.f32.gmra.mxu0 %v4757
      %v4759 = vpop.f32.mrf.mxu0
      %v4760 = vadd.f32 %v4709, %v4759
      %4761 = vdwg.mxu0
      %4762 = vst.msk [vmem:[%s244] sm:$0xff] %vm265, %v4732
      %4763 = vst.msk [vmem:[%s244 + $0x8] sm:$0xff] %vm265, %v4736
      %4764 = vst.msk [vmem:[%s244 + $0x10] sm:$0xff] %vm265, %v4740
      %4765 = vst.msk [vmem:[%s244 + $0x18] sm:$0xff] %vm265, %v4744
      %4766 = vst.msk [vmem:[%s244 + $0x20] sm:$0xff] %vm265, %v4748
      %4767 = vst.msk [vmem:[%s244 + $0x28] sm:$0xff] %vm265, %v4752
      %4768 = vst.msk [vmem:[%s244 + $0x30] sm:$0xff] %vm265, %v4756
      %4769 = vst.msk [vmem:[%s244 + $0x38] sm:$0xff] %vm265, %v4760
      %p4770 = scmp.lt.s32.totalorder %s16, 1
      %s4771 = scalar_select %p4770, %s16, 1
      %s4772 = smul.addr %s4771, 8
      %s4773 = smul.addr %s4772, 8
      %s4774 = scalar_lea.vmem %s5, %s4773
      // Predicated region
      $region41: #{tpu_custom_call.1} parent=39 // pred_check
        %p4775 = pneg %p149
      $region42: #{tpu_custom_call.1} parent=39 // pred_check_branch
        %4777 = sbr.rel (%p4775) target = $region44
      $region43: #{tpu_custom_call.1} parent=39 // pred_region
        _
      $region44: #{tpu_custom_call.1} parent=39 // pred_fallthru
        _
    $region40: #{tpu_custom_call.1} parent=5 // pred_fallthru
      _
    %p4778 = scmp.le.s32.totalorder 2, %s11
    // Predicated region
    $region45: #{tpu_custom_call.1} parent=5 // pred_check
      %p4779 = pneg %p4778
    $region46: #{tpu_custom_call.1} parent=5 // pred_check_branch
      %4781 = sbr.rel (%p4779) target = $region48
    $region47: #{tpu_custom_call.1} parent=5 // pred_region
      %s4782 = ssub.s32 %s11, 2
      // Predicated region
      $region49: #{tpu_custom_call.1} parent=47 // pred_check
        %p4783 = pneg %p155
      $region50: #{tpu_custom_call.1} parent=47 // pred_check_branch
        %4785 = sbr.rel (%p4783) target = $region52
      $region51: #{tpu_custom_call.1} parent=47 // pred_region
        %p4786 = scmp.lt.s32.totalorder %s17, 1
        %s4787 = scalar_select %p4786, %s17, 1
        %s4788 = smul.addr %s4787, 8
        %s4789 = smul.addr %s4788, 8
        %s4790 = scalar_lea.vmem %s5, %s4789
      $region52: #{tpu_custom_call.1} parent=47 // pred_fallthru
        _
    $region48: #{tpu_custom_call.1} parent=5 // pred_fallthru
      _
  $region6: #{tpu_custom_call.1} parent=0 // loop_footer
    %s15 = sadd.s32 1, %s11
  $region7: #{tpu_custom_call.1} parent=0 // loop_footer_branch
    %10 = sbr.rel target = $region3
  $region8: #{tpu_custom_call.1} parent=0 // loop_exit
    _

</llo_original>
